<compile_context>
chip_gen: v7x
topology: tpu7x:2x2x1
jax: 0.10.0
libtpu: 0.0.40
codegen_flags: <defaults>
</compile_context>

<pallas_src>
import functools

import jax
import jax.numpy as jnp
from jax.experimental import pallas as pl
from jax.experimental.pallas import tpu as pltpu


# ---------------------------------------------------------------------------
# Fused kernel: all LSTM layers (interleaved) + final Linear in one invocation.
# ---------------------------------------------------------------------------
def _fused_lstm_kernel(x_ref, *refs, num_layers, seq_len, blk_b, hidden):
    """x_ref: (T*BLK_B, D) time-major flattened input for this batch block.

    refs = [w_ih_0, w_hh_0, b_0, ..., w_ih_{L-1}, w_hh_{L-1}, b_{L-1},
            fc_w, fc_b, out_ref, gx_scratch]
    Gate ("g"/tanh) columns of every W_ih / W_hh / bias were pre-scaled by 2 in the
    wrapper so tanh is recovered from one full-width sigmoid.
    """
    T, B, H, L = seq_len, blk_b, hidden, num_layers

    layer_refs = []
    i = 0
    for _ in range(L):
        layer_refs.append((refs[i], refs[i + 1], refs[i + 2]))
        i += 3
    fc_w_ref, fc_b_ref = refs[i], refs[i + 1]
    out_ref = refs[i + 2]
    gx_ref = refs[i + 3]                                  # VMEM scratch (T*B, 4H)

    # Hoisted, non-recurrent layer-0 projection: one MXU GEMM for all timesteps,
    # staged in VMEM scratch (read back in 8-row aligned slices inside the loop).
    w_ih0_ref, _, b0_ref = layer_refs[0]
    gx_ref[...] = (jnp.dot(x_ref[...], w_ih0_ref[...],
                           preferred_element_type=jnp.float32)
                   + b0_ref[...])

    def lstm_cell(g_in, h_l, c_l, w_hh_ref):
        gates = g_in + jnp.dot(h_l, w_hh_ref[...],
                               preferred_element_type=jnp.float32)   # (B, 4H)
        s = jax.nn.sigmoid(gates)            # ONE full-vreg EUP push for all 4 gates
        i_g = s[:, 0 * H:1 * H]
        f_g = s[:, 1 * H:2 * H]
        g_g = 2.0 * s[:, 2 * H:3 * H] - 1.0  # tanh(a) via pre-scaled-by-2 g columns
        o_g = s[:, 3 * H:4 * H]
        c_new = f_g * c_l + i_g * g_g
        h_new = o_g * jnp.tanh(c_new)
        return h_new, c_new

    h = [jnp.zeros((B, H), jnp.float32) for _ in range(L)]
    c = [jnp.zeros((B, H), jnp.float32) for _ in range(L)]
    prev = [None] * L   # prev[l] = h produced by layer l in the previous stage

    # Software-pipelined recurrence: stage s runs layer l at timestep t = s - l.
    # Within a stage all layers are data-independent, so MXU/EUP work overlaps.
    for s_idx in range(T + L - 1):
        nxt = list(prev)
        for l in range(L):
            t = s_idx - l
            if t < 0 or t >= T:
                continue
            if l == 0:
                g_in = gx_ref[t * B:(t + 1) * B, :]        # aligned 8-row slice
            else:
                w_ih_ref, _, b_ref = layer_refs[l]
                g_in = (jnp.dot(prev[l - 1], w_ih_ref[...],
                                preferred_element_type=jnp.float32)
                        + b_ref[...])
            h[l], c[l] = lstm_cell(g_in, h[l], c[l], layer_refs[l][1])
            nxt[l] = h[l]
        prev = nxt

    # Final Linear on the last timestep of the last layer (lane-dense 128-wide store).
    out_ref[...] = (jnp.dot(h[L - 1], fc_w_ref[...],
                            preferred_element_type=jnp.float32)
                    + fc_b_ref[...])


# ---------------------------------------------------------------------------
# Model: parameters + forward
# ---------------------------------------------------------------------------
def init_params(key, input_size, hidden_size, num_layers, output_size):
    """Deterministic init mirroring PyTorch shapes (weights stored transposed)."""
    k = 1.0 / jnp.sqrt(jnp.float32(hidden_size))
    params = {"hidden_size": hidden_size, "lstm": []}
    for layer in range(num_layers):
        d_in = input_size if layer == 0 else hidden_size
        key, k1, k2, k3, k4 = jax.random.split(key, 5)
        w_ih = jax.random.uniform(k1, (d_in, 4 * hidden_size), jnp.float32, -k, k)
        w_hh = jax.random.uniform(k2, (hidden_size, 4 * hidden_size), jnp.float32, -k, k)
        b_ih = jax.random.uniform(k3, (4 * hidden_size,), jnp.float32, -k, k)
        b_hh = jax.random.uniform(k4, (4 * hidden_size,), jnp.float32, -k, k)
        params["lstm"].append((w_ih, w_hh, (b_ih + b_hh).reshape(1, 4 * hidden_size)))
    key, k5, k6 = jax.random.split(key, 3)
    params["fc_w"] = jax.random.uniform(k5, (hidden_size, output_size), jnp.float32, -k, k)
    params["fc_b"] = jax.random.uniform(k6, (output_size,), jnp.float32, -k, k)
    return params


def lstm_time_series_forward(x_btd, params):
    """x_btd: (batch, seq, input_size) -> (batch, output_size)."""
    B, T, D = x_btd.shape
    H = params["hidden_size"]
    O = params["fc_w"].shape[1]
    L = len(params["lstm"])

    BLK_B = 8                                   # f32 sublane multiple; one block/core
    B_pad = max(BLK_B, ((B + BLK_B - 1) // BLK_B) * BLK_B)
    n_blk = B_pad // BLK_B
    O_pad = ((O + 127) // 128) * 128            # lane-dense output store

    # Single layout prep: (B, T, D) -> (n_blk, T*BLK_B, D), time-major inside each
    # 8-row batch block.  Batch rows are independent; padded rows are sliced off.
    xp = jnp.pad(x_btd, ((0, B_pad - B), (0, 0), (0, 0)))
    x_blocks = (xp.reshape(n_blk, BLK_B, T, D)
                  .transpose(0, 2, 1, 3)
                  .reshape(n_blk, T * BLK_B, D))

    # Pre-scale the g-gate (tanh) columns by 2 so the kernel needs ONE full-width
    # sigmoid per cell and recovers tanh via 2*sigmoid(2a) - 1.
    def scale_g(w):
        return w.at[..., 2 * H:3 * H].multiply(2.0)

    args = [x_blocks]
    in_specs = [pl.BlockSpec((None, T * BLK_B, D), lambda b: (b, 0, 0))]
    for (w_ih, w_hh, bias) in params["lstm"]:
        w_ih_s, w_hh_s, b_s = scale_g(w_ih), scale_g(w_hh), scale_g(bias)
        args += [w_ih_s, w_hh_s, b_s]
        in_specs += [pl.BlockSpec(w_ih_s.shape, lambda b: (0, 0)),
                     pl.BlockSpec(w_hh_s.shape, lambda b: (0, 0)),
                     pl.BlockSpec(b_s.shape, lambda b: (0, 0))]

    fc_w = jnp.pad(params["fc_w"], ((0, 0), (0, O_pad - O)))
    fc_b = jnp.pad(params["fc_b"].reshape(1, O), ((0, 0), (0, O_pad - O)))
    args += [fc_w, fc_b]
    in_specs += [pl.BlockSpec(fc_w.shape, lambda b: (0, 0)),
                 pl.BlockSpec(fc_b.shape, lambda b: (0, 0))]

    kernel = functools.partial(_fused_lstm_kernel, num_layers=L, seq_len=T,
                               blk_b=BLK_B, hidden=H)

    out = pl.pallas_call(
        kernel,
        out_shape=jax.ShapeDtypeStruct((B_pad, O_pad), jnp.float32),
        grid_spec=pltpu.PrefetchScalarGridSpec(
            num_scalar_prefetch=0,
            grid=(n_blk,),                       # independent batch blocks
            in_specs=in_specs,
            out_specs=pl.BlockSpec((BLK_B, O_pad), lambda b: (b, 0)),
            scratch_shapes=[pltpu.VMEM((T * BLK_B, 4 * H), jnp.float32)],
        ),
        compiler_params=pltpu.CompilerParams(
            dimension_semantics=("parallel",),   # shards batch blocks across v7x TCs
            vmem_limit_bytes=32 * 1024 * 1024,   # explicit budget (v7x: 64 MiB phys)
        ),
    )(*args)
    return out[:B, :O]


# ---------------------------------------------------------------------------
# Pure-JAX reference (original, unscaled math) for a correctness check.
# ---------------------------------------------------------------------------
def reference_forward(x_btd, params):
    H = params["hidden_size"]
    B = x_btd.shape[0]
    h_seq = jnp.transpose(x_btd, (1, 0, 2))
    for (w_ih, w_hh, b) in params["lstm"]:
        h = jnp.zeros((B, H), jnp.float32)
        c = jnp.zeros((B, H), jnp.float32)
        outs = []
        for t in range(h_seq.shape[0]):
            gates = h_seq[t] @ w_ih + h @ w_hh + b
            i_g = jax.nn.sigmoid(gates[:, 0 * H:1 * H])
            f_g = jax.nn.sigmoid(gates[:, 1 * H:2 * H])
            g_g = jnp.tanh(gates[:, 2 * H:3 * H])
            o_g = jax.nn.sigmoid(gates[:, 3 * H:4 * H])
            c = f_g * c + i_g * g_g
            h = o_g * jnp.tanh(c)
            outs.append(h)
        h_seq = jnp.stack(outs, axis=0)
    return h_seq[-1] @ params["fc_w"] + params["fc_b"]


if __name__ == "__main__":
    input_size, hidden_size, num_layers, output_size = 16, 32, 2, 4
    batch, seq = 2, 8

    key = jax.random.PRNGKey(0)
    key, xkey = jax.random.split(key)
    x = jax.random.normal(xkey, (batch, seq, input_size), jnp.float32)

    params = init_params(key, input_size, hidden_size, num_layers, output_size)

    out = jax.block_until_ready(lstm_time_series_forward(x, params))
    assert out.shape == (batch, output_size), out.shape

    ref = jax.block_until_ready(reference_forward(x, params))
    assert jnp.allclose(out, ref, atol=1e-4, rtol=1e-4), float(jnp.abs(out - ref).max())

    print("KERNEL_OK")
</pallas_src>

<mosaic_0001>
module attributes {stable_mosaic.version = 11 : i64} {
  func.func @_fused_lstm_kernel(%arg0: i32, %arg1: memref<1x64x16xf32, #tpu.memory_space<vmem>>, %arg2: memref<16x128xf32, #tpu.memory_space<vmem>>, %arg3: memref<32x128xf32, #tpu.memory_space<vmem>>, %arg4: memref<1x128xf32, #tpu.memory_space<vmem>>, %arg5: memref<32x128xf32, #tpu.memory_space<vmem>>, %arg6: memref<32x128xf32, #tpu.memory_space<vmem>>, %arg7: memref<1x128xf32, #tpu.memory_space<vmem>>, %arg8: memref<32x128xf32, #tpu.memory_space<vmem>>, %arg9: memref<1x128xf32, #tpu.memory_space<vmem>>, %arg10: memref<8x128xf32, #tpu.memory_space<vmem>>, %arg11: memref<64x128xf32, #tpu.memory_space<vmem>>) attributes {dimension_semantics = [#tpu.dimension_semantics<parallel>], iteration_bounds = array<i64: 1>, scalar_prefetch = 0 : i64, scratch_operands = 1 : i64, tpu.core_type = #tpu.core_type<tc>, window_params = [{transform_indices = @transform_0, window_bounds = array<i64: 1, 64, 16>}, {pipeline_mode = #tpu.pipeline_mode<synchronous>, transform_indices = @transform_1, window_bounds = array<i64: 16, 128>}, {pipeline_mode = #tpu.pipeline_mode<synchronous>, transform_indices = @transform_2, window_bounds = array<i64: 32, 128>}, {pipeline_mode = #tpu.pipeline_mode<synchronous>, transform_indices = @transform_3, window_bounds = array<i64: 1, 128>}, {pipeline_mode = #tpu.pipeline_mode<synchronous>, transform_indices = @transform_4, window_bounds = array<i64: 32, 128>}, {pipeline_mode = #tpu.pipeline_mode<synchronous>, transform_indices = @transform_5, window_bounds = array<i64: 32, 128>}, {pipeline_mode = #tpu.pipeline_mode<synchronous>, transform_indices = @transform_6, window_bounds = array<i64: 1, 128>}, {pipeline_mode = #tpu.pipeline_mode<synchronous>, transform_indices = @transform_7, window_bounds = array<i64: 32, 128>}, {pipeline_mode = #tpu.pipeline_mode<synchronous>, transform_indices = @transform_8, window_bounds = array<i64: 1, 128>}, {transform_indices = @transform_9, window_bounds = array<i64: 8, 128>}]} {
    %c0 = arith.constant 0 : index
    %c0_0 = arith.constant 0 : index
    %c0_1 = arith.constant 0 : index
    %0 = vector.load %arg1[%c0, %c0_0, %c0_1] : memref<1x64x16xf32, #tpu.memory_space<vmem>>, vector<1x64x16xf32>
    %1 = vector.shape_cast %0 : vector<1x64x16xf32> to vector<64x16xf32>
    %c0_2 = arith.constant 0 : index
    %c0_3 = arith.constant 0 : index
    %2 = vector.load %arg2[%c0_2, %c0_3] : memref<16x128xf32, #tpu.memory_space<vmem>>, vector<16x128xf32>
    %cst = arith.constant dense<0.000000e+00> : vector<64x128xf32>
    %3 = tpu.matmul %1, %2, %cst {dimension_numbers = #tpu.dot_dimension_numbers<[1], [0], [0], [1], [0, 0, 1, 1], [], []>} : vector<64x16xf32>, vector<16x128xf32>, vector<64x128xf32> -> vector<64x128xf32>
    %c0_4 = arith.constant 0 : index
    %c0_5 = arith.constant 0 : index
    %4 = vector.load %arg4[%c0_4, %c0_5] : memref<1x128xf32, #tpu.memory_space<vmem>>, vector<1x128xf32>
    %5 = vector.broadcast %4 : vector<1x128xf32> to vector<64x128xf32>
    %6 = arith.addf %3, %5 : vector<64x128xf32>
    %c0_6 = arith.constant 0 : index
    %c0_7 = arith.constant 0 : index
    %7 = vector.load %arg11[%c0_6, %c0_7] : memref<64x128xf32, #tpu.memory_space<vmem>>, vector<64x128xf32>
    tpu.vector_store %arg11[%c0_6, %c0_7], %6 {strides = array<i32>} : memref<64x128xf32, #tpu.memory_space<vmem>>, vector<64x128xf32>,
    %cst_8 = arith.constant 0.000000e+00 : f32
    %8 = vector.broadcast %cst_8 : f32 to vector<8x32xf32>
    %cst_9 = arith.constant 0.000000e+00 : f32
    %9 = vector.broadcast %cst_9 : f32 to vector<8x32xf32>
    %cst_10 = arith.constant 0.000000e+00 : f32
    %10 = vector.broadcast %cst_10 : f32 to vector<8x32xf32>
    %cst_11 = arith.constant 0.000000e+00 : f32
    %11 = vector.broadcast %cst_11 : f32 to vector<8x32xf32>
    %c0_12 = arith.constant 0 : index
    %c0_13 = arith.constant 0 : index
    %12 = vector.load %arg11[%c0_12, %c0_13] : memref<64x128xf32, #tpu.memory_space<vmem>>, vector<8x128xf32>
    %c0_14 = arith.constant 0 : index
    %c0_15 = arith.constant 0 : index
    %13 = vector.load %arg3[%c0_14, %c0_15] : memref<32x128xf32, #tpu.memory_space<vmem>>, vector<32x128xf32>
    %cst_16 = arith.constant dense<0.000000e+00> : vector<8x128xf32>
    %14 = tpu.matmul %8, %13, %cst_16 {dimension_numbers = #tpu.dot_dimension_numbers<[1], [0], [0], [1], [0, 0, 1, 1], [], []>} : vector<8x32xf32>, vector<32x128xf32>, vector<8x128xf32> -> vector<8x128xf32>
    %15 = arith.addf %12, %14 : vector<8x128xf32>
    %16 = arith.negf %15 : vector<8x128xf32>
    %17 = math.exp %16 : vector<8x128xf32>
    %cst_17 = arith.constant 1.000000e+00 : f32
    %18 = vector.broadcast %cst_17 : f32 to vector<8x128xf32>
    %19 = arith.addf %18, %17 : vector<8x128xf32>
    %20 = arith.divf %18, %19 : vector<8x128xf32>
    %21 = vector.extract_strided_slice %20 {offsets = [0, 0], sizes = [8, 32], strides = [1, 1]} : vector<8x128xf32> to vector<8x32xf32>
    %22 = vector.extract_strided_slice %20 {offsets = [0, 32], sizes = [8, 32], strides = [1, 1]} : vector<8x128xf32> to vector<8x32xf32>
    %23 = vector.extract_strided_slice %20 {offsets = [0, 64], sizes = [8, 32], strides = [1, 1]} : vector<8x128xf32> to vector<8x32xf32>
    %cst_18 = arith.constant 2.000000e+00 : f32
    %24 = vector.broadcast %cst_18 : f32 to vector<8x32xf32>
    %25 = arith.mulf %24, %23 : vector<8x32xf32>
    %cst_19 = arith.constant 1.000000e+00 : f32
    %26 = vector.broadcast %cst_19 : f32 to vector<8x32xf32>
    %27 = arith.subf %25, %26 : vector<8x32xf32>
    %28 = vector.extract_strided_slice %20 {offsets = [0, 96], sizes = [8, 32], strides = [1, 1]} : vector<8x128xf32> to vector<8x32xf32>
    %29 = arith.mulf %22, %10 : vector<8x32xf32>
    %30 = arith.mulf %21, %27 : vector<8x32xf32>
    %31 = arith.addf %29, %30 : vector<8x32xf32>
    %32 = math.tanh %31 : vector<8x32xf32>
    %33 = arith.mulf %28, %32 : vector<8x32xf32>
    %c8 = arith.constant 8 : index
    %c0_20 = arith.constant 0 : index
    %34 = vector.load %arg11[%c8, %c0_20] : memref<64x128xf32, #tpu.memory_space<vmem>>, vector<8x128xf32>
    %c0_21 = arith.constant 0 : index
    %c0_22 = arith.constant 0 : index
    %35 = vector.load %arg3[%c0_21, %c0_22] : memref<32x128xf32, #tpu.memory_space<vmem>>, vector<32x128xf32>
    %cst_23 = arith.constant dense<0.000000e+00> : vector<8x128xf32>
    %36 = tpu.matmul %33, %35, %cst_23 {dimension_numbers = #tpu.dot_dimension_numbers<[1], [0], [0], [1], [0, 0, 1, 1], [], []>} : vector<8x32xf32>, vector<32x128xf32>, vector<8x128xf32> -> vector<8x128xf32>
    %37 = arith.addf %34, %36 : vector<8x128xf32>
    %38 = arith.negf %37 : vector<8x128xf32>
    %39 = math.exp %38 : vector<8x128xf32>
    %cst_24 = arith.constant 1.000000e+00 : f32
    %40 = vector.broadcast %cst_24 : f32 to vector<8x128xf32>
    %41 = arith.addf %40, %39 : vector<8x128xf32>
    %42 = arith.divf %40, %41 : vector<8x128xf32>
    %43 = vector.extract_strided_slice %42 {offsets = [0, 0], sizes = [8, 32], strides = [1, 1]} : vector<8x128xf32> to vector<8x32xf32>
    %44 = vector.extract_strided_slice %42 {offsets = [0, 32], sizes = [8, 32], strides = [1, 1]} : vector<8x128xf32> to vector<8x32xf32>
    %45 = vector.extract_strided_slice %42 {offsets = [0, 64], sizes = [8, 32], strides = [1, 1]} : vector<8x128xf32> to vector<8x32xf32>
    %cst_25 = arith.constant 2.000000e+00 : f32
    %46 = vector.broadcast %cst_25 : f32 to vector<8x32xf32>
    %47 = arith.mulf %46, %45 : vector<8x32xf32>
    %cst_26 = arith.constant 1.000000e+00 : f32
    %48 = vector.broadcast %cst_26 : f32 to vector<8x32xf32>
    %49 = arith.subf %47, %48 : vector<8x32xf32>
    %50 = vector.extract_strided_slice %42 {offsets = [0, 96], sizes = [8, 32], strides = [1, 1]} : vector<8x128xf32> to vector<8x32xf32>
    %51 = arith.mulf %44, %31 : vector<8x32xf32>
    %52 = arith.mulf %43, %49 : vector<8x32xf32>
    %53 = arith.addf %51, %52 : vector<8x32xf32>
    %54 = math.tanh %53 : vector<8x32xf32>
    %55 = arith.mulf %50, %54 : vector<8x32xf32>
    %c0_27 = arith.constant 0 : index
    %c0_28 = arith.constant 0 : index
    %56 = vector.load %arg5[%c0_27, %c0_28] : memref<32x128xf32, #tpu.memory_space<vmem>>, vector<32x128xf32>
    %cst_29 = arith.constant dense<0.000000e+00> : vector<8x128xf32>
    %57 = tpu.matmul %33, %56, %cst_29 {dimension_numbers = #tpu.dot_dimension_numbers<[1], [0], [0], [1], [0, 0, 1, 1], [], []>} : vector<8x32xf32>, vector<32x128xf32>, vector<8x128xf32> -> vector<8x128xf32>
    %c0_30 = arith.constant 0 : index
    %c0_31 = arith.constant 0 : index
    %58 = vector.load %arg7[%c0_30, %c0_31] : memref<1x128xf32, #tpu.memory_space<vmem>>, vector<1x128xf32>
    %59 = vector.broadcast %58 : vector<1x128xf32> to vector<8x128xf32>
    %60 = arith.addf %57, %59 : vector<8x128xf32>
    %c0_32 = arith.constant 0 : index
    %c0_33 = arith.constant 0 : index
    %61 = vector.load %arg6[%c0_32, %c0_33] : memref<32x128xf32, #tpu.memory_space<vmem>>, vector<32x128xf32>
    %cst_34 = arith.constant dense<0.000000e+00> : vector<8x128xf32>
    %62 = tpu.matmul %9, %61, %cst_34 {dimension_numbers = #tpu.dot_dimension_numbers<[1], [0], [0], [1], [0, 0, 1, 1], [], []>} : vector<8x32xf32>, vector<32x128xf32>, vector<8x128xf32> -> vector<8x128xf32>
    %63 = arith.addf %60, %62 : vector<8x128xf32>
    %64 = arith.negf %63 : vector<8x128xf32>
    %65 = math.exp %64 : vector<8x128xf32>
    %cst_35 = arith.constant 1.000000e+00 : f32
    %66 = vector.broadcast %cst_35 : f32 to vector<8x128xf32>
    %67 = arith.addf %66, %65 : vector<8x128xf32>
    %68 = arith.divf %66, %67 : vector<8x128xf32>
    %69 = vector.extract_strided_slice %68 {offsets = [0, 0], sizes = [8, 32], strides = [1, 1]} : vector<8x128xf32> to vector<8x32xf32>
    %70 = vector.extract_strided_slice %68 {offsets = [0, 32], sizes = [8, 32], strides = [1, 1]} : vector<8x128xf32> to vector<8x32xf32>
    %71 = vector.extract_strided_slice %68 {offsets = [0, 64], sizes = [8, 32], strides = [1, 1]} : vector<8x128xf32> to vector<8x32xf32>
    %cst_36 = arith.constant 2.000000e+00 : f32
    %72 = vector.broadcast %cst_36 : f32 to vector<8x32xf32>
    %73 = arith.mulf %72, %71 : vector<8x32xf32>
    %cst_37 = arith.constant 1.000000e+00 : f32
    %74 = vector.broadcast %cst_37 : f32 to vector<8x32xf32>
    %75 = arith.subf %73, %74 : vector<8x32xf32>
    %76 = vector.extract_strided_slice %68 {offsets = [0, 96], sizes = [8, 32], strides = [1, 1]} : vector<8x128xf32> to vector<8x32xf32>
    %77 = arith.mulf %70, %11 : vector<8x32xf32>
    %78 = arith.mulf %69, %75 : vector<8x32xf32>
    %79 = arith.addf %77, %78 : vector<8x32xf32>
    %80 = math.tanh %79 : vector<8x32xf32>
    %81 = arith.mulf %76, %80 : vector<8x32xf32>
    %c16 = arith.constant 16 : index
    %c0_38 = arith.constant 0 : index
    %82 = vector.load %arg11[%c16, %c0_38] : memref<64x128xf32, #tpu.memory_space<vmem>>, vector<8x128xf32>
    %c0_39 = arith.constant 0 : index
    %c0_40 = arith.constant 0 : index
    %83 = vector.load %arg3[%c0_39, %c0_40] : memref<32x128xf32, #tpu.memory_space<vmem>>, vector<32x128xf32>
    %cst_41 = arith.constant dense<0.000000e+00> : vector<8x128xf32>
    %84 = tpu.matmul %55, %83, %cst_41 {dimension_numbers = #tpu.dot_dimension_numbers<[1], [0], [0], [1], [0, 0, 1, 1], [], []>} : vector<8x32xf32>, vector<32x128xf32>, vector<8x128xf32> -> vector<8x128xf32>
    %85 = arith.addf %82, %84 : vector<8x128xf32>
    %86 = arith.negf %85 : vector<8x128xf32>
    %87 = math.exp %86 : vector<8x128xf32>
    %cst_42 = arith.constant 1.000000e+00 : f32
    %88 = vector.broadcast %cst_42 : f32 to vector<8x128xf32>
    %89 = arith.addf %88, %87 : vector<8x128xf32>
    %90 = arith.divf %88, %89 : vector<8x128xf32>
    %91 = vector.extract_strided_slice %90 {offsets = [0, 0], sizes = [8, 32], strides = [1, 1]} : vector<8x128xf32> to vector<8x32xf32>
    %92 = vector.extract_strided_slice %90 {offsets = [0, 32], sizes = [8, 32], strides = [1, 1]} : vector<8x128xf32> to vector<8x32xf32>
    %93 = vector.extract_strided_slice %90 {offsets = [0, 64], sizes = [8, 32], strides = [1, 1]} : vector<8x128xf32> to vector<8x32xf32>
    %cst_43 = arith.constant 2.000000e+00 : f32
    %94 = vector.broadcast %cst_43 : f32 to vector<8x32xf32>
    %95 = arith.mulf %94, %93 : vector<8x32xf32>
    %cst_44 = arith.constant 1.000000e+00 : f32
    %96 = vector.broadcast %cst_44 : f32 to vector<8x32xf32>
    %97 = arith.subf %95, %96 : vector<8x32xf32>
    %98 = vector.extract_strided_slice %90 {offsets = [0, 96], sizes = [8, 32], strides = [1, 1]} : vector<8x128xf32> to vector<8x32xf32>
    %99 = arith.mulf %92, %53 : vector<8x32xf32>
    %100 = arith.mulf %91, %97 : vector<8x32xf32>
    %101 = arith.addf %99, %100 : vector<8x32xf32>
    %102 = math.tanh %101 : vector<8x32xf32>
    %103 = arith.mulf %98, %102 : vector<8x32xf32>
    %c0_45 = arith.constant 0 : index
    %c0_46 = arith.constant 0 : index
    %104 = vector.load %arg5[%c0_45, %c0_46] : memref<32x128xf32, #tpu.memory_space<vmem>>, vector<32x128xf32>
    %cst_47 = arith.constant dense<0.000000e+00> : vector<8x128xf32>
    %105 = tpu.matmul %55, %104, %cst_47 {dimension_numbers = #tpu.dot_dimension_numbers<[1], [0], [0], [1], [0, 0, 1, 1], [], []>} : vector<8x32xf32>, vector<32x128xf32>, vector<8x128xf32> -> vector<8x128xf32>
    %c0_48 = arith.constant 0 : index
    %c0_49 = arith.constant 0 : index
    %106 = vector.load %arg7[%c0_48, %c0_49] : memref<1x128xf32, #tpu.memory_space<vmem>>, vector<1x128xf32>
    %107 = vector.broadcast %106 : vector<1x128xf32> to vector<8x128xf32>
    %108 = arith.addf %105, %107 : vector<8x128xf32>
    %c0_50 = arith.constant 0 : index
    %c0_51 = arith.constant 0 : index
    %109 = vector.load %arg6[%c0_50, %c0_51] : memref<32x128xf32, #tpu.memory_space<vmem>>, vector<32x128xf32>
    %cst_52 = arith.constant dense<0.000000e+00> : vector<8x128xf32>
    %110 = tpu.matmul %81, %109, %cst_52 {dimension_numbers = #tpu.dot_dimension_numbers<[1], [0], [0], [1], [0, 0, 1, 1], [], []>} : vector<8x32xf32>, vector<32x128xf32>, vector<8x128xf32> -> vector<8x128xf32>
    %111 = arith.addf %108, %110 : vector<8x128xf32>
    %112 = arith.negf %111 : vector<8x128xf32>
    %113 = math.exp %112 : vector<8x128xf32>
    %cst_53 = arith.constant 1.000000e+00 : f32
    %114 = vector.broadcast %cst_53 : f32 to vector<8x128xf32>
    %115 = arith.addf %114, %113 : vector<8x128xf32>
    %116 = arith.divf %114, %115 : vector<8x128xf32>
    %117 = vector.extract_strided_slice %116 {offsets = [0, 0], sizes = [8, 32], strides = [1, 1]} : vector<8x128xf32> to vector<8x32xf32>
    %118 = vector.extract_strided_slice %116 {offsets = [0, 32], sizes = [8, 32], strides = [1, 1]} : vector<8x128xf32> to vector<8x32xf32>
    %119 = vector.extract_strided_slice %116 {offsets = [0, 64], sizes = [8, 32], strides = [1, 1]} : vector<8x128xf32> to vector<8x32xf32>
    %cst_54 = arith.constant 2.000000e+00 : f32
    %120 = vector.broadcast %cst_54 : f32 to vector<8x32xf32>
    %121 = arith.mulf %120, %119 : vector<8x32xf32>
    %cst_55 = arith.constant 1.000000e+00 : f32
    %122 = vector.broadcast %cst_55 : f32 to vector<8x32xf32>
    %123 = arith.subf %121, %122 : vector<8x32xf32>
    %124 = vector.extract_strided_slice %116 {offsets = [0, 96], sizes = [8, 32], strides = [1, 1]} : vector<8x128xf32> to vector<8x32xf32>
    %125 = arith.mulf %118, %79 : vector<8x32xf32>
    %126 = arith.mulf %117, %123 : vector<8x32xf32>
    %127 = arith.addf %125, %126 : vector<8x32xf32>
    %128 = math.tanh %127 : vector<8x32xf32>
    %129 = arith.mulf %124, %128 : vector<8x32xf32>
    %c24 = arith.constant 24 : index
    %c0_56 = arith.constant 0 : index
    %130 = vector.load %arg11[%c24, %c0_56] : memref<64x128xf32, #tpu.memory_space<vmem>>, vector<8x128xf32>
    %c0_57 = arith.constant 0 : index
    %c0_58 = arith.constant 0 : index
    %131 = vector.load %arg3[%c0_57, %c0_58] : memref<32x128xf32, #tpu.memory_space<vmem>>, vector<32x128xf32>
    %cst_59 = arith.constant dense<0.000000e+00> : vector<8x128xf32>
    %132 = tpu.matmul %103, %131, %cst_59 {dimension_numbers = #tpu.dot_dimension_numbers<[1], [0], [0], [1], [0, 0, 1, 1], [], []>} : vector<8x32xf32>, vector<32x128xf32>, vector<8x128xf32> -> vector<8x128xf32>
    %133 = arith.addf %130, %132 : vector<8x128xf32>
    %134 = arith.negf %133 : vector<8x128xf32>
    %135 = math.exp %134 : vector<8x128xf32>
    %cst_60 = arith.constant 1.000000e+00 : f32
    %136 = vector.broadcast %cst_60 : f32 to vector<8x128xf32>
    %137 = arith.addf %136, %135 : vector<8x128xf32>
    %138 = arith.divf %136, %137 : vector<8x128xf32>
    %139 = vector.extract_strided_slice %138 {offsets = [0, 0], sizes = [8, 32], strides = [1, 1]} : vector<8x128xf32> to vector<8x32xf32>
    %140 = vector.extract_strided_slice %138 {offsets = [0, 32], sizes = [8, 32], strides = [1, 1]} : vector<8x128xf32> to vector<8x32xf32>
    %141 = vector.extract_strided_slice %138 {offsets = [0, 64], sizes = [8, 32], strides = [1, 1]} : vector<8x128xf32> to vector<8x32xf32>
    %cst_61 = arith.constant 2.000000e+00 : f32
    %142 = vector.broadcast %cst_61 : f32 to vector<8x32xf32>
    %143 = arith.mulf %142, %141 : vector<8x32xf32>
    %cst_62 = arith.constant 1.000000e+00 : f32
    %144 = vector.broadcast %cst_62 : f32 to vector<8x32xf32>
    %145 = arith.subf %143, %144 : vector<8x32xf32>
    %146 = vector.extract_strided_slice %138 {offsets = [0, 96], sizes = [8, 32], strides = [1, 1]} : vector<8x128xf32> to vector<8x32xf32>
    %147 = arith.mulf %140, %101 : vector<8x32xf32>
    %148 = arith.mulf %139, %145 : vector<8x32xf32>
    %149 = arith.addf %147, %148 : vector<8x32xf32>
    %150 = math.tanh %149 : vector<8x32xf32>
    %151 = arith.mulf %146, %150 : vector<8x32xf32>
    %c0_63 = arith.constant 0 : index
    %c0_64 = arith.constant 0 : index
    %152 = vector.load %arg5[%c0_63, %c0_64] : memref<32x128xf32, #tpu.memory_space<vmem>>, vector<32x128xf32>
    %cst_65 = arith.constant dense<0.000000e+00> : vector<8x128xf32>
    %153 = tpu.matmul %103, %152, %cst_65 {dimension_numbers = #tpu.dot_dimension_numbers<[1], [0], [0], [1], [0, 0, 1, 1], [], []>} : vector<8x32xf32>, vector<32x128xf32>, vector<8x128xf32> -> vector<8x128xf32>
    %c0_66 = arith.constant 0 : index
    %c0_67 = arith.constant 0 : index
    %154 = vector.load %arg7[%c0_66, %c0_67] : memref<1x128xf32, #tpu.memory_space<vmem>>, vector<1x128xf32>
    %155 = vector.broadcast %154 : vector<1x128xf32> to vector<8x128xf32>
    %156 = arith.addf %153, %155 : vector<8x128xf32>
    %c0_68 = arith.constant 0 : index
    %c0_69 = arith.constant 0 : index
    %157 = vector.load %arg6[%c0_68, %c0_69] : memref<32x128xf32, #tpu.memory_space<vmem>>, vector<32x128xf32>
    %cst_70 = arith.constant dense<0.000000e+00> : vector<8x128xf32>
    %158 = tpu.matmul %129, %157, %cst_70 {dimension_numbers = #tpu.dot_dimension_numbers<[1], [0], [0], [1], [0, 0, 1, 1], [], []>} : vector<8x32xf32>, vector<32x128xf32>, vector<8x128xf32> -> vector<8x128xf32>
    %159 = arith.addf %156, %158 : vector<8x128xf32>
    %160 = arith.negf %159 : vector<8x128xf32>
    %161 = math.exp %160 : vector<8x128xf32>
    %cst_71 = arith.constant 1.000000e+00 : f32
    %162 = vector.broadcast %cst_71 : f32 to vector<8x128xf32>
    %163 = arith.addf %162, %161 : vector<8x128xf32>
    %164 = arith.divf %162, %163 : vector<8x128xf32>
    %165 = vector.extract_strided_slice %164 {offsets = [0, 0], sizes = [8, 32], strides = [1, 1]} : vector<8x128xf32> to vector<8x32xf32>
    %166 = vector.extract_strided_slice %164 {offsets = [0, 32], sizes = [8, 32], strides = [1, 1]} : vector<8x128xf32> to vector<8x32xf32>
    %167 = vector.extract_strided_slice %164 {offsets = [0, 64], sizes = [8, 32], strides = [1, 1]} : vector<8x128xf32> to vector<8x32xf32>
    %cst_72 = arith.constant 2.000000e+00 : f32
    %168 = vector.broadcast %cst_72 : f32 to vector<8x32xf32>
    %169 = arith.mulf %168, %167 : vector<8x32xf32>
    %cst_73 = arith.constant 1.000000e+00 : f32
    %170 = vector.broadcast %cst_73 : f32 to vector<8x32xf32>
    %171 = arith.subf %169, %170 : vector<8x32xf32>
    %172 = vector.extract_strided_slice %164 {offsets = [0, 96], sizes = [8, 32], strides = [1, 1]} : vector<8x128xf32> to vector<8x32xf32>
    %173 = arith.mulf %166, %127 : vector<8x32xf32>
    %174 = arith.mulf %165, %171 : vector<8x32xf32>
    %175 = arith.addf %173, %174 : vector<8x32xf32>
    %176 = math.tanh %175 : vector<8x32xf32>
    %177 = arith.mulf %172, %176 : vector<8x32xf32>
    %c32 = arith.constant 32 : index
    %c0_74 = arith.constant 0 : index
    %178 = vector.load %arg11[%c32, %c0_74] : memref<64x128xf32, #tpu.memory_space<vmem>>, vector<8x128xf32>
    %c0_75 = arith.constant 0 : index
    %c0_76 = arith.constant 0 : index
    %179 = vector.load %arg3[%c0_75, %c0_76] : memref<32x128xf32, #tpu.memory_space<vmem>>, vector<32x128xf32>
    %cst_77 = arith.constant dense<0.000000e+00> : vector<8x128xf32>
    %180 = tpu.matmul %151, %179, %cst_77 {dimension_numbers = #tpu.dot_dimension_numbers<[1], [0], [0], [1], [0, 0, 1, 1], [], []>} : vector<8x32xf32>, vector<32x128xf32>, vector<8x128xf32> -> vector<8x128xf32>
    %181 = arith.addf %178, %180 : vector<8x128xf32>
    %182 = arith.negf %181 : vector<8x128xf32>
    %183 = math.exp %182 : vector<8x128xf32>
    %cst_78 = arith.constant 1.000000e+00 : f32
    %184 = vector.broadcast %cst_78 : f32 to vector<8x128xf32>
    %185 = arith.addf %184, %183 : vector<8x128xf32>
    %186 = arith.divf %184, %185 : vector<8x128xf32>
    %187 = vector.extract_strided_slice %186 {offsets = [0, 0], sizes = [8, 32], strides = [1, 1]} : vector<8x128xf32> to vector<8x32xf32>
    %188 = vector.extract_strided_slice %186 {offsets = [0, 32], sizes = [8, 32], strides = [1, 1]} : vector<8x128xf32> to vector<8x32xf32>
    %189 = vector.extract_strided_slice %186 {offsets = [0, 64], sizes = [8, 32], strides = [1, 1]} : vector<8x128xf32> to vector<8x32xf32>
    %cst_79 = arith.constant 2.000000e+00 : f32
    %190 = vector.broadcast %cst_79 : f32 to vector<8x32xf32>
    %191 = arith.mulf %190, %189 : vector<8x32xf32>
    %cst_80 = arith.constant 1.000000e+00 : f32
    %192 = vector.broadcast %cst_80 : f32 to vector<8x32xf32>
    %193 = arith.subf %191, %192 : vector<8x32xf32>
    %194 = vector.extract_strided_slice %186 {offsets = [0, 96], sizes = [8, 32], strides = [1, 1]} : vector<8x128xf32> to vector<8x32xf32>
    %195 = arith.mulf %188, %149 : vector<8x32xf32>
    %196 = arith.mulf %187, %193 : vector<8x32xf32>
    %197 = arith.addf %195, %196 : vector<8x32xf32>
    %198 = math.tanh %197 : vector<8x32xf32>
    %199 = arith.mulf %194, %198 : vector<8x32xf32>
    %c0_81 = arith.constant 0 : index
    %c0_82 = arith.constant 0 : index
    %200 = vector.load %arg5[%c0_81, %c0_82] : memref<32x128xf32, #tpu.memory_space<vmem>>, vector<32x128xf32>
    %cst_83 = arith.constant dense<0.000000e+00> : vector<8x128xf32>
    %201 = tpu.matmul %151, %200, %cst_83 {dimension_numbers = #tpu.dot_dimension_numbers<[1], [0], [0], [1], [0, 0, 1, 1], [], []>} : vector<8x32xf32>, vector<32x128xf32>, vector<8x128xf32> -> vector<8x128xf32>
    %c0_84 = arith.constant 0 : index
    %c0_85 = arith.constant 0 : index
    %202 = vector.load %arg7[%c0_84, %c0_85] : memref<1x128xf32, #tpu.memory_space<vmem>>, vector<1x128xf32>
    %203 = vector.broadcast %202 : vector<1x128xf32> to vector<8x128xf32>
    %204 = arith.addf %201, %203 : vector<8x128xf32>
    %c0_86 = arith.constant 0 : index
    %c0_87 = arith.constant 0 : index
    %205 = vector.load %arg6[%c0_86, %c0_87] : memref<32x128xf32, #tpu.memory_space<vmem>>, vector<32x128xf32>
    %cst_88 = arith.constant dense<0.000000e+00> : vector<8x128xf32>
    %206 = tpu.matmul %177, %205, %cst_88 {dimension_numbers = #tpu.dot_dimension_numbers<[1], [0], [0], [1], [0, 0, 1, 1], [], []>} : vector<8x32xf32>, vector<32x128xf32>, vector<8x128xf32> -> vector<8x128xf32>
    %207 = arith.addf %204, %206 : vector<8x128xf32>
    %208 = arith.negf %207 : vector<8x128xf32>
    %209 = math.exp %208 : vector<8x128xf32>
    %cst_89 = arith.constant 1.000000e+00 : f32
    %210 = vector.broadcast %cst_89 : f32 to vector<8x128xf32>
    %211 = arith.addf %210, %209 : vector<8x128xf32>
    %212 = arith.divf %210, %211 : vector<8x128xf32>
    %213 = vector.extract_strided_slice %212 {offsets = [0, 0], sizes = [8, 32], strides = [1, 1]} : vector<8x128xf32> to vector<8x32xf32>
    %214 = vector.extract_strided_slice %212 {offsets = [0, 32], sizes = [8, 32], strides = [1, 1]} : vector<8x128xf32> to vector<8x32xf32>
    %215 = vector.extract_strided_slice %212 {offsets = [0, 64], sizes = [8, 32], strides = [1, 1]} : vector<8x128xf32> to vector<8x32xf32>
    %cst_90 = arith.constant 2.000000e+00 : f32
    %216 = vector.broadcast %cst_90 : f32 to vector<8x32xf32>
    %217 = arith.mulf %216, %215 : vector<8x32xf32>
    %cst_91 = arith.constant 1.000000e+00 : f32
    %218 = vector.broadcast %cst_91 : f32 to vector<8x32xf32>
    %219 = arith.subf %217, %218 : vector<8x32xf32>
    %220 = vector.extract_strided_slice %212 {offsets = [0, 96], sizes = [8, 32], strides = [1, 1]} : vector<8x128xf32> to vector<8x32xf32>
    %221 = arith.mulf %214, %175 : vector<8x32xf32>
    %222 = arith.mulf %213, %219 : vector<8x32xf32>
    %223 = arith.addf %221, %222 : vector<8x32xf32>
    %224 = math.tanh %223 : vector<8x32xf32>
    %225 = arith.mulf %220, %224 : vector<8x32xf32>
    %c40 = arith.constant 40 : index
    %c0_92 = arith.constant 0 : index
    %226 = vector.load %arg11[%c40, %c0_92] : memref<64x128xf32, #tpu.memory_space<vmem>>, vector<8x128xf32>
    %c0_93 = arith.constant 0 : index
    %c0_94 = arith.constant 0 : index
    %227 = vector.load %arg3[%c0_93, %c0_94] : memref<32x128xf32, #tpu.memory_space<vmem>>, vector<32x128xf32>
    %cst_95 = arith.constant dense<0.000000e+00> : vector<8x128xf32>
    %228 = tpu.matmul %199, %227, %cst_95 {dimension_numbers = #tpu.dot_dimension_numbers<[1], [0], [0], [1], [0, 0, 1, 1], [], []>} : vector<8x32xf32>, vector<32x128xf32>, vector<8x128xf32> -> vector<8x128xf32>
    %229 = arith.addf %226, %228 : vector<8x128xf32>
    %230 = arith.negf %229 : vector<8x128xf32>
    %231 = math.exp %230 : vector<8x128xf32>
    %cst_96 = arith.constant 1.000000e+00 : f32
    %232 = vector.broadcast %cst_96 : f32 to vector<8x128xf32>
    %233 = arith.addf %232, %231 : vector<8x128xf32>
    %234 = arith.divf %232, %233 : vector<8x128xf32>
    %235 = vector.extract_strided_slice %234 {offsets = [0, 0], sizes = [8, 32], strides = [1, 1]} : vector<8x128xf32> to vector<8x32xf32>
    %236 = vector.extract_strided_slice %234 {offsets = [0, 32], sizes = [8, 32], strides = [1, 1]} : vector<8x128xf32> to vector<8x32xf32>
    %237 = vector.extract_strided_slice %234 {offsets = [0, 64], sizes = [8, 32], strides = [1, 1]} : vector<8x128xf32> to vector<8x32xf32>
    %cst_97 = arith.constant 2.000000e+00 : f32
    %238 = vector.broadcast %cst_97 : f32 to vector<8x32xf32>
    %239 = arith.mulf %238, %237 : vector<8x32xf32>
    %cst_98 = arith.constant 1.000000e+00 : f32
    %240 = vector.broadcast %cst_98 : f32 to vector<8x32xf32>
    %241 = arith.subf %239, %240 : vector<8x32xf32>
    %242 = vector.extract_strided_slice %234 {offsets = [0, 96], sizes = [8, 32], strides = [1, 1]} : vector<8x128xf32> to vector<8x32xf32>
    %243 = arith.mulf %236, %197 : vector<8x32xf32>
    %244 = arith.mulf %235, %241 : vector<8x32xf32>
    %245 = arith.addf %243, %244 : vector<8x32xf32>
    %246 = math.tanh %245 : vector<8x32xf32>
    %247 = arith.mulf %242, %246 : vector<8x32xf32>
    %c0_99 = arith.constant 0 : index
    %c0_100 = arith.constant 0 : index
    %248 = vector.load %arg5[%c0_99, %c0_100] : memref<32x128xf32, #tpu.memory_space<vmem>>, vector<32x128xf32>
    %cst_101 = arith.constant dense<0.000000e+00> : vector<8x128xf32>
    %249 = tpu.matmul %199, %248, %cst_101 {dimension_numbers = #tpu.dot_dimension_numbers<[1], [0], [0], [1], [0, 0, 1, 1], [], []>} : vector<8x32xf32>, vector<32x128xf32>, vector<8x128xf32> -> vector<8x128xf32>
    %c0_102 = arith.constant 0 : index
    %c0_103 = arith.constant 0 : index
    %250 = vector.load %arg7[%c0_102, %c0_103] : memref<1x128xf32, #tpu.memory_space<vmem>>, vector<1x128xf32>
    %251 = vector.broadcast %250 : vector<1x128xf32> to vector<8x128xf32>
    %252 = arith.addf %249, %251 : vector<8x128xf32>
    %c0_104 = arith.constant 0 : index
    %c0_105 = arith.constant 0 : index
    %253 = vector.load %arg6[%c0_104, %c0_105] : memref<32x128xf32, #tpu.memory_space<vmem>>, vector<32x128xf32>
    %cst_106 = arith.constant dense<0.000000e+00> : vector<8x128xf32>
    %254 = tpu.matmul %225, %253, %cst_106 {dimension_numbers = #tpu.dot_dimension_numbers<[1], [0], [0], [1], [0, 0, 1, 1], [], []>} : vector<8x32xf32>, vector<32x128xf32>, vector<8x128xf32> -> vector<8x128xf32>
    %255 = arith.addf %252, %254 : vector<8x128xf32>
    %256 = arith.negf %255 : vector<8x128xf32>
    %257 = math.exp %256 : vector<8x128xf32>
    %cst_107 = arith.constant 1.000000e+00 : f32
    %258 = vector.broadcast %cst_107 : f32 to vector<8x128xf32>
    %259 = arith.addf %258, %257 : vector<8x128xf32>
    %260 = arith.divf %258, %259 : vector<8x128xf32>
    %261 = vector.extract_strided_slice %260 {offsets = [0, 0], sizes = [8, 32], strides = [1, 1]} : vector<8x128xf32> to vector<8x32xf32>
    %262 = vector.extract_strided_slice %260 {offsets = [0, 32], sizes = [8, 32], strides = [1, 1]} : vector<8x128xf32> to vector<8x32xf32>
    %263 = vector.extract_strided_slice %260 {offsets = [0, 64], sizes = [8, 32], strides = [1, 1]} : vector<8x128xf32> to vector<8x32xf32>
    %cst_108 = arith.constant 2.000000e+00 : f32
    %264 = vector.broadcast %cst_108 : f32 to vector<8x32xf32>
    %265 = arith.mulf %264, %263 : vector<8x32xf32>
    %cst_109 = arith.constant 1.000000e+00 : f32
    %266 = vector.broadcast %cst_109 : f32 to vector<8x32xf32>
    %267 = arith.subf %265, %266 : vector<8x32xf32>
    %268 = vector.extract_strided_slice %260 {offsets = [0, 96], sizes = [8, 32], strides = [1, 1]} : vector<8x128xf32> to vector<8x32xf32>
    %269 = arith.mulf %262, %223 : vector<8x32xf32>
    %270 = arith.mulf %261, %267 : vector<8x32xf32>
    %271 = arith.addf %269, %270 : vector<8x32xf32>
    %272 = math.tanh %271 : vector<8x32xf32>
    %273 = arith.mulf %268, %272 : vector<8x32xf32>
    %c48 = arith.constant 48 : index
    %c0_110 = arith.constant 0 : index
    %274 = vector.load %arg11[%c48, %c0_110] : memref<64x128xf32, #tpu.memory_space<vmem>>, vector<8x128xf32>
    %c0_111 = arith.constant 0 : index
    %c0_112 = arith.constant 0 : index
    %275 = vector.load %arg3[%c0_111, %c0_112] : memref<32x128xf32, #tpu.memory_space<vmem>>, vector<32x128xf32>
    %cst_113 = arith.constant dense<0.000000e+00> : vector<8x128xf32>
    %276 = tpu.matmul %247, %275, %cst_113 {dimension_numbers = #tpu.dot_dimension_numbers<[1], [0], [0], [1], [0, 0, 1, 1], [], []>} : vector<8x32xf32>, vector<32x128xf32>, vector<8x128xf32> -> vector<8x128xf32>
    %277 = arith.addf %274, %276 : vector<8x128xf32>
    %278 = arith.negf %277 : vector<8x128xf32>
    %279 = math.exp %278 : vector<8x128xf32>
    %cst_114 = arith.constant 1.000000e+00 : f32
    %280 = vector.broadcast %cst_114 : f32 to vector<8x128xf32>
    %281 = arith.addf %280, %279 : vector<8x128xf32>
    %282 = arith.divf %280, %281 : vector<8x128xf32>
    %283 = vector.extract_strided_slice %282 {offsets = [0, 0], sizes = [8, 32], strides = [1, 1]} : vector<8x128xf32> to vector<8x32xf32>
    %284 = vector.extract_strided_slice %282 {offsets = [0, 32], sizes = [8, 32], strides = [1, 1]} : vector<8x128xf32> to vector<8x32xf32>
    %285 = vector.extract_strided_slice %282 {offsets = [0, 64], sizes = [8, 32], strides = [1, 1]} : vector<8x128xf32> to vector<8x32xf32>
    %cst_115 = arith.constant 2.000000e+00 : f32
    %286 = vector.broadcast %cst_115 : f32 to vector<8x32xf32>
    %287 = arith.mulf %286, %285 : vector<8x32xf32>
    %cst_116 = arith.constant 1.000000e+00 : f32
    %288 = vector.broadcast %cst_116 : f32 to vector<8x32xf32>
    %289 = arith.subf %287, %288 : vector<8x32xf32>
    %290 = vector.extract_strided_slice %282 {offsets = [0, 96], sizes = [8, 32], strides = [1, 1]} : vector<8x128xf32> to vector<8x32xf32>
    %291 = arith.mulf %284, %245 : vector<8x32xf32>
    %292 = arith.mulf %283, %289 : vector<8x32xf32>
    %293 = arith.addf %291, %292 : vector<8x32xf32>
    %294 = math.tanh %293 : vector<8x32xf32>
    %295 = arith.mulf %290, %294 : vector<8x32xf32>
    %c0_117 = arith.constant 0 : index
    %c0_118 = arith.constant 0 : index
    %296 = vector.load %arg5[%c0_117, %c0_118] : memref<32x128xf32, #tpu.memory_space<vmem>>, vector<32x128xf32>
    %cst_119 = arith.constant dense<0.000000e+00> : vector<8x128xf32>
    %297 = tpu.matmul %247, %296, %cst_119 {dimension_numbers = #tpu.dot_dimension_numbers<[1], [0], [0], [1], [0, 0, 1, 1], [], []>} : vector<8x32xf32>, vector<32x128xf32>, vector<8x128xf32> -> vector<8x128xf32>
    %c0_120 = arith.constant 0 : index
    %c0_121 = arith.constant 0 : index
    %298 = vector.load %arg7[%c0_120, %c0_121] : memref<1x128xf32, #tpu.memory_space<vmem>>, vector<1x128xf32>
    %299 = vector.broadcast %298 : vector<1x128xf32> to vector<8x128xf32>
    %300 = arith.addf %297, %299 : vector<8x128xf32>
    %c0_122 = arith.constant 0 : index
    %c0_123 = arith.constant 0 : index
    %301 = vector.load %arg6[%c0_122, %c0_123] : memref<32x128xf32, #tpu.memory_space<vmem>>, vector<32x128xf32>
    %cst_124 = arith.constant dense<0.000000e+00> : vector<8x128xf32>
    %302 = tpu.matmul %273, %301, %cst_124 {dimension_numbers = #tpu.dot_dimension_numbers<[1], [0], [0], [1], [0, 0, 1, 1], [], []>} : vector<8x32xf32>, vector<32x128xf32>, vector<8x128xf32> -> vector<8x128xf32>
    %303 = arith.addf %300, %302 : vector<8x128xf32>
    %304 = arith.negf %303 : vector<8x128xf32>
    %305 = math.exp %304 : vector<8x128xf32>
    %cst_125 = arith.constant 1.000000e+00 : f32
    %306 = vector.broadcast %cst_125 : f32 to vector<8x128xf32>
    %307 = arith.addf %306, %305 : vector<8x128xf32>
    %308 = arith.divf %306, %307 : vector<8x128xf32>
    %309 = vector.extract_strided_slice %308 {offsets = [0, 0], sizes = [8, 32], strides = [1, 1]} : vector<8x128xf32> to vector<8x32xf32>
    %310 = vector.extract_strided_slice %308 {offsets = [0, 32], sizes = [8, 32], strides = [1, 1]} : vector<8x128xf32> to vector<8x32xf32>
    %311 = vector.extract_strided_slice %308 {offsets = [0, 64], sizes = [8, 32], strides = [1, 1]} : vector<8x128xf32> to vector<8x32xf32>
    %cst_126 = arith.constant 2.000000e+00 : f32
    %312 = vector.broadcast %cst_126 : f32 to vector<8x32xf32>
    %313 = arith.mulf %312, %311 : vector<8x32xf32>
    %cst_127 = arith.constant 1.000000e+00 : f32
    %314 = vector.broadcast %cst_127 : f32 to vector<8x32xf32>
    %315 = arith.subf %313, %314 : vector<8x32xf32>
    %316 = vector.extract_strided_slice %308 {offsets = [0, 96], sizes = [8, 32], strides = [1, 1]} : vector<8x128xf32> to vector<8x32xf32>
    %317 = arith.mulf %310, %271 : vector<8x32xf32>
    %318 = arith.mulf %309, %315 : vector<8x32xf32>
    %319 = arith.addf %317, %318 : vector<8x32xf32>
    %320 = math.tanh %319 : vector<8x32xf32>
    %321 = arith.mulf %316, %320 : vector<8x32xf32>
    %c56 = arith.constant 56 : index
    %c0_128 = arith.constant 0 : index
    %322 = vector.load %arg11[%c56, %c0_128] : memref<64x128xf32, #tpu.memory_space<vmem>>, vector<8x128xf32>
    %c0_129 = arith.constant 0 : index
    %c0_130 = arith.constant 0 : index
    %323 = vector.load %arg3[%c0_129, %c0_130] : memref<32x128xf32, #tpu.memory_space<vmem>>, vector<32x128xf32>
    %cst_131 = arith.constant dense<0.000000e+00> : vector<8x128xf32>
    %324 = tpu.matmul %295, %323, %cst_131 {dimension_numbers = #tpu.dot_dimension_numbers<[1], [0], [0], [1], [0, 0, 1, 1], [], []>} : vector<8x32xf32>, vector<32x128xf32>, vector<8x128xf32> -> vector<8x128xf32>
    %325 = arith.addf %322, %324 : vector<8x128xf32>
    %326 = arith.negf %325 : vector<8x128xf32>
    %327 = math.exp %326 : vector<8x128xf32>
    %cst_132 = arith.constant 1.000000e+00 : f32
    %328 = vector.broadcast %cst_132 : f32 to vector<8x128xf32>
    %329 = arith.addf %328, %327 : vector<8x128xf32>
    %330 = arith.divf %328, %329 : vector<8x128xf32>
    %331 = vector.extract_strided_slice %330 {offsets = [0, 0], sizes = [8, 32], strides = [1, 1]} : vector<8x128xf32> to vector<8x32xf32>
    %332 = vector.extract_strided_slice %330 {offsets = [0, 32], sizes = [8, 32], strides = [1, 1]} : vector<8x128xf32> to vector<8x32xf32>
    %333 = vector.extract_strided_slice %330 {offsets = [0, 64], sizes = [8, 32], strides = [1, 1]} : vector<8x128xf32> to vector<8x32xf32>
    %cst_133 = arith.constant 2.000000e+00 : f32
    %334 = vector.broadcast %cst_133 : f32 to vector<8x32xf32>
    %335 = arith.mulf %334, %333 : vector<8x32xf32>
    %cst_134 = arith.constant 1.000000e+00 : f32
    %336 = vector.broadcast %cst_134 : f32 to vector<8x32xf32>
    %337 = arith.subf %335, %336 : vector<8x32xf32>
    %338 = vector.extract_strided_slice %330 {offsets = [0, 96], sizes = [8, 32], strides = [1, 1]} : vector<8x128xf32> to vector<8x32xf32>
    %339 = arith.mulf %332, %293 : vector<8x32xf32>
    %340 = arith.mulf %331, %337 : vector<8x32xf32>
    %341 = arith.addf %339, %340 : vector<8x32xf32>
    %342 = math.tanh %341 : vector<8x32xf32>
    %343 = arith.mulf %338, %342 : vector<8x32xf32>
    %c0_135 = arith.constant 0 : index
    %c0_136 = arith.constant 0 : index
    %344 = vector.load %arg5[%c0_135, %c0_136] : memref<32x128xf32, #tpu.memory_space<vmem>>, vector<32x128xf32>
    %cst_137 = arith.constant dense<0.000000e+00> : vector<8x128xf32>
    %345 = tpu.matmul %295, %344, %cst_137 {dimension_numbers = #tpu.dot_dimension_numbers<[1], [0], [0], [1], [0, 0, 1, 1], [], []>} : vector<8x32xf32>, vector<32x128xf32>, vector<8x128xf32> -> vector<8x128xf32>
    %c0_138 = arith.constant 0 : index
    %c0_139 = arith.constant 0 : index
    %346 = vector.load %arg7[%c0_138, %c0_139] : memref<1x128xf32, #tpu.memory_space<vmem>>, vector<1x128xf32>
    %347 = vector.broadcast %346 : vector<1x128xf32> to vector<8x128xf32>
    %348 = arith.addf %345, %347 : vector<8x128xf32>
    %c0_140 = arith.constant 0 : index
    %c0_141 = arith.constant 0 : index
    %349 = vector.load %arg6[%c0_140, %c0_141] : memref<32x128xf32, #tpu.memory_space<vmem>>, vector<32x128xf32>
    %cst_142 = arith.constant dense<0.000000e+00> : vector<8x128xf32>
    %350 = tpu.matmul %321, %349, %cst_142 {dimension_numbers = #tpu.dot_dimension_numbers<[1], [0], [0], [1], [0, 0, 1, 1], [], []>} : vector<8x32xf32>, vector<32x128xf32>, vector<8x128xf32> -> vector<8x128xf32>
    %351 = arith.addf %348, %350 : vector<8x128xf32>
    %352 = arith.negf %351 : vector<8x128xf32>
    %353 = math.exp %352 : vector<8x128xf32>
    %cst_143 = arith.constant 1.000000e+00 : f32
    %354 = vector.broadcast %cst_143 : f32 to vector<8x128xf32>
    %355 = arith.addf %354, %353 : vector<8x128xf32>
    %356 = arith.divf %354, %355 : vector<8x128xf32>
    %357 = vector.extract_strided_slice %356 {offsets = [0, 0], sizes = [8, 32], strides = [1, 1]} : vector<8x128xf32> to vector<8x32xf32>
    %358 = vector.extract_strided_slice %356 {offsets = [0, 32], sizes = [8, 32], strides = [1, 1]} : vector<8x128xf32> to vector<8x32xf32>
    %359 = vector.extract_strided_slice %356 {offsets = [0, 64], sizes = [8, 32], strides = [1, 1]} : vector<8x128xf32> to vector<8x32xf32>
    %cst_144 = arith.constant 2.000000e+00 : f32
    %360 = vector.broadcast %cst_144 : f32 to vector<8x32xf32>
    %361 = arith.mulf %360, %359 : vector<8x32xf32>
    %cst_145 = arith.constant 1.000000e+00 : f32
    %362 = vector.broadcast %cst_145 : f32 to vector<8x32xf32>
    %363 = arith.subf %361, %362 : vector<8x32xf32>
    %364 = vector.extract_strided_slice %356 {offsets = [0, 96], sizes = [8, 32], strides = [1, 1]} : vector<8x128xf32> to vector<8x32xf32>
    %365 = arith.mulf %358, %319 : vector<8x32xf32>
    %366 = arith.mulf %357, %363 : vector<8x32xf32>
    %367 = arith.addf %365, %366 : vector<8x32xf32>
    %368 = math.tanh %367 : vector<8x32xf32>
    %369 = arith.mulf %364, %368 : vector<8x32xf32>
    %c0_146 = arith.constant 0 : index
    %c0_147 = arith.constant 0 : index
    %370 = vector.load %arg5[%c0_146, %c0_147] : memref<32x128xf32, #tpu.memory_space<vmem>>, vector<32x128xf32>
    %cst_148 = arith.constant dense<0.000000e+00> : vector<8x128xf32>
    %371 = tpu.matmul %343, %370, %cst_148 {dimension_numbers = #tpu.dot_dimension_numbers<[1], [0], [0], [1], [0, 0, 1, 1], [], []>} : vector<8x32xf32>, vector<32x128xf32>, vector<8x128xf32> -> vector<8x128xf32>
    %c0_149 = arith.constant 0 : index
    %c0_150 = arith.constant 0 : index
    %372 = vector.load %arg7[%c0_149, %c0_150] : memref<1x128xf32, #tpu.memory_space<vmem>>, vector<1x128xf32>
    %373 = vector.broadcast %372 : vector<1x128xf32> to vector<8x128xf32>
    %374 = arith.addf %371, %373 : vector<8x128xf32>
    %c0_151 = arith.constant 0 : index
    %c0_152 = arith.constant 0 : index
    %375 = vector.load %arg6[%c0_151, %c0_152] : memref<32x128xf32, #tpu.memory_space<vmem>>, vector<32x128xf32>
    %cst_153 = arith.constant dense<0.000000e+00> : vector<8x128xf32>
    %376 = tpu.matmul %369, %375, %cst_153 {dimension_numbers = #tpu.dot_dimension_numbers<[1], [0], [0], [1], [0, 0, 1, 1], [], []>} : vector<8x32xf32>, vector<32x128xf32>, vector<8x128xf32> -> vector<8x128xf32>
    %377 = arith.addf %374, %376 : vector<8x128xf32>
    %378 = arith.negf %377 : vector<8x128xf32>
    %379 = math.exp %378 : vector<8x128xf32>
    %cst_154 = arith.constant 1.000000e+00 : f32
    %380 = vector.broadcast %cst_154 : f32 to vector<8x128xf32>
    %381 = arith.addf %380, %379 : vector<8x128xf32>
    %382 = arith.divf %380, %381 : vector<8x128xf32>
    %383 = vector.extract_strided_slice %382 {offsets = [0, 0], sizes = [8, 32], strides = [1, 1]} : vector<8x128xf32> to vector<8x32xf32>
    %384 = vector.extract_strided_slice %382 {offsets = [0, 32], sizes = [8, 32], strides = [1, 1]} : vector<8x128xf32> to vector<8x32xf32>
    %385 = vector.extract_strided_slice %382 {offsets = [0, 64], sizes = [8, 32], strides = [1, 1]} : vector<8x128xf32> to vector<8x32xf32>
    %cst_155 = arith.constant 2.000000e+00 : f32
    %386 = vector.broadcast %cst_155 : f32 to vector<8x32xf32>
    %387 = arith.mulf %386, %385 : vector<8x32xf32>
    %cst_156 = arith.constant 1.000000e+00 : f32
    %388 = vector.broadcast %cst_156 : f32 to vector<8x32xf32>
    %389 = arith.subf %387, %388 : vector<8x32xf32>
    %390 = vector.extract_strided_slice %382 {offsets = [0, 96], sizes = [8, 32], strides = [1, 1]} : vector<8x128xf32> to vector<8x32xf32>
    %391 = arith.mulf %384, %367 : vector<8x32xf32>
    %392 = arith.mulf %383, %389 : vector<8x32xf32>
    %393 = arith.addf %391, %392 : vector<8x32xf32>
    %394 = math.tanh %393 : vector<8x32xf32>
    %395 = arith.mulf %390, %394 : vector<8x32xf32>
    %c0_157 = arith.constant 0 : index
    %c0_158 = arith.constant 0 : index
    %396 = vector.load %arg8[%c0_157, %c0_158] : memref<32x128xf32, #tpu.memory_space<vmem>>, vector<32x128xf32>
    %cst_159 = arith.constant dense<0.000000e+00> : vector<8x128xf32>
    %397 = tpu.matmul %395, %396, %cst_159 {dimension_numbers = #tpu.dot_dimension_numbers<[1], [0], [0], [1], [0, 0, 1, 1], [], []>} : vector<8x32xf32>, vector<32x128xf32>, vector<8x128xf32> -> vector<8x128xf32>
    %c0_160 = arith.constant 0 : index
    %c0_161 = arith.constant 0 : index
    %398 = vector.load %arg9[%c0_160, %c0_161] : memref<1x128xf32, #tpu.memory_space<vmem>>, vector<1x128xf32>
    %399 = vector.broadcast %398 : vector<1x128xf32> to vector<8x128xf32>
    %400 = arith.addf %397, %399 : vector<8x128xf32>
    %c0_162 = arith.constant 0 : index
    %c0_163 = arith.constant 0 : index
    %401 = vector.load %arg10[%c0_162, %c0_163] : memref<8x128xf32, #tpu.memory_space<vmem>>, vector<8x128xf32>
    tpu.vector_store %arg10[%c0_162, %c0_163], %400 {strides = array<i32>} : memref<8x128xf32, #tpu.memory_space<vmem>>, vector<8x128xf32>,
    return
  }
  func.func @transform_0(%arg0: i32) -> (i32, i32, i32) {
    %c0_i32 = arith.constant 0 : i32
    %c0_i32_0 = arith.constant 0 : i32
    %c0_i32_1 = arith.constant 0 : i32
    return %arg0, %c0_i32, %c0_i32_0 : i32, i32, i32
  }
  func.func @transform_1(%arg0: i32) -> (i32, i32) {
    %c0_i32 = arith.constant 0 : i32
    %c0_i32_0 = arith.constant 0 : i32
    %c0_i32_1 = arith.constant 0 : i32
    return %c0_i32, %c0_i32_0 : i32, i32
  }
  func.func @transform_2(%arg0: i32) -> (i32, i32) {
    %c0_i32 = arith.constant 0 : i32
    %c0_i32_0 = arith.constant 0 : i32
    %c0_i32_1 = arith.constant 0 : i32
    return %c0_i32, %c0_i32_0 : i32, i32
  }
  func.func @transform_3(%arg0: i32) -> (i32, i32) {
    %c0_i32 = arith.constant 0 : i32
    %c0_i32_0 = arith.constant 0 : i32
    %c0_i32_1 = arith.constant 0 : i32
    return %c0_i32, %c0_i32_0 : i32, i32
  }
  func.func @transform_4(%arg0: i32) -> (i32, i32) {
    %c0_i32 = arith.constant 0 : i32
    %c0_i32_0 = arith.constant 0 : i32
    %c0_i32_1 = arith.constant 0 : i32
    return %c0_i32, %c0_i32_0 : i32, i32
  }
  func.func @transform_5(%arg0: i32) -> (i32, i32) {
    %c0_i32 = arith.constant 0 : i32
    %c0_i32_0 = arith.constant 0 : i32
    %c0_i32_1 = arith.constant 0 : i32
    return %c0_i32, %c0_i32_0 : i32, i32
  }
  func.func @transform_6(%arg0: i32) -> (i32, i32) {
    %c0_i32 = arith.constant 0 : i32
    %c0_i32_0 = arith.constant 0 : i32
    %c0_i32_1 = arith.constant 0 : i32
    return %c0_i32, %c0_i32_0 : i32, i32
  }
  func.func @transform_7(%arg0: i32) -> (i32, i32) {
    %c0_i32 = arith.constant 0 : i32
    %c0_i32_0 = arith.constant 0 : i32
    %c0_i32_1 = arith.constant 0 : i32
    return %c0_i32, %c0_i32_0 : i32, i32
  }
  func.func @transform_8(%arg0: i32) -> (i32, i32) {
    %c0_i32 = arith.constant 0 : i32
    %c0_i32_0 = arith.constant 0 : i32
    %c0_i32_1 = arith.constant 0 : i32
    return %c0_i32, %c0_i32_0 : i32, i32
  }
  func.func @transform_9(%arg0: i32) -> (i32, i32) {
    %c0_i32 = arith.constant 0 : i32
    %c0_i32_0 = arith.constant 0 : i32
    return %arg0, %c0_i32 : i32, i32
  }
}

</mosaic_0001>

<llo_original>
// kernel: tpu_custom_call.1
$region0: #{tpu_custom_call.1}
  #allocation0 [shape = 'u32[]', space=smem, size = 0x4, offset = 0x4, fixed_abs, tag = 'smem constant byte address 0x4 - core index']
  #allocation1 [shape = 'u32[144,128]{1,0:T(1,128)}', space=vmem, size = 0x12000, scoped, tag = 'internal scratch']
  #allocation2 [shape = 'f32[64,128]{1,0:T(8,128)}', space=vmem, size = 0x8000, scoped, tag = 'scratch operand']
  %s0 = inlined_call_operand.vmem [shape: f32[1,64,16], index: 0, kind: input, shape index: {}]
  %s1 = inlined_call_operand.hbm [shape: f32[16,128], index: 1, kind: input, shape index: {}]
  %s2 = inlined_call_operand.vmem [shape: f32[32,128], index: 2, kind: input, shape index: {}]
  %s3 = inlined_call_operand.vmem [shape: f32[1,128], index: 3, kind: input, shape index: {}]
  %s4 = inlined_call_operand.vmem [shape: f32[32,128], index: 4, kind: input, shape index: {}]
  %s5 = inlined_call_operand.vmem [shape: f32[32,128], index: 5, kind: input, shape index: {}]
  %s6 = inlined_call_operand.vmem [shape: f32[1,128], index: 6, kind: input, shape index: {}]
  %s7 = inlined_call_operand.hbm [shape: f32[32,128], index: 7, kind: input, shape index: {}]
  %s8 = inlined_call_operand.vmem [shape: f32[1,128], index: 8, kind: input, shape index: {}]
  %s9 = inlined_call_operand.hbm [shape: f32[8,128], index: 9, kind: output, shape index: {}]
  %s10 = sld [smem:[#allocation0]]
  $region54: #{tpu_custom_call.1} parent=0
    _
  %s12 = ssub.s32 1, %s10
  %s13 = scalar_select 0, %s12, %s10
  $region1: #{tpu_custom_call.1} parent=0
    #allocation3 [shape = 'u8[8192]{0}', space=vmem, size = 0x2000, scoped, tag = 'input window, operand 1, single buffered']
    #allocation4 [shape = 's32[1]{0}', space=sflag, size = 0x4, scoped, tag = 'scoped memory for tpu_custom_call.1']
    #allocation5 [shape = 's32[1]{0}', space=sflag, size = 0x4, scoped, tag = 'scoped memory for tpu_custom_call.1']
    #allocation6 [shape = 'u8[16384]{0}', space=vmem, size = 0x4000, scoped, tag = 'input window, operand 7, single buffered']
    #allocation7 [shape = 's32[1]{0}', space=sflag, size = 0x4, scoped, tag = 'scoped memory for tpu_custom_call.1']
    #allocation8 [shape = 'u8[4096]{0}', space=vmem, size = 0x1000, scoped, tag = 'output window, operand 0, single buffered']
    %14 = vsyncpa [#allocation4], 0
    %15 = vsyncpa [#allocation7], 0
    %16 = vsyncpa [#allocation5], 0
    // Predicated region
    $region2: #{tpu_custom_call.1} parent=1 // pred_check
      _
    $region3: #{tpu_custom_call.1} parent=1 // pred_check_branch
      %18 = sbr.rel (0) target = $region5
    $region4: #{tpu_custom_call.1} parent=1 // pred_region
      _
    $region5: #{tpu_custom_call.1} parent=1 // pred_fallthru
      _
    // Predicated region
    $region6: #{tpu_custom_call.1} parent=1 // pred_check
      _
    $region7: #{tpu_custom_call.1} parent=1 // pred_check_branch
      %20 = sbr.rel (0) target = $region9
    $region8: #{tpu_custom_call.1} parent=1 // pred_region
      %s22 = ssub.s32 256, 256
      %23 = vsyncadd [#allocation4], %s22
      %s24 = sshll.u32 [#allocation3], 4
      %s25 = int_to_ptr.vmem [resolvable:$true] %s24
      %30 = dma.hbm_to_vmem [thread:$0]  %s1, 256, %s25, [#allocation4], 128, 128, 8
    $region9: #{tpu_custom_call.1} parent=1 // pred_fallthru
      _
    // Predicated region
    $region10: #{tpu_custom_call.1} parent=1 // pred_check
      _
    $region11: #{tpu_custom_call.1} parent=1 // pred_check_branch
      %32 = sbr.rel (0) target = $region13
    $region12: #{tpu_custom_call.1} parent=1 // pred_region
      _
    $region13: #{tpu_custom_call.1} parent=1 // pred_fallthru
      _
    // Predicated region
    $region14: #{tpu_custom_call.1} parent=1 // pred_check
      _
    $region15: #{tpu_custom_call.1} parent=1 // pred_check_branch
      %34 = sbr.rel (0) target = $region17
    $region16: #{tpu_custom_call.1} parent=1 // pred_region
      _
    $region17: #{tpu_custom_call.1} parent=1 // pred_fallthru
      _
    // Predicated region
    $region18: #{tpu_custom_call.1} parent=1 // pred_check
      _
    $region19: #{tpu_custom_call.1} parent=1 // pred_check_branch
      %36 = sbr.rel (0) target = $region21
    $region20: #{tpu_custom_call.1} parent=1 // pred_region
      _
    $region21: #{tpu_custom_call.1} parent=1 // pred_fallthru
      _
    // Predicated region
    $region22: #{tpu_custom_call.1} parent=1 // pred_check
      _
    $region23: #{tpu_custom_call.1} parent=1 // pred_check_branch
      %38 = sbr.rel (0) target = $region25
    $region24: #{tpu_custom_call.1} parent=1 // pred_region
      _
    $region25: #{tpu_custom_call.1} parent=1 // pred_fallthru
      _
    // Predicated region
    $region26: #{tpu_custom_call.1} parent=1 // pred_check
      _
    $region27: #{tpu_custom_call.1} parent=1 // pred_check_branch
      %40 = sbr.rel (0) target = $region29
    $region28: #{tpu_custom_call.1} parent=1 // pred_region
      _
    $region29: #{tpu_custom_call.1} parent=1 // pred_fallthru
      _
    // Predicated region
    $region30: #{tpu_custom_call.1} parent=1 // pred_check
      _
    $region31: #{tpu_custom_call.1} parent=1 // pred_check_branch
      %42 = sbr.rel (0) target = $region33
    $region32: #{tpu_custom_call.1} parent=1 // pred_region
      %s44 = ssub.s32 512, 512
      %45 = vsyncadd [#allocation7], %s44
      %s46 = sshll.u32 [#allocation6], 4
      %s47 = int_to_ptr.vmem [resolvable:$true] %s46
      %52 = dma.hbm_to_vmem [thread:$0]  %s7, 512, %s47, [#allocation7], 128, 128, 8
    $region33: #{tpu_custom_call.1} parent=1 // pred_fallthru
      _
    // Predicated region
    $region34: #{tpu_custom_call.1} parent=1 // pred_check
      _
    $region35: #{tpu_custom_call.1} parent=1 // pred_check_branch
      %54 = sbr.rel (0) target = $region37
    $region36: #{tpu_custom_call.1} parent=1 // pred_region
      _
    $region37: #{tpu_custom_call.1} parent=1 // pred_fallthru
      _
    // Predicated region
    $region38: #{tpu_custom_call.1} parent=1 // pred_check
      _
    $region39: #{tpu_custom_call.1} parent=1 // pred_check_branch
      %56 = sbr.rel (0) target = $region41
    $region40: #{tpu_custom_call.1} parent=1 // pred_region
      %57 = dma.done [#allocation4], 256
    $region41: #{tpu_custom_call.1} parent=1 // pred_fallthru
      _
    // Predicated region
    $region42: #{tpu_custom_call.1} parent=1 // pred_check
      _
    $region43: #{tpu_custom_call.1} parent=1 // pred_check_branch
      %59 = sbr.rel (0) target = $region45
    $region44: #{tpu_custom_call.1} parent=1 // pred_region
      %60 = dma.done [#allocation7], 512
    $region45: #{tpu_custom_call.1} parent=1 // pred_fallthru
      _
    %v61 = vld [vmem:[%s0] sm:$0xff]
    %v62 = vld [vmem:[%s0 + $0x8] sm:$0xff]
    %v63 = vld [vmem:[%s0 + $0x10] sm:$0xff]
    %v64 = vld [vmem:[%s0 + $0x18] sm:$0xff]
    %v65 = vld [vmem:[%s0 + $0x20] sm:$0xff]
    %v66 = vld [vmem:[%s0 + $0x28] sm:$0xff]
    %v67 = vld [vmem:[%s0 + $0x30] sm:$0xff]
    %v68 = vld [vmem:[%s0 + $0x38] sm:$0xff]
    %v69 = vld [vmem:[#allocation3] sm:$0xff]
    %v70 = vld [vmem:[#allocation3 + $0x8] sm:$0xff]
    %v71 = vld [vmem:[%s3] sm:$0x1]
    %v73 = vlaneseq
    %v74 = vshrl.u32 %v73, 7
    %v75 = vsub.s32 0, %v74
    %v76 = vrot.slane %v71, %v75
    %vm78 = vcmask 130048
    %v80 = vsel %vm78, %v61, 0
    %v83 = vsel %vm78, %v62, 0
    %v86 = vsel %vm78, %v63, 0
    %v89 = vsel %vm78, %v64, 0
    %v92 = vsel %vm78, %v65, 0
    %v95 = vsel %vm78, %v66, 0
    %v98 = vsel %vm78, %v67, 0
    %v101 = vsel %vm78, %v68, 0
    %103 = vmatprep.subr.mxu0 0.0
    %104 = vmatpush1.msra.mxu0 %v69
    %105 = vmatprep.subr.mxu0 0.0
    %106 = vmatpush1.msra.mxu0 %v70
    %107 = vmatprep.subr.mxu0 0.0
    %108 = vmatpush1.msra.mxu0 0.0
    %109 = vmatprep.subr.mxu0 0.0
    %110 = vmatpush1.msra.mxu0 0.0
    %111 = vmatprep.subr.mxu0 0.0
    %112 = vmatpush1.msra.mxu0 0.0
    %113 = vmatprep.subr.mxu0 0.0
    %114 = vmatpush1.msra.mxu0 0.0
    %115 = vmatprep.subr.mxu0 0.0
    %116 = vmatpush1.msra.mxu0 0.0
    %117 = vmatprep.subr.mxu0 0.0
    %118 = vmatpush1.msra.mxu0 0.0
    %119 = vmatprep.subr.mxu0 0.0
    %120 = vmatpush1.msra.mxu0 0.0
    %121 = vmatprep.subr.mxu0 0.0
    %122 = vmatpush1.msra.mxu0 0.0
    %123 = vmatprep.subr.mxu0 0.0
    %124 = vmatpush1.msra.mxu0 0.0
    %125 = vmatprep.subr.mxu0 0.0
    %126 = vmatpush1.msra.mxu0 0.0
    %127 = vmatprep.subr.mxu0 0.0
    %128 = vmatpush1.msra.mxu0 0.0
    %129 = vmatprep.subr.mxu0 0.0
    %130 = vmatpush1.msra.mxu0 0.0
    %131 = vmatprep.subr.mxu0 0.0
    %132 = vmatpush1.msra.mxu0 0.0
    %133 = vmatprep.subr.mxu0 0.0
    %134 = vmatpush1.msra.mxu0 0.0
    %135 = vmatprep.subr.mxu0 0.0
    %136 = vmatpush1.msra.mxu0 0.0
    %137 = vmatprep.subr.mxu0 0.0
    %138 = vmatpush1.msra.mxu0 0.0
    %139 = vmatprep.subr.mxu0 0.0
    %140 = vmatpush1.msra.mxu0 0.0
    %141 = vmatprep.subr.mxu0 0.0
    %142 = vmatpush1.msra.mxu0 0.0
    %143 = vmatprep.subr.mxu0 0.0
    %144 = vmatpush1.msra.mxu0 0.0
    %145 = vmatprep.subr.mxu0 0.0
    %146 = vmatpush1.msra.mxu0 0.0
    %147 = vmatprep.subr.mxu0 0.0
    %148 = vmatpush1.msra.mxu0 0.0
    %149 = vmatprep.subr.mxu0 0.0
    %150 = vmatpush1.msra.mxu0 0.0
    %151 = vmatprep.subr.mxu0 0.0
    %152 = vmatpush1.msra.mxu0 0.0
    %153 = vmatprep.subr.mxu0 0.0
    %154 = vmatpush1.msra.mxu0 0.0
    %155 = vmatprep.subr.mxu0 0.0
    %156 = vmatpush1.msra.mxu0 0.0
    %157 = vmatprep.subr.mxu0 0.0
    %158 = vmatpush1.msra.mxu0 0.0
    %159 = vmatprep.subr.mxu0 0.0
    %160 = vmatpush1.msra.mxu0 0.0
    %161 = vmatprep.subr.mxu0 0.0
    %162 = vmatpush1.msra.mxu0 0.0
    %163 = vmatprep.subr.mxu0 0.0
    %164 = vmatpush1.msra.mxu0 0.0
    %165 = vmatprep.subr.mxu0 0.0
    %166 = vmatpush1.msra.mxu0 0.0
    %167 = vmatprep.mubr.f32.mxu0 0.0
    %168 = vmatmul.mubr.f32.gmra.mrb[0].mxu0 %v80
    %v169 = vpop.f32.mrb[0].mxu0
    %v170 = vadd.f32 %v76, %v169
    %v171 = vpop.f32.mrb[0].mxu0
    %172 = vmatprep.mubr.f32.mxu0 0.0
    %173 = vmatmul.mubr.f32.gmra.mrb[0].mxu0 %v83
    %v174 = vpop.f32.mrb[0].mxu0
    %v175 = vadd.f32 %v76, %v174
    %v176 = vpop.f32.mrb[0].mxu0
    %177 = vmatprep.mubr.f32.mxu0 0.0
    %178 = vmatmul.mubr.f32.gmra.mrb[0].mxu0 %v86
    %v179 = vpop.f32.mrb[0].mxu0
    %v180 = vadd.f32 %v76, %v179
    %v181 = vpop.f32.mrb[0].mxu0
    %182 = vmatprep.mubr.f32.mxu0 0.0
    %183 = vmatmul.mubr.f32.gmra.mrb[0].mxu0 %v89
    %v184 = vpop.f32.mrb[0].mxu0
    %v185 = vadd.f32 %v76, %v184
    %v186 = vpop.f32.mrb[0].mxu0
    %187 = vmatprep.mubr.f32.mxu0 0.0
    %188 = vmatmul.mubr.f32.gmra.mrb[0].mxu0 %v92
    %v189 = vpop.f32.mrb[0].mxu0
    %v190 = vadd.f32 %v76, %v189
    %v191 = vpop.f32.mrb[0].mxu0
    %192 = vmatprep.mubr.f32.mxu0 0.0
    %193 = vmatmul.mubr.f32.gmra.mrb[0].mxu0 %v95
    %v194 = vpop.f32.mrb[0].mxu0
    %v195 = vadd.f32 %v76, %v194
    %v196 = vpop.f32.mrb[0].mxu0
    %197 = vmatprep.mubr.f32.mxu0 0.0
    %198 = vmatmul.mubr.f32.gmra.mrb[0].mxu0 %v98
    %v199 = vpop.f32.mrb[0].mxu0
    %v200 = vadd.f32 %v76, %v199
    %v201 = vpop.f32.mrb[0].mxu0
    %202 = vmatprep.mubr.f32.mxu0 0.0
    %203 = vmatmul.mubr.f32.gmra.mrb[0].mxu0 %v101
    %v204 = vpop.f32.mrb[0].mxu0
    %v205 = vadd.f32 %v76, %v204
    %v206 = vpop.f32.mrb[0].mxu0
    %207 = vdwg.mxu0
    %208 = vst [vmem:[#allocation2] sm:$0xff] %v170
    %209 = vst [vmem:[#allocation2 + $0x8] sm:$0xff] %v175
    %210 = vst [vmem:[#allocation2 + $0x10] sm:$0xff] %v180
    %211 = vst [vmem:[#allocation2 + $0x18] sm:$0xff] %v185
    %212 = vst [vmem:[#allocation2 + $0x20] sm:$0xff] %v190
    %213 = vst [vmem:[#allocation2 + $0x28] sm:$0xff] %v195
    %214 = vst [vmem:[#allocation2 + $0x30] sm:$0xff] %v200
    %215 = vst [vmem:[#allocation2 + $0x38] sm:$0xff] %v205
    %v216 = vld [vmem:[#allocation2] sm:$0xff]
    %v217 = vld [vmem:[%s2] sm:$0xff]
    %v218 = vld [vmem:[%s2 + $0x8] sm:$0xff]
    %v219 = vld [vmem:[%s2 + $0x10] sm:$0xff]
    %v220 = vld [vmem:[%s2 + $0x18] sm:$0xff]
    %vm221 = vcmask 261120
    %v223 = vsel %vm221, 0.0, 0
    %225 = vmatprep.subr.mxu0 0.0
    %226 = vmatpush1.msra.mxu0 %v217
    %227 = vmatprep.subr.mxu0 0.0
    %228 = vmatpush1.msra.mxu0 %v218
    %229 = vmatprep.subr.mxu0 0.0
    %230 = vmatpush1.msra.mxu0 %v219
    %231 = vmatprep.subr.mxu0 0.0
    %232 = vmatpush1.msra.mxu0 %v220
    %233 = vmatprep.subr.mxu0 0.0
    %234 = vmatpush1.msra.mxu0 0.0
    %235 = vmatprep.subr.mxu0 0.0
    %236 = vmatpush1.msra.mxu0 0.0
    %237 = vmatprep.subr.mxu0 0.0
    %238 = vmatpush1.msra.mxu0 0.0
    %239 = vmatprep.subr.mxu0 0.0
    %240 = vmatpush1.msra.mxu0 0.0
    %241 = vmatprep.subr.mxu0 0.0
    %242 = vmatpush1.msra.mxu0 0.0
    %243 = vmatprep.subr.mxu0 0.0
    %244 = vmatpush1.msra.mxu0 0.0
    %245 = vmatprep.subr.mxu0 0.0
    %246 = vmatpush1.msra.mxu0 0.0
    %247 = vmatprep.subr.mxu0 0.0
    %248 = vmatpush1.msra.mxu0 0.0
    %249 = vmatprep.subr.mxu0 0.0
    %250 = vmatpush1.msra.mxu0 0.0
    %251 = vmatprep.subr.mxu0 0.0
    %252 = vmatpush1.msra.mxu0 0.0
    %253 = vmatprep.subr.mxu0 0.0
    %254 = vmatpush1.msra.mxu0 0.0
    %255 = vmatprep.subr.mxu0 0.0
    %256 = vmatpush1.msra.mxu0 0.0
    %257 = vmatprep.subr.mxu0 0.0
    %258 = vmatpush1.msra.mxu0 0.0
    %259 = vmatprep.subr.mxu0 0.0
    %260 = vmatpush1.msra.mxu0 0.0
    %261 = vmatprep.subr.mxu0 0.0
    %262 = vmatpush1.msra.mxu0 0.0
    %263 = vmatprep.subr.mxu0 0.0
    %264 = vmatpush1.msra.mxu0 0.0
    %265 = vmatprep.subr.mxu0 0.0
    %266 = vmatpush1.msra.mxu0 0.0
    %267 = vmatprep.subr.mxu0 0.0
    %268 = vmatpush1.msra.mxu0 0.0
    %269 = vmatprep.subr.mxu0 0.0
    %270 = vmatpush1.msra.mxu0 0.0
    %271 = vmatprep.subr.mxu0 0.0
    %272 = vmatpush1.msra.mxu0 0.0
    %273 = vmatprep.subr.mxu0 0.0
    %274 = vmatpush1.msra.mxu0 0.0
    %275 = vmatprep.subr.mxu0 0.0
    %276 = vmatpush1.msra.mxu0 0.0
    %277 = vmatprep.subr.mxu0 0.0
    %278 = vmatpush1.msra.mxu0 0.0
    %279 = vmatprep.subr.mxu0 0.0
    %280 = vmatpush1.msra.mxu0 0.0
    %281 = vmatprep.subr.mxu0 0.0
    %282 = vmatpush1.msra.mxu0 0.0
    %283 = vmatprep.subr.mxu0 0.0
    %284 = vmatpush1.msra.mxu0 0.0
    %285 = vmatprep.subr.mxu0 0.0
    %286 = vmatpush1.msra.mxu0 0.0
    %287 = vmatprep.subr.mxu0 0.0
    %288 = vmatpush1.msra.mxu0 0.0
    %289 = vmatprep.mubr.f32.mxu0 0.0
    %290 = vmatmul.mubr.f32.gmra.mrb[0].mxu0 %v223
    %v291 = vpop.f32.mrb[0].mxu0
    %v292 = vadd.f32 0.0, %v291
    %v293 = vpop.f32.mrb[0].mxu0
    %294 = vdwg.mxu0
    %v295 = vadd.f32 %v216, %v292
    %v296 = vxor.u32 %v295, 2147483648
    %v297 = vmul.f32 %v296, 1.442695
    %v298 = vpow.pop %v297
    %v299 = vadd.f32 %v298, 1.0
    %v300 = vrcp.pop %v299
    %v301 = vmul.f32 1.0, %v300
    %v302 = vmul.f32 %v301, 2.0
    %v303 = vsub.f32 %v302, 1.0
    %v304 = vmul.f32 %v301, 0.0
    %306 = vrot.lane.b32.xlu0 %v303, 64
    %v307 = vpop.permute.xlu0 %306
    %v309 = vmul.f32 %v301, %v307
    %311 = vrot.lane.b32.xlu0 %v309, 32
    %v312 = vpop.permute.xlu0 %311
    %v314 = vadd.f32 %v304, %v312
    %v315 = vtanh.pop %v314
    %317 = vrot.lane.b32.xlu0 %v315, 64
    %v318 = vpop.permute.xlu0 %317
    %v320 = vmul.f32 %v301, %v318
    %v321 = vld [vmem:[#allocation2 + $0x8] sm:$0xff]
    %323 = vrot.lane.b32.xlu0 %v320, 32
    %v324 = vpop.permute.xlu0 %323
    %v325 = vsel %vm221, %v324, 0
    %327 = vmatprep.subr.mxu0 0.0
    %328 = vmatpush1.msra.mxu0 %v217
    %329 = vmatprep.subr.mxu0 0.0
    %330 = vmatpush1.msra.mxu0 %v218
    %331 = vmatprep.subr.mxu0 0.0
    %332 = vmatpush1.msra.mxu0 %v219
    %333 = vmatprep.subr.mxu0 0.0
    %334 = vmatpush1.msra.mxu0 %v220
    %335 = vmatprep.subr.mxu0 0.0
    %336 = vmatpush1.msra.mxu0 0.0
    %337 = vmatprep.subr.mxu0 0.0
    %338 = vmatpush1.msra.mxu0 0.0
    %339 = vmatprep.subr.mxu0 0.0
    %340 = vmatpush1.msra.mxu0 0.0
    %341 = vmatprep.subr.mxu0 0.0
    %342 = vmatpush1.msra.mxu0 0.0
    %343 = vmatprep.subr.mxu0 0.0
    %344 = vmatpush1.msra.mxu0 0.0
    %345 = vmatprep.subr.mxu0 0.0
    %346 = vmatpush1.msra.mxu0 0.0
    %347 = vmatprep.subr.mxu0 0.0
    %348 = vmatpush1.msra.mxu0 0.0
    %349 = vmatprep.subr.mxu0 0.0
    %350 = vmatpush1.msra.mxu0 0.0
    %351 = vmatprep.subr.mxu0 0.0
    %352 = vmatpush1.msra.mxu0 0.0
    %353 = vmatprep.subr.mxu0 0.0
    %354 = vmatpush1.msra.mxu0 0.0
    %355 = vmatprep.subr.mxu0 0.0
    %356 = vmatpush1.msra.mxu0 0.0
    %357 = vmatprep.subr.mxu0 0.0
    %358 = vmatpush1.msra.mxu0 0.0
    %359 = vmatprep.subr.mxu0 0.0
    %360 = vmatpush1.msra.mxu0 0.0
    %361 = vmatprep.subr.mxu0 0.0
    %362 = vmatpush1.msra.mxu0 0.0
    %363 = vmatprep.subr.mxu0 0.0
    %364 = vmatpush1.msra.mxu0 0.0
    %365 = vmatprep.subr.mxu0 0.0
    %366 = vmatpush1.msra.mxu0 0.0
    %367 = vmatprep.subr.mxu0 0.0
    %368 = vmatpush1.msra.mxu0 0.0
    %369 = vmatprep.subr.mxu0 0.0
    %370 = vmatpush1.msra.mxu0 0.0
    %371 = vmatprep.subr.mxu0 0.0
    %372 = vmatpush1.msra.mxu0 0.0
    %373 = vmatprep.subr.mxu0 0.0
    %374 = vmatpush1.msra.mxu0 0.0
    %375 = vmatprep.subr.mxu0 0.0
    %376 = vmatpush1.msra.mxu0 0.0
    %377 = vmatprep.subr.mxu0 0.0
    %378 = vmatpush1.msra.mxu0 0.0
    %379 = vmatprep.subr.mxu0 0.0
    %380 = vmatpush1.msra.mxu0 0.0
    %381 = vmatprep.subr.mxu0 0.0
    %382 = vmatpush1.msra.mxu0 0.0
    %383 = vmatprep.subr.mxu0 0.0
    %384 = vmatpush1.msra.mxu0 0.0
    %385 = vmatprep.subr.mxu0 0.0
    %386 = vmatpush1.msra.mxu0 0.0
    %387 = vmatprep.subr.mxu0 0.0
    %388 = vmatpush1.msra.mxu0 0.0
    %389 = vmatprep.subr.mxu0 0.0
    %390 = vmatpush1.msra.mxu0 0.0
    %391 = vmatprep.mubr.f32.mxu0 0.0
    %392 = vmatmul.mubr.f32.gmra.mrb[0].mxu0 %v325
    %v393 = vpop.f32.mrb[0].mxu0
    %v394 = vadd.f32 0.0, %v393
    %v395 = vpop.f32.mrb[0].mxu0
    %396 = vdwg.mxu0
    %v397 = vadd.f32 %v321, %v394
    %v398 = vxor.u32 %v397, 2147483648
    %v399 = vmul.f32 %v398, 1.442695
    %v400 = vpow.pop %v399
    %v401 = vadd.f32 %v400, 1.0
    %v402 = vrcp.pop %v401
    %v403 = vmul.f32 1.0, %v402
    %v404 = vmul.f32 %v403, 2.0
    %v405 = vsub.f32 %v404, 1.0
    %v406 = vmul.f32 %v403, %v314
    %408 = vrot.lane.b32.xlu0 %v405, 64
    %v409 = vpop.permute.xlu0 %408
    %v411 = vmul.f32 %v403, %v409
    %413 = vrot.lane.b32.xlu0 %v411, 32
    %v414 = vpop.permute.xlu0 %413
    %v416 = vadd.f32 %v406, %v414
    %v417 = vtanh.pop %v416
    %419 = vrot.lane.b32.xlu0 %v417, 64
    %v420 = vpop.permute.xlu0 %419
    %v422 = vmul.f32 %v403, %v420
    %v423 = vld [vmem:[%s4] sm:$0xff]
    %v424 = vld [vmem:[%s4 + $0x8] sm:$0xff]
    %v425 = vld [vmem:[%s4 + $0x10] sm:$0xff]
    %v426 = vld [vmem:[%s4 + $0x18] sm:$0xff]
    %v427 = vld [vmem:[%s6] sm:$0x1]
    %v429 = vlaneseq
    %v430 = vshrl.u32 %v429, 7
    %v431 = vsub.s32 0, %v430
    %v432 = vrot.slane %v427, %v431
    %434 = vmatprep.subr.mxu0 0.0
    %435 = vmatpush1.msra.mxu0 %v423
    %436 = vmatprep.subr.mxu0 0.0
    %437 = vmatpush1.msra.mxu0 %v424
    %438 = vmatprep.subr.mxu0 0.0
    %439 = vmatpush1.msra.mxu0 %v425
    %440 = vmatprep.subr.mxu0 0.0
    %441 = vmatpush1.msra.mxu0 %v426
    %442 = vmatprep.subr.mxu0 0.0
    %443 = vmatpush1.msra.mxu0 0.0
    %444 = vmatprep.subr.mxu0 0.0
    %445 = vmatpush1.msra.mxu0 0.0
    %446 = vmatprep.subr.mxu0 0.0
    %447 = vmatpush1.msra.mxu0 0.0
    %448 = vmatprep.subr.mxu0 0.0
    %449 = vmatpush1.msra.mxu0 0.0
    %450 = vmatprep.subr.mxu0 0.0
    %451 = vmatpush1.msra.mxu0 0.0
    %452 = vmatprep.subr.mxu0 0.0
    %453 = vmatpush1.msra.mxu0 0.0
    %454 = vmatprep.subr.mxu0 0.0
    %455 = vmatpush1.msra.mxu0 0.0
    %456 = vmatprep.subr.mxu0 0.0
    %457 = vmatpush1.msra.mxu0 0.0
    %458 = vmatprep.subr.mxu0 0.0
    %459 = vmatpush1.msra.mxu0 0.0
    %460 = vmatprep.subr.mxu0 0.0
    %461 = vmatpush1.msra.mxu0 0.0
    %462 = vmatprep.subr.mxu0 0.0
    %463 = vmatpush1.msra.mxu0 0.0
    %464 = vmatprep.subr.mxu0 0.0
    %465 = vmatpush1.msra.mxu0 0.0
    %466 = vmatprep.subr.mxu0 0.0
    %467 = vmatpush1.msra.mxu0 0.0
    %468 = vmatprep.subr.mxu0 0.0
    %469 = vmatpush1.msra.mxu0 0.0
    %470 = vmatprep.subr.mxu0 0.0
    %471 = vmatpush1.msra.mxu0 0.0
    %472 = vmatprep.subr.mxu0 0.0
    %473 = vmatpush1.msra.mxu0 0.0
    %474 = vmatprep.subr.mxu0 0.0
    %475 = vmatpush1.msra.mxu0 0.0
    %476 = vmatprep.subr.mxu0 0.0
    %477 = vmatpush1.msra.mxu0 0.0
    %478 = vmatprep.subr.mxu0 0.0
    %479 = vmatpush1.msra.mxu0 0.0
    %480 = vmatprep.subr.mxu0 0.0
    %481 = vmatpush1.msra.mxu0 0.0
    %482 = vmatprep.subr.mxu0 0.0
    %483 = vmatpush1.msra.mxu0 0.0
    %484 = vmatprep.subr.mxu0 0.0
    %485 = vmatpush1.msra.mxu0 0.0
    %486 = vmatprep.subr.mxu0 0.0
    %487 = vmatpush1.msra.mxu0 0.0
    %488 = vmatprep.subr.mxu0 0.0
    %489 = vmatpush1.msra.mxu0 0.0
    %490 = vmatprep.subr.mxu0 0.0
    %491 = vmatpush1.msra.mxu0 0.0
    %492 = vmatprep.subr.mxu0 0.0
    %493 = vmatpush1.msra.mxu0 0.0
    %494 = vmatprep.subr.mxu0 0.0
    %495 = vmatpush1.msra.mxu0 0.0
    %496 = vmatprep.subr.mxu0 0.0
    %497 = vmatpush1.msra.mxu0 0.0
    %498 = vmatprep.mubr.f32.mxu0 0.0
    %499 = vmatmul.mubr.f32.gmra.mrb[0].mxu0 %v325
    %v500 = vpop.f32.mrb[0].mxu0
    %v501 = vadd.f32 %v432, %v500
    %v502 = vpop.f32.mrb[0].mxu0
    %503 = vdwg.mxu0
    %v504 = vld [vmem:[%s5] sm:$0xff]
    %v505 = vld [vmem:[%s5 + $0x8] sm:$0xff]
    %v506 = vld [vmem:[%s5 + $0x10] sm:$0xff]
    %v507 = vld [vmem:[%s5 + $0x18] sm:$0xff]
    %508 = vmatprep.subr.mxu0 0.0
    %509 = vmatpush1.msra.mxu0 %v504
    %510 = vmatprep.subr.mxu0 0.0
    %511 = vmatpush1.msra.mxu0 %v505
    %512 = vmatprep.subr.mxu0 0.0
    %513 = vmatpush1.msra.mxu0 %v506
    %514 = vmatprep.subr.mxu0 0.0
    %515 = vmatpush1.msra.mxu0 %v507
    %516 = vmatprep.subr.mxu0 0.0
    %517 = vmatpush1.msra.mxu0 0.0
    %518 = vmatprep.subr.mxu0 0.0
    %519 = vmatpush1.msra.mxu0 0.0
    %520 = vmatprep.subr.mxu0 0.0
    %521 = vmatpush1.msra.mxu0 0.0
    %522 = vmatprep.subr.mxu0 0.0
    %523 = vmatpush1.msra.mxu0 0.0
    %524 = vmatprep.subr.mxu0 0.0
    %525 = vmatpush1.msra.mxu0 0.0
    %526 = vmatprep.subr.mxu0 0.0
    %527 = vmatpush1.msra.mxu0 0.0
    %528 = vmatprep.subr.mxu0 0.0
    %529 = vmatpush1.msra.mxu0 0.0
    %530 = vmatprep.subr.mxu0 0.0
    %531 = vmatpush1.msra.mxu0 0.0
    %532 = vmatprep.subr.mxu0 0.0
    %533 = vmatpush1.msra.mxu0 0.0
    %534 = vmatprep.subr.mxu0 0.0
    %535 = vmatpush1.msra.mxu0 0.0
    %536 = vmatprep.subr.mxu0 0.0
    %537 = vmatpush1.msra.mxu0 0.0
    %538 = vmatprep.subr.mxu0 0.0
    %539 = vmatpush1.msra.mxu0 0.0
    %540 = vmatprep.subr.mxu0 0.0
    %541 = vmatpush1.msra.mxu0 0.0
    %542 = vmatprep.subr.mxu0 0.0
    %543 = vmatpush1.msra.mxu0 0.0
    %544 = vmatprep.subr.mxu0 0.0
    %545 = vmatpush1.msra.mxu0 0.0
    %546 = vmatprep.subr.mxu0 0.0
    %547 = vmatpush1.msra.mxu0 0.0
    %548 = vmatprep.subr.mxu0 0.0
    %549 = vmatpush1.msra.mxu0 0.0
    %550 = vmatprep.subr.mxu0 0.0
    %551 = vmatpush1.msra.mxu0 0.0
    %552 = vmatprep.subr.mxu0 0.0
    %553 = vmatpush1.msra.mxu0 0.0
    %554 = vmatprep.subr.mxu0 0.0
    %555 = vmatpush1.msra.mxu0 0.0
    %556 = vmatprep.subr.mxu0 0.0
    %557 = vmatpush1.msra.mxu0 0.0
    %558 = vmatprep.subr.mxu0 0.0
    %559 = vmatpush1.msra.mxu0 0.0
    %560 = vmatprep.subr.mxu0 0.0
    %561 = vmatpush1.msra.mxu0 0.0
    %562 = vmatprep.subr.mxu0 0.0
    %563 = vmatpush1.msra.mxu0 0.0
    %564 = vmatprep.subr.mxu0 0.0
    %565 = vmatpush1.msra.mxu0 0.0
    %566 = vmatprep.subr.mxu0 0.0
    %567 = vmatpush1.msra.mxu0 0.0
    %568 = vmatprep.subr.mxu0 0.0
    %569 = vmatpush1.msra.mxu0 0.0
    %570 = vmatprep.subr.mxu0 0.0
    %571 = vmatpush1.msra.mxu0 0.0
    %572 = vmatprep.mubr.f32.mxu0 0.0
    %573 = vmatmul.mubr.f32.gmra.mrb[0].mxu0 %v223
    %v574 = vpop.f32.mrb[0].mxu0
    %v575 = vadd.f32 0.0, %v574
    %v576 = vpop.f32.mrb[0].mxu0
    %577 = vdwg.mxu0
    %v578 = vadd.f32 %v501, %v575
    %v579 = vxor.u32 %v578, 2147483648
    %v580 = vmul.f32 %v579, 1.442695
    %v581 = vpow.pop %v580
    %v582 = vadd.f32 %v581, 1.0
    %v583 = vrcp.pop %v582
    %v584 = vmul.f32 1.0, %v583
    %v585 = vmul.f32 %v584, 2.0
    %v586 = vsub.f32 %v585, 1.0
    %v587 = vmul.f32 %v584, 0.0
    %589 = vrot.lane.b32.xlu0 %v586, 64
    %v590 = vpop.permute.xlu0 %589
    %v592 = vmul.f32 %v584, %v590
    %594 = vrot.lane.b32.xlu0 %v592, 32
    %v595 = vpop.permute.xlu0 %594
    %v597 = vadd.f32 %v587, %v595
    %v598 = vtanh.pop %v597
    %600 = vrot.lane.b32.xlu0 %v598, 64
    %v601 = vpop.permute.xlu0 %600
    %v603 = vmul.f32 %v584, %v601
    %v604 = vld [vmem:[#allocation2 + $0x10] sm:$0xff]
    %606 = vrot.lane.b32.xlu0 %v422, 32
    %v607 = vpop.permute.xlu0 %606
    %v608 = vsel %vm221, %v607, 0
    %610 = vmatprep.subr.mxu0 0.0
    %611 = vmatpush1.msra.mxu0 %v217
    %612 = vmatprep.subr.mxu0 0.0
    %613 = vmatpush1.msra.mxu0 %v218
    %614 = vmatprep.subr.mxu0 0.0
    %615 = vmatpush1.msra.mxu0 %v219
    %616 = vmatprep.subr.mxu0 0.0
    %617 = vmatpush1.msra.mxu0 %v220
    %618 = vmatprep.subr.mxu0 0.0
    %619 = vmatpush1.msra.mxu0 0.0
    %620 = vmatprep.subr.mxu0 0.0
    %621 = vmatpush1.msra.mxu0 0.0
    %622 = vmatprep.subr.mxu0 0.0
    %623 = vmatpush1.msra.mxu0 0.0
    %624 = vmatprep.subr.mxu0 0.0
    %625 = vmatpush1.msra.mxu0 0.0
    %626 = vmatprep.subr.mxu0 0.0
    %627 = vmatpush1.msra.mxu0 0.0
    %628 = vmatprep.subr.mxu0 0.0
    %629 = vmatpush1.msra.mxu0 0.0
    %630 = vmatprep.subr.mxu0 0.0
    %631 = vmatpush1.msra.mxu0 0.0
    %632 = vmatprep.subr.mxu0 0.0
    %633 = vmatpush1.msra.mxu0 0.0
    %634 = vmatprep.subr.mxu0 0.0
    %635 = vmatpush1.msra.mxu0 0.0
    %636 = vmatprep.subr.mxu0 0.0
    %637 = vmatpush1.msra.mxu0 0.0
    %638 = vmatprep.subr.mxu0 0.0
    %639 = vmatpush1.msra.mxu0 0.0
    %640 = vmatprep.subr.mxu0 0.0
    %641 = vmatpush1.msra.mxu0 0.0
    %642 = vmatprep.subr.mxu0 0.0
    %643 = vmatpush1.msra.mxu0 0.0
    %644 = vmatprep.subr.mxu0 0.0
    %645 = vmatpush1.msra.mxu0 0.0
    %646 = vmatprep.subr.mxu0 0.0
    %647 = vmatpush1.msra.mxu0 0.0
    %648 = vmatprep.subr.mxu0 0.0
    %649 = vmatpush1.msra.mxu0 0.0
    %650 = vmatprep.subr.mxu0 0.0
    %651 = vmatpush1.msra.mxu0 0.0
    %652 = vmatprep.subr.mxu0 0.0
    %653 = vmatpush1.msra.mxu0 0.0
    %654 = vmatprep.subr.mxu0 0.0
    %655 = vmatpush1.msra.mxu0 0.0
    %656 = vmatprep.subr.mxu0 0.0
    %657 = vmatpush1.msra.mxu0 0.0
    %658 = vmatprep.subr.mxu0 0.0
    %659 = vmatpush1.msra.mxu0 0.0
    %660 = vmatprep.subr.mxu0 0.0
    %661 = vmatpush1.msra.mxu0 0.0
    %662 = vmatprep.subr.mxu0 0.0
    %663 = vmatpush1.msra.mxu0 0.0
    %664 = vmatprep.subr.mxu0 0.0
    %665 = vmatpush1.msra.mxu0 0.0
    %666 = vmatprep.subr.mxu0 0.0
    %667 = vmatpush1.msra.mxu0 0.0
    %668 = vmatprep.subr.mxu0 0.0
    %669 = vmatpush1.msra.mxu0 0.0
    %670 = vmatprep.subr.mxu0 0.0
    %671 = vmatpush1.msra.mxu0 0.0
    %672 = vmatprep.subr.mxu0 0.0
    %673 = vmatpush1.msra.mxu0 0.0
    %674 = vmatprep.mubr.f32.mxu0 0.0
    %675 = vmatmul.mubr.f32.gmra.mrb[0].mxu0 %v608
    %v676 = vpop.f32.mrb[0].mxu0
    %v677 = vadd.f32 0.0, %v676
    %v678 = vpop.f32.mrb[0].mxu0
    %679 = vdwg.mxu0
    %v680 = vadd.f32 %v604, %v677
    %v681 = vxor.u32 %v680, 2147483648
    %v682 = vmul.f32 %v681, 1.442695
    %v683 = vpow.pop %v682
    %v684 = vadd.f32 %v683, 1.0
    %v685 = vrcp.pop %v684
    %v686 = vmul.f32 1.0, %v685
    %v687 = vmul.f32 %v686, 2.0
    %v688 = vsub.f32 %v687, 1.0
    %v689 = vmul.f32 %v686, %v416
    %691 = vrot.lane.b32.xlu0 %v688, 64
    %v692 = vpop.permute.xlu0 %691
    %v694 = vmul.f32 %v686, %v692
    %696 = vrot.lane.b32.xlu0 %v694, 32
    %v697 = vpop.permute.xlu0 %696
    %v699 = vadd.f32 %v689, %v697
    %v700 = vtanh.pop %v699
    %702 = vrot.lane.b32.xlu0 %v700, 64
    %v703 = vpop.permute.xlu0 %702
    %v705 = vmul.f32 %v686, %v703
    %706 = vmatprep.subr.mxu0 0.0
    %707 = vmatpush1.msra.mxu0 %v423
    %708 = vmatprep.subr.mxu0 0.0
    %709 = vmatpush1.msra.mxu0 %v424
    %710 = vmatprep.subr.mxu0 0.0
    %711 = vmatpush1.msra.mxu0 %v425
    %712 = vmatprep.subr.mxu0 0.0
    %713 = vmatpush1.msra.mxu0 %v426
    %714 = vmatprep.subr.mxu0 0.0
    %715 = vmatpush1.msra.mxu0 0.0
    %716 = vmatprep.subr.mxu0 0.0
    %717 = vmatpush1.msra.mxu0 0.0
    %718 = vmatprep.subr.mxu0 0.0
    %719 = vmatpush1.msra.mxu0 0.0
    %720 = vmatprep.subr.mxu0 0.0
    %721 = vmatpush1.msra.mxu0 0.0
    %722 = vmatprep.subr.mxu0 0.0
    %723 = vmatpush1.msra.mxu0 0.0
    %724 = vmatprep.subr.mxu0 0.0
    %725 = vmatpush1.msra.mxu0 0.0
    %726 = vmatprep.subr.mxu0 0.0
    %727 = vmatpush1.msra.mxu0 0.0
    %728 = vmatprep.subr.mxu0 0.0
    %729 = vmatpush1.msra.mxu0 0.0
    %730 = vmatprep.subr.mxu0 0.0
    %731 = vmatpush1.msra.mxu0 0.0
    %732 = vmatprep.subr.mxu0 0.0
    %733 = vmatpush1.msra.mxu0 0.0
    %734 = vmatprep.subr.mxu0 0.0
    %735 = vmatpush1.msra.mxu0 0.0
    %736 = vmatprep.subr.mxu0 0.0
    %737 = vmatpush1.msra.mxu0 0.0
    %738 = vmatprep.subr.mxu0 0.0
    %739 = vmatpush1.msra.mxu0 0.0
    %740 = vmatprep.subr.mxu0 0.0
    %741 = vmatpush1.msra.mxu0 0.0
    %742 = vmatprep.subr.mxu0 0.0
    %743 = vmatpush1.msra.mxu0 0.0
    %744 = vmatprep.subr.mxu0 0.0
    %745 = vmatpush1.msra.mxu0 0.0
    %746 = vmatprep.subr.mxu0 0.0
    %747 = vmatpush1.msra.mxu0 0.0
    %748 = vmatprep.subr.mxu0 0.0
    %749 = vmatpush1.msra.mxu0 0.0
    %750 = vmatprep.subr.mxu0 0.0
    %751 = vmatpush1.msra.mxu0 0.0
    %752 = vmatprep.subr.mxu0 0.0
    %753 = vmatpush1.msra.mxu0 0.0
    %754 = vmatprep.subr.mxu0 0.0
    %755 = vmatpush1.msra.mxu0 0.0
    %756 = vmatprep.subr.mxu0 0.0
    %757 = vmatpush1.msra.mxu0 0.0
    %758 = vmatprep.subr.mxu0 0.0
    %759 = vmatpush1.msra.mxu0 0.0
    %760 = vmatprep.subr.mxu0 0.0
    %761 = vmatpush1.msra.mxu0 0.0
    %762 = vmatprep.subr.mxu0 0.0
    %763 = vmatpush1.msra.mxu0 0.0
    %764 = vmatprep.subr.mxu0 0.0
    %765 = vmatpush1.msra.mxu0 0.0
    %766 = vmatprep.subr.mxu0 0.0
    %767 = vmatpush1.msra.mxu0 0.0
    %768 = vmatprep.subr.mxu0 0.0
    %769 = vmatpush1.msra.mxu0 0.0
    %770 = vmatprep.mubr.f32.mxu0 0.0
    %771 = vmatmul.mubr.f32.gmra.mrb[0].mxu0 %v608
    %v772 = vpop.f32.mrb[0].mxu0
    %v773 = vadd.f32 %v432, %v772
    %v774 = vpop.f32.mrb[0].mxu0
    %775 = vdwg.mxu0
    %777 = vrot.lane.b32.xlu0 %v603, 32
    %v778 = vpop.permute.xlu0 %777
    %v779 = vsel %vm221, %v778, 0
    %781 = vmatprep.subr.mxu0 0.0
    %782 = vmatpush1.msra.mxu0 %v504
    %783 = vmatprep.subr.mxu0 0.0
    %784 = vmatpush1.msra.mxu0 %v505
    %785 = vmatprep.subr.mxu0 0.0
    %786 = vmatpush1.msra.mxu0 %v506
    %787 = vmatprep.subr.mxu0 0.0
    %788 = vmatpush1.msra.mxu0 %v507
    %789 = vmatprep.subr.mxu0 0.0
    %790 = vmatpush1.msra.mxu0 0.0
    %791 = vmatprep.subr.mxu0 0.0
    %792 = vmatpush1.msra.mxu0 0.0
    %793 = vmatprep.subr.mxu0 0.0
    %794 = vmatpush1.msra.mxu0 0.0
    %795 = vmatprep.subr.mxu0 0.0
    %796 = vmatpush1.msra.mxu0 0.0
    %797 = vmatprep.subr.mxu0 0.0
    %798 = vmatpush1.msra.mxu0 0.0
    %799 = vmatprep.subr.mxu0 0.0
    %800 = vmatpush1.msra.mxu0 0.0
    %801 = vmatprep.subr.mxu0 0.0
    %802 = vmatpush1.msra.mxu0 0.0
    %803 = vmatprep.subr.mxu0 0.0
    %804 = vmatpush1.msra.mxu0 0.0
    %805 = vmatprep.subr.mxu0 0.0
    %806 = vmatpush1.msra.mxu0 0.0
    %807 = vmatprep.subr.mxu0 0.0
    %808 = vmatpush1.msra.mxu0 0.0
    %809 = vmatprep.subr.mxu0 0.0
    %810 = vmatpush1.msra.mxu0 0.0
    %811 = vmatprep.subr.mxu0 0.0
    %812 = vmatpush1.msra.mxu0 0.0
    %813 = vmatprep.subr.mxu0 0.0
    %814 = vmatpush1.msra.mxu0 0.0
    %815 = vmatprep.subr.mxu0 0.0
    %816 = vmatpush1.msra.mxu0 0.0
    %817 = vmatprep.subr.mxu0 0.0
    %818 = vmatpush1.msra.mxu0 0.0
    %819 = vmatprep.subr.mxu0 0.0
    %820 = vmatpush1.msra.mxu0 0.0
    %821 = vmatprep.subr.mxu0 0.0
    %822 = vmatpush1.msra.mxu0 0.0
    %823 = vmatprep.subr.mxu0 0.0
    %824 = vmatpush1.msra.mxu0 0.0
    %825 = vmatprep.subr.mxu0 0.0
    %826 = vmatpush1.msra.mxu0 0.0
    %827 = vmatprep.subr.mxu0 0.0
    %828 = vmatpush1.msra.mxu0 0.0
    %829 = vmatprep.subr.mxu0 0.0
    %830 = vmatpush1.msra.mxu0 0.0
    %831 = vmatprep.subr.mxu0 0.0
    %832 = vmatpush1.msra.mxu0 0.0
    %833 = vmatprep.subr.mxu0 0.0
    %834 = vmatpush1.msra.mxu0 0.0
    %835 = vmatprep.subr.mxu0 0.0
    %836 = vmatpush1.msra.mxu0 0.0
    %837 = vmatprep.subr.mxu0 0.0
    %838 = vmatpush1.msra.mxu0 0.0
    %839 = vmatprep.subr.mxu0 0.0
    %840 = vmatpush1.msra.mxu0 0.0
    %841 = vmatprep.subr.mxu0 0.0
    %842 = vmatpush1.msra.mxu0 0.0
    %843 = vmatprep.subr.mxu0 0.0
    %844 = vmatpush1.msra.mxu0 0.0
    %845 = vmatprep.mubr.f32.mxu0 0.0
    %846 = vmatmul.mubr.f32.gmra.mrb[0].mxu0 %v779
    %v847 = vpop.f32.mrb[0].mxu0
    %v848 = vadd.f32 0.0, %v847
    %v849 = vpop.f32.mrb[0].mxu0
    %850 = vdwg.mxu0
    %v851 = vadd.f32 %v773, %v848
    %v852 = vxor.u32 %v851, 2147483648
    %v853 = vmul.f32 %v852, 1.442695
    %v854 = vpow.pop %v853
    %v855 = vadd.f32 %v854, 1.0
    %v856 = vrcp.pop %v855
    %v857 = vmul.f32 1.0, %v856
    %v858 = vmul.f32 %v857, 2.0
    %v859 = vsub.f32 %v858, 1.0
    %v860 = vmul.f32 %v857, %v597
    %862 = vrot.lane.b32.xlu0 %v859, 64
    %v863 = vpop.permute.xlu0 %862
    %v865 = vmul.f32 %v857, %v863
    %867 = vrot.lane.b32.xlu0 %v865, 32
    %v868 = vpop.permute.xlu0 %867
    %v870 = vadd.f32 %v860, %v868
    %v871 = vtanh.pop %v870
    %873 = vrot.lane.b32.xlu0 %v871, 64
    %v874 = vpop.permute.xlu0 %873
    %v876 = vmul.f32 %v857, %v874
    %v877 = vld [vmem:[#allocation2 + $0x18] sm:$0xff]
    %879 = vrot.lane.b32.xlu0 %v705, 32
    %v880 = vpop.permute.xlu0 %879
    %v881 = vsel %vm221, %v880, 0
    %883 = vmatprep.subr.mxu0 0.0
    %884 = vmatpush1.msra.mxu0 %v217
    %885 = vmatprep.subr.mxu0 0.0
    %886 = vmatpush1.msra.mxu0 %v218
    %887 = vmatprep.subr.mxu0 0.0
    %888 = vmatpush1.msra.mxu0 %v219
    %889 = vmatprep.subr.mxu0 0.0
    %890 = vmatpush1.msra.mxu0 %v220
    %891 = vmatprep.subr.mxu0 0.0
    %892 = vmatpush1.msra.mxu0 0.0
    %893 = vmatprep.subr.mxu0 0.0
    %894 = vmatpush1.msra.mxu0 0.0
    %895 = vmatprep.subr.mxu0 0.0
    %896 = vmatpush1.msra.mxu0 0.0
    %897 = vmatprep.subr.mxu0 0.0
    %898 = vmatpush1.msra.mxu0 0.0
    %899 = vmatprep.subr.mxu0 0.0
    %900 = vmatpush1.msra.mxu0 0.0
    %901 = vmatprep.subr.mxu0 0.0
    %902 = vmatpush1.msra.mxu0 0.0
    %903 = vmatprep.subr.mxu0 0.0
    %904 = vmatpush1.msra.mxu0 0.0
    %905 = vmatprep.subr.mxu0 0.0
    %906 = vmatpush1.msra.mxu0 0.0
    %907 = vmatprep.subr.mxu0 0.0
    %908 = vmatpush1.msra.mxu0 0.0
    %909 = vmatprep.subr.mxu0 0.0
    %910 = vmatpush1.msra.mxu0 0.0
    %911 = vmatprep.subr.mxu0 0.0
    %912 = vmatpush1.msra.mxu0 0.0
    %913 = vmatprep.subr.mxu0 0.0
    %914 = vmatpush1.msra.mxu0 0.0
    %915 = vmatprep.subr.mxu0 0.0
    %916 = vmatpush1.msra.mxu0 0.0
    %917 = vmatprep.subr.mxu0 0.0
    %918 = vmatpush1.msra.mxu0 0.0
    %919 = vmatprep.subr.mxu0 0.0
    %920 = vmatpush1.msra.mxu0 0.0
    %921 = vmatprep.subr.mxu0 0.0
    %922 = vmatpush1.msra.mxu0 0.0
    %923 = vmatprep.subr.mxu0 0.0
    %924 = vmatpush1.msra.mxu0 0.0
    %925 = vmatprep.subr.mxu0 0.0
    %926 = vmatpush1.msra.mxu0 0.0
    %927 = vmatprep.subr.mxu0 0.0
    %928 = vmatpush1.msra.mxu0 0.0
    %929 = vmatprep.subr.mxu0 0.0
    %930 = vmatpush1.msra.mxu0 0.0
    %931 = vmatprep.subr.mxu0 0.0
    %932 = vmatpush1.msra.mxu0 0.0
    %933 = vmatprep.subr.mxu0 0.0
    %934 = vmatpush1.msra.mxu0 0.0
    %935 = vmatprep.subr.mxu0 0.0
    %936 = vmatpush1.msra.mxu0 0.0
    %937 = vmatprep.subr.mxu0 0.0
    %938 = vmatpush1.msra.mxu0 0.0
    %939 = vmatprep.subr.mxu0 0.0
    %940 = vmatpush1.msra.mxu0 0.0
    %941 = vmatprep.subr.mxu0 0.0
    %942 = vmatpush1.msra.mxu0 0.0
    %943 = vmatprep.subr.mxu0 0.0
    %944 = vmatpush1.msra.mxu0 0.0
    %945 = vmatprep.subr.mxu0 0.0
    %946 = vmatpush1.msra.mxu0 0.0
    %947 = vmatprep.mubr.f32.mxu0 0.0
    %948 = vmatmul.mubr.f32.gmra.mrb[0].mxu0 %v881
    %v949 = vpop.f32.mrb[0].mxu0
    %v950 = vadd.f32 0.0, %v949
    %v951 = vpop.f32.mrb[0].mxu0
    %952 = vdwg.mxu0
    %v953 = vadd.f32 %v877, %v950
    %v954 = vxor.u32 %v953, 2147483648
    %v955 = vmul.f32 %v954, 1.442695
    %v956 = vpow.pop %v955
    %v957 = vadd.f32 %v956, 1.0
    %v958 = vrcp.pop %v957
    %v959 = vmul.f32 1.0, %v958
    %v960 = vmul.f32 %v959, 2.0
    %v961 = vsub.f32 %v960, 1.0
    %v962 = vmul.f32 %v959, %v699
    %964 = vrot.lane.b32.xlu0 %v961, 64
    %v965 = vpop.permute.xlu0 %964
    %v967 = vmul.f32 %v959, %v965
    %969 = vrot.lane.b32.xlu0 %v967, 32
    %v970 = vpop.permute.xlu0 %969
    %v972 = vadd.f32 %v962, %v970
    %v973 = vtanh.pop %v972
    %975 = vrot.lane.b32.xlu0 %v973, 64
    %v976 = vpop.permute.xlu0 %975
    %v978 = vmul.f32 %v959, %v976
    %979 = vmatprep.subr.mxu0 0.0
    %980 = vmatpush1.msra.mxu0 %v423
    %981 = vmatprep.subr.mxu0 0.0
    %982 = vmatpush1.msra.mxu0 %v424
    %983 = vmatprep.subr.mxu0 0.0
    %984 = vmatpush1.msra.mxu0 %v425
    %985 = vmatprep.subr.mxu0 0.0
    %986 = vmatpush1.msra.mxu0 %v426
    %987 = vmatprep.subr.mxu0 0.0
    %988 = vmatpush1.msra.mxu0 0.0
    %989 = vmatprep.subr.mxu0 0.0
    %990 = vmatpush1.msra.mxu0 0.0
    %991 = vmatprep.subr.mxu0 0.0
    %992 = vmatpush1.msra.mxu0 0.0
    %993 = vmatprep.subr.mxu0 0.0
    %994 = vmatpush1.msra.mxu0 0.0
    %995 = vmatprep.subr.mxu0 0.0
    %996 = vmatpush1.msra.mxu0 0.0
    %997 = vmatprep.subr.mxu0 0.0
    %998 = vmatpush1.msra.mxu0 0.0
    %999 = vmatprep.subr.mxu0 0.0
    %1000 = vmatpush1.msra.mxu0 0.0
    %1001 = vmatprep.subr.mxu0 0.0
    %1002 = vmatpush1.msra.mxu0 0.0
    %1003 = vmatprep.subr.mxu0 0.0
    %1004 = vmatpush1.msra.mxu0 0.0
    %1005 = vmatprep.subr.mxu0 0.0
    %1006 = vmatpush1.msra.mxu0 0.0
    %1007 = vmatprep.subr.mxu0 0.0
    %1008 = vmatpush1.msra.mxu0 0.0
    %1009 = vmatprep.subr.mxu0 0.0
    %1010 = vmatpush1.msra.mxu0 0.0
    %1011 = vmatprep.subr.mxu0 0.0
    %1012 = vmatpush1.msra.mxu0 0.0
    %1013 = vmatprep.subr.mxu0 0.0
    %1014 = vmatpush1.msra.mxu0 0.0
    %1015 = vmatprep.subr.mxu0 0.0
    %1016 = vmatpush1.msra.mxu0 0.0
    %1017 = vmatprep.subr.mxu0 0.0
    %1018 = vmatpush1.msra.mxu0 0.0
    %1019 = vmatprep.subr.mxu0 0.0
    %1020 = vmatpush1.msra.mxu0 0.0
    %1021 = vmatprep.subr.mxu0 0.0
    %1022 = vmatpush1.msra.mxu0 0.0
    %1023 = vmatprep.subr.mxu0 0.0
    %1024 = vmatpush1.msra.mxu0 0.0
    %1025 = vmatprep.subr.mxu0 0.0
    %1026 = vmatpush1.msra.mxu0 0.0
    %1027 = vmatprep.subr.mxu0 0.0
    %1028 = vmatpush1.msra.mxu0 0.0
    %1029 = vmatprep.subr.mxu0 0.0
    %1030 = vmatpush1.msra.mxu0 0.0
    %1031 = vmatprep.subr.mxu0 0.0
    %1032 = vmatpush1.msra.mxu0 0.0
    %1033 = vmatprep.subr.mxu0 0.0
    %1034 = vmatpush1.msra.mxu0 0.0
    %1035 = vmatprep.subr.mxu0 0.0
    %1036 = vmatpush1.msra.mxu0 0.0
    %1037 = vmatprep.subr.mxu0 0.0
    %1038 = vmatpush1.msra.mxu0 0.0
    %1039 = vmatprep.subr.mxu0 0.0
    %1040 = vmatpush1.msra.mxu0 0.0
    %1041 = vmatprep.subr.mxu0 0.0
    %1042 = vmatpush1.msra.mxu0 0.0
    %1043 = vmatprep.mubr.f32.mxu0 0.0
    %1044 = vmatmul.mubr.f32.gmra.mrb[0].mxu0 %v881
    %v1045 = vpop.f32.mrb[0].mxu0
    %v1046 = vadd.f32 %v432, %v1045
    %v1047 = vpop.f32.mrb[0].mxu0
    %1048 = vdwg.mxu0
    %1050 = vrot.lane.b32.xlu0 %v876, 32
    %v1051 = vpop.permute.xlu0 %1050
    %v1052 = vsel %vm221, %v1051, 0
    %1054 = vmatprep.subr.mxu0 0.0
    %1055 = vmatpush1.msra.mxu0 %v504
    %1056 = vmatprep.subr.mxu0 0.0
    %1057 = vmatpush1.msra.mxu0 %v505
    %1058 = vmatprep.subr.mxu0 0.0
    %1059 = vmatpush1.msra.mxu0 %v506
    %1060 = vmatprep.subr.mxu0 0.0
    %1061 = vmatpush1.msra.mxu0 %v507
    %1062 = vmatprep.subr.mxu0 0.0
    %1063 = vmatpush1.msra.mxu0 0.0
    %1064 = vmatprep.subr.mxu0 0.0
    %1065 = vmatpush1.msra.mxu0 0.0
    %1066 = vmatprep.subr.mxu0 0.0
    %1067 = vmatpush1.msra.mxu0 0.0
    %1068 = vmatprep.subr.mxu0 0.0
    %1069 = vmatpush1.msra.mxu0 0.0
    %1070 = vmatprep.subr.mxu0 0.0
    %1071 = vmatpush1.msra.mxu0 0.0
    %1072 = vmatprep.subr.mxu0 0.0
    %1073 = vmatpush1.msra.mxu0 0.0
    %1074 = vmatprep.subr.mxu0 0.0
    %1075 = vmatpush1.msra.mxu0 0.0
    %1076 = vmatprep.subr.mxu0 0.0
    %1077 = vmatpush1.msra.mxu0 0.0
    %1078 = vmatprep.subr.mxu0 0.0
    %1079 = vmatpush1.msra.mxu0 0.0
    %1080 = vmatprep.subr.mxu0 0.0
    %1081 = vmatpush1.msra.mxu0 0.0
    %1082 = vmatprep.subr.mxu0 0.0
    %1083 = vmatpush1.msra.mxu0 0.0
    %1084 = vmatprep.subr.mxu0 0.0
    %1085 = vmatpush1.msra.mxu0 0.0
    %1086 = vmatprep.subr.mxu0 0.0
    %1087 = vmatpush1.msra.mxu0 0.0
    %1088 = vmatprep.subr.mxu0 0.0
    %1089 = vmatpush1.msra.mxu0 0.0
    %1090 = vmatprep.subr.mxu0 0.0
    %1091 = vmatpush1.msra.mxu0 0.0
    %1092 = vmatprep.subr.mxu0 0.0
    %1093 = vmatpush1.msra.mxu0 0.0
    %1094 = vmatprep.subr.mxu0 0.0
    %1095 = vmatpush1.msra.mxu0 0.0
    %1096 = vmatprep.subr.mxu0 0.0
    %1097 = vmatpush1.msra.mxu0 0.0
    %1098 = vmatprep.subr.mxu0 0.0
    %1099 = vmatpush1.msra.mxu0 0.0
    %1100 = vmatprep.subr.mxu0 0.0
    %1101 = vmatpush1.msra.mxu0 0.0
    %1102 = vmatprep.subr.mxu0 0.0
    %1103 = vmatpush1.msra.mxu0 0.0
    %1104 = vmatprep.subr.mxu0 0.0
    %1105 = vmatpush1.msra.mxu0 0.0
    %1106 = vmatprep.subr.mxu0 0.0
    %1107 = vmatpush1.msra.mxu0 0.0
    %1108 = vmatprep.subr.mxu0 0.0
    %1109 = vmatpush1.msra.mxu0 0.0
    %1110 = vmatprep.subr.mxu0 0.0
    %1111 = vmatpush1.msra.mxu0 0.0
    %1112 = vmatprep.subr.mxu0 0.0
    %1113 = vmatpush1.msra.mxu0 0.0
    %1114 = vmatprep.subr.mxu0 0.0
    %1115 = vmatpush1.msra.mxu0 0.0
    %1116 = vmatprep.subr.mxu0 0.0
    %1117 = vmatpush1.msra.mxu0 0.0
    %1118 = vmatprep.mubr.f32.mxu0 0.0
    %1119 = vmatmul.mubr.f32.gmra.mrb[0].mxu0 %v1052
    %v1120 = vpop.f32.mrb[0].mxu0
    %v1121 = vadd.f32 0.0, %v1120
    %v1122 = vpop.f32.mrb[0].mxu0
    %1123 = vdwg.mxu0
    %v1124 = vadd.f32 %v1046, %v1121
    %v1125 = vxor.u32 %v1124, 2147483648
    %v1126 = vmul.f32 %v1125, 1.442695
    %v1127 = vpow.pop %v1126
    %v1128 = vadd.f32 %v1127, 1.0
    %v1129 = vrcp.pop %v1128
    %v1130 = vmul.f32 1.0, %v1129
    %v1131 = vmul.f32 %v1130, 2.0
    %v1132 = vsub.f32 %v1131, 1.0
    %v1133 = vmul.f32 %v1130, %v870
    %1135 = vrot.lane.b32.xlu0 %v1132, 64
    %v1136 = vpop.permute.xlu0 %1135
    %v1138 = vmul.f32 %v1130, %v1136
    %1140 = vrot.lane.b32.xlu0 %v1138, 32
    %v1141 = vpop.permute.xlu0 %1140
    %v1143 = vadd.f32 %v1133, %v1141
    %v1144 = vtanh.pop %v1143
    %1146 = vrot.lane.b32.xlu0 %v1144, 64
    %v1147 = vpop.permute.xlu0 %1146
    %v1149 = vmul.f32 %v1130, %v1147
    %v1150 = vld [vmem:[#allocation2 + $0x20] sm:$0xff]
    %1152 = vrot.lane.b32.xlu0 %v978, 32
    %v1153 = vpop.permute.xlu0 %1152
    %v1154 = vsel %vm221, %v1153, 0
    %1156 = vmatprep.subr.mxu0 0.0
    %1157 = vmatpush1.msra.mxu0 %v217
    %1158 = vmatprep.subr.mxu0 0.0
    %1159 = vmatpush1.msra.mxu0 %v218
    %1160 = vmatprep.subr.mxu0 0.0
    %1161 = vmatpush1.msra.mxu0 %v219
    %1162 = vmatprep.subr.mxu0 0.0
    %1163 = vmatpush1.msra.mxu0 %v220
    %1164 = vmatprep.subr.mxu0 0.0
    %1165 = vmatpush1.msra.mxu0 0.0
    %1166 = vmatprep.subr.mxu0 0.0
    %1167 = vmatpush1.msra.mxu0 0.0
    %1168 = vmatprep.subr.mxu0 0.0
    %1169 = vmatpush1.msra.mxu0 0.0
    %1170 = vmatprep.subr.mxu0 0.0
    %1171 = vmatpush1.msra.mxu0 0.0
    %1172 = vmatprep.subr.mxu0 0.0
    %1173 = vmatpush1.msra.mxu0 0.0
    %1174 = vmatprep.subr.mxu0 0.0
    %1175 = vmatpush1.msra.mxu0 0.0
    %1176 = vmatprep.subr.mxu0 0.0
    %1177 = vmatpush1.msra.mxu0 0.0
    %1178 = vmatprep.subr.mxu0 0.0
    %1179 = vmatpush1.msra.mxu0 0.0
    %1180 = vmatprep.subr.mxu0 0.0
    %1181 = vmatpush1.msra.mxu0 0.0
    %1182 = vmatprep.subr.mxu0 0.0
    %1183 = vmatpush1.msra.mxu0 0.0
    %1184 = vmatprep.subr.mxu0 0.0
    %1185 = vmatpush1.msra.mxu0 0.0
    %1186 = vmatprep.subr.mxu0 0.0
    %1187 = vmatpush1.msra.mxu0 0.0
    %1188 = vmatprep.subr.mxu0 0.0
    %1189 = vmatpush1.msra.mxu0 0.0
    %1190 = vmatprep.subr.mxu0 0.0
    %1191 = vmatpush1.msra.mxu0 0.0
    %1192 = vmatprep.subr.mxu0 0.0
    %1193 = vmatpush1.msra.mxu0 0.0
    %1194 = vmatprep.subr.mxu0 0.0
    %1195 = vmatpush1.msra.mxu0 0.0
    %1196 = vmatprep.subr.mxu0 0.0
    %1197 = vmatpush1.msra.mxu0 0.0
    %1198 = vmatprep.subr.mxu0 0.0
    %1199 = vmatpush1.msra.mxu0 0.0
    %1200 = vmatprep.subr.mxu0 0.0
    %1201 = vmatpush1.msra.mxu0 0.0
    %1202 = vmatprep.subr.mxu0 0.0
    %1203 = vmatpush1.msra.mxu0 0.0
    %1204 = vmatprep.subr.mxu0 0.0
    %1205 = vmatpush1.msra.mxu0 0.0
    %1206 = vmatprep.subr.mxu0 0.0
    %1207 = vmatpush1.msra.mxu0 0.0
    %1208 = vmatprep.subr.mxu0 0.0
    %1209 = vmatpush1.msra.mxu0 0.0
    %1210 = vmatprep.subr.mxu0 0.0
    %1211 = vmatpush1.msra.mxu0 0.0
    %1212 = vmatprep.subr.mxu0 0.0
    %1213 = vmatpush1.msra.mxu0 0.0
    %1214 = vmatprep.subr.mxu0 0.0
    %1215 = vmatpush1.msra.mxu0 0.0
    %1216 = vmatprep.subr.mxu0 0.0
    %1217 = vmatpush1.msra.mxu0 0.0
    %1218 = vmatprep.subr.mxu0 0.0
    %1219 = vmatpush1.msra.mxu0 0.0
    %1220 = vmatprep.mubr.f32.mxu0 0.0
    %1221 = vmatmul.mubr.f32.gmra.mrb[0].mxu0 %v1154
    %v1222 = vpop.f32.mrb[0].mxu0
    %v1223 = vadd.f32 0.0, %v1222
    %v1224 = vpop.f32.mrb[0].mxu0
    %1225 = vdwg.mxu0
    %v1226 = vadd.f32 %v1150, %v1223
    %v1227 = vxor.u32 %v1226, 2147483648
    %v1228 = vmul.f32 %v1227, 1.442695
    %v1229 = vpow.pop %v1228
    %v1230 = vadd.f32 %v1229, 1.0
    %v1231 = vrcp.pop %v1230
    %v1232 = vmul.f32 1.0, %v1231
    %v1233 = vmul.f32 %v1232, 2.0
    %v1234 = vsub.f32 %v1233, 1.0
    %v1235 = vmul.f32 %v1232, %v972
    %1237 = vrot.lane.b32.xlu0 %v1234, 64
    %v1238 = vpop.permute.xlu0 %1237
    %v1240 = vmul.f32 %v1232, %v1238
    %1242 = vrot.lane.b32.xlu0 %v1240, 32
    %v1243 = vpop.permute.xlu0 %1242
    %v1245 = vadd.f32 %v1235, %v1243
    %v1246 = vtanh.pop %v1245
    %1248 = vrot.lane.b32.xlu0 %v1246, 64
    %v1249 = vpop.permute.xlu0 %1248
    %v1251 = vmul.f32 %v1232, %v1249
    %1252 = vmatprep.subr.mxu0 0.0
    %1253 = vmatpush1.msra.mxu0 %v423
    %1254 = vmatprep.subr.mxu0 0.0
    %1255 = vmatpush1.msra.mxu0 %v424
    %1256 = vmatprep.subr.mxu0 0.0
    %1257 = vmatpush1.msra.mxu0 %v425
    %1258 = vmatprep.subr.mxu0 0.0
    %1259 = vmatpush1.msra.mxu0 %v426
    %1260 = vmatprep.subr.mxu0 0.0
    %1261 = vmatpush1.msra.mxu0 0.0
    %1262 = vmatprep.subr.mxu0 0.0
    %1263 = vmatpush1.msra.mxu0 0.0
    %1264 = vmatprep.subr.mxu0 0.0
    %1265 = vmatpush1.msra.mxu0 0.0
    %1266 = vmatprep.subr.mxu0 0.0
    %1267 = vmatpush1.msra.mxu0 0.0
    %1268 = vmatprep.subr.mxu0 0.0
    %1269 = vmatpush1.msra.mxu0 0.0
    %1270 = vmatprep.subr.mxu0 0.0
    %1271 = vmatpush1.msra.mxu0 0.0
    %1272 = vmatprep.subr.mxu0 0.0
    %1273 = vmatpush1.msra.mxu0 0.0
    %1274 = vmatprep.subr.mxu0 0.0
    %1275 = vmatpush1.msra.mxu0 0.0
    %1276 = vmatprep.subr.mxu0 0.0
    %1277 = vmatpush1.msra.mxu0 0.0
    %1278 = vmatprep.subr.mxu0 0.0
    %1279 = vmatpush1.msra.mxu0 0.0
    %1280 = vmatprep.subr.mxu0 0.0
    %1281 = vmatpush1.msra.mxu0 0.0
    %1282 = vmatprep.subr.mxu0 0.0
    %1283 = vmatpush1.msra.mxu0 0.0
    %1284 = vmatprep.subr.mxu0 0.0
    %1285 = vmatpush1.msra.mxu0 0.0
    %1286 = vmatprep.subr.mxu0 0.0
    %1287 = vmatpush1.msra.mxu0 0.0
    %1288 = vmatprep.subr.mxu0 0.0
    %1289 = vmatpush1.msra.mxu0 0.0
    %1290 = vmatprep.subr.mxu0 0.0
    %1291 = vmatpush1.msra.mxu0 0.0
    %1292 = vmatprep.subr.mxu0 0.0
    %1293 = vmatpush1.msra.mxu0 0.0
    %1294 = vmatprep.subr.mxu0 0.0
    %1295 = vmatpush1.msra.mxu0 0.0
    %1296 = vmatprep.subr.mxu0 0.0
    %1297 = vmatpush1.msra.mxu0 0.0
    %1298 = vmatprep.subr.mxu0 0.0
    %1299 = vmatpush1.msra.mxu0 0.0
    %1300 = vmatprep.subr.mxu0 0.0
    %1301 = vmatpush1.msra.mxu0 0.0
    %1302 = vmatprep.subr.mxu0 0.0
    %1303 = vmatpush1.msra.mxu0 0.0
    %1304 = vmatprep.subr.mxu0 0.0
    %1305 = vmatpush1.msra.mxu0 0.0
    %1306 = vmatprep.subr.mxu0 0.0
    %1307 = vmatpush1.msra.mxu0 0.0
    %1308 = vmatprep.subr.mxu0 0.0
    %1309 = vmatpush1.msra.mxu0 0.0
    %1310 = vmatprep.subr.mxu0 0.0
    %1311 = vmatpush1.msra.mxu0 0.0
    %1312 = vmatprep.subr.mxu0 0.0
    %1313 = vmatpush1.msra.mxu0 0.0
    %1314 = vmatprep.subr.mxu0 0.0
    %1315 = vmatpush1.msra.mxu0 0.0
    %1316 = vmatprep.mubr.f32.mxu0 0.0
    %1317 = vmatmul.mubr.f32.gmra.mrb[0].mxu0 %v1154
    %v1318 = vpop.f32.mrb[0].mxu0
    %v1319 = vadd.f32 %v432, %v1318
    %v1320 = vpop.f32.mrb[0].mxu0
    %1321 = vdwg.mxu0
    %1323 = vrot.lane.b32.xlu0 %v1149, 32
    %v1324 = vpop.permute.xlu0 %1323
    %v1325 = vsel %vm221, %v1324, 0
    %1327 = vmatprep.subr.mxu0 0.0
    %1328 = vmatpush1.msra.mxu0 %v504
    %1329 = vmatprep.subr.mxu0 0.0
    %1330 = vmatpush1.msra.mxu0 %v505
    %1331 = vmatprep.subr.mxu0 0.0
    %1332 = vmatpush1.msra.mxu0 %v506
    %1333 = vmatprep.subr.mxu0 0.0
    %1334 = vmatpush1.msra.mxu0 %v507
    %1335 = vmatprep.subr.mxu0 0.0
    %1336 = vmatpush1.msra.mxu0 0.0
    %1337 = vmatprep.subr.mxu0 0.0
    %1338 = vmatpush1.msra.mxu0 0.0
    %1339 = vmatprep.subr.mxu0 0.0
    %1340 = vmatpush1.msra.mxu0 0.0
    %1341 = vmatprep.subr.mxu0 0.0
    %1342 = vmatpush1.msra.mxu0 0.0
    %1343 = vmatprep.subr.mxu0 0.0
    %1344 = vmatpush1.msra.mxu0 0.0
    %1345 = vmatprep.subr.mxu0 0.0
    %1346 = vmatpush1.msra.mxu0 0.0
    %1347 = vmatprep.subr.mxu0 0.0
    %1348 = vmatpush1.msra.mxu0 0.0
    %1349 = vmatprep.subr.mxu0 0.0
    %1350 = vmatpush1.msra.mxu0 0.0
    %1351 = vmatprep.subr.mxu0 0.0
    %1352 = vmatpush1.msra.mxu0 0.0
    %1353 = vmatprep.subr.mxu0 0.0
    %1354 = vmatpush1.msra.mxu0 0.0
    %1355 = vmatprep.subr.mxu0 0.0
    %1356 = vmatpush1.msra.mxu0 0.0
    %1357 = vmatprep.subr.mxu0 0.0
    %1358 = vmatpush1.msra.mxu0 0.0
    %1359 = vmatprep.subr.mxu0 0.0
    %1360 = vmatpush1.msra.mxu0 0.0
    %1361 = vmatprep.subr.mxu0 0.0
    %1362 = vmatpush1.msra.mxu0 0.0
    %1363 = vmatprep.subr.mxu0 0.0
    %1364 = vmatpush1.msra.mxu0 0.0
    %1365 = vmatprep.subr.mxu0 0.0
    %1366 = vmatpush1.msra.mxu0 0.0
    %1367 = vmatprep.subr.mxu0 0.0
    %1368 = vmatpush1.msra.mxu0 0.0
    %1369 = vmatprep.subr.mxu0 0.0
    %1370 = vmatpush1.msra.mxu0 0.0
    %1371 = vmatprep.subr.mxu0 0.0
    %1372 = vmatpush1.msra.mxu0 0.0
    %1373 = vmatprep.subr.mxu0 0.0
    %1374 = vmatpush1.msra.mxu0 0.0
    %1375 = vmatprep.subr.mxu0 0.0
    %1376 = vmatpush1.msra.mxu0 0.0
    %1377 = vmatprep.subr.mxu0 0.0
    %1378 = vmatpush1.msra.mxu0 0.0
    %1379 = vmatprep.subr.mxu0 0.0
    %1380 = vmatpush1.msra.mxu0 0.0
    %1381 = vmatprep.subr.mxu0 0.0
    %1382 = vmatpush1.msra.mxu0 0.0
    %1383 = vmatprep.subr.mxu0 0.0
    %1384 = vmatpush1.msra.mxu0 0.0
    %1385 = vmatprep.subr.mxu0 0.0
    %1386 = vmatpush1.msra.mxu0 0.0
    %1387 = vmatprep.subr.mxu0 0.0
    %1388 = vmatpush1.msra.mxu0 0.0
    %1389 = vmatprep.subr.mxu0 0.0
    %1390 = vmatpush1.msra.mxu0 0.0
    %1391 = vmatprep.mubr.f32.mxu0 0.0
    %1392 = vmatmul.mubr.f32.gmra.mrb[0].mxu0 %v1325
    %v1393 = vpop.f32.mrb[0].mxu0
    %v1394 = vadd.f32 0.0, %v1393
    %v1395 = vpop.f32.mrb[0].mxu0
    %1396 = vdwg.mxu0
    %v1397 = vadd.f32 %v1319, %v1394
    %v1398 = vxor.u32 %v1397, 2147483648
    %v1399 = vmul.f32 %v1398, 1.442695
    %v1400 = vpow.pop %v1399
    %v1401 = vadd.f32 %v1400, 1.0
    %v1402 = vrcp.pop %v1401
    %v1403 = vmul.f32 1.0, %v1402
    %v1404 = vmul.f32 %v1403, 2.0
    %v1405 = vsub.f32 %v1404, 1.0
    %v1406 = vmul.f32 %v1403, %v1143
    %1408 = vrot.lane.b32.xlu0 %v1405, 64
    %v1409 = vpop.permute.xlu0 %1408
    %v1411 = vmul.f32 %v1403, %v1409
    %1413 = vrot.lane.b32.xlu0 %v1411, 32
    %v1414 = vpop.permute.xlu0 %1413
    %v1416 = vadd.f32 %v1406, %v1414
    %v1417 = vtanh.pop %v1416
    %1419 = vrot.lane.b32.xlu0 %v1417, 64
    %v1420 = vpop.permute.xlu0 %1419
    %v1422 = vmul.f32 %v1403, %v1420
    %v1423 = vld [vmem:[#allocation2 + $0x28] sm:$0xff]
    %1425 = vrot.lane.b32.xlu0 %v1251, 32
    %v1426 = vpop.permute.xlu0 %1425
    %v1427 = vsel %vm221, %v1426, 0
    %1429 = vmatprep.subr.mxu0 0.0
    %1430 = vmatpush1.msra.mxu0 %v217
    %1431 = vmatprep.subr.mxu0 0.0
    %1432 = vmatpush1.msra.mxu0 %v218
    %1433 = vmatprep.subr.mxu0 0.0
    %1434 = vmatpush1.msra.mxu0 %v219
    %1435 = vmatprep.subr.mxu0 0.0
    %1436 = vmatpush1.msra.mxu0 %v220
    %1437 = vmatprep.subr.mxu0 0.0
    %1438 = vmatpush1.msra.mxu0 0.0
    %1439 = vmatprep.subr.mxu0 0.0
    %1440 = vmatpush1.msra.mxu0 0.0
    %1441 = vmatprep.subr.mxu0 0.0
    %1442 = vmatpush1.msra.mxu0 0.0
    %1443 = vmatprep.subr.mxu0 0.0
    %1444 = vmatpush1.msra.mxu0 0.0
    %1445 = vmatprep.subr.mxu0 0.0
    %1446 = vmatpush1.msra.mxu0 0.0
    %1447 = vmatprep.subr.mxu0 0.0
    %1448 = vmatpush1.msra.mxu0 0.0
    %1449 = vmatprep.subr.mxu0 0.0
    %1450 = vmatpush1.msra.mxu0 0.0
    %1451 = vmatprep.subr.mxu0 0.0
    %1452 = vmatpush1.msra.mxu0 0.0
    %1453 = vmatprep.subr.mxu0 0.0
    %1454 = vmatpush1.msra.mxu0 0.0
    %1455 = vmatprep.subr.mxu0 0.0
    %1456 = vmatpush1.msra.mxu0 0.0
    %1457 = vmatprep.subr.mxu0 0.0
    %1458 = vmatpush1.msra.mxu0 0.0
    %1459 = vmatprep.subr.mxu0 0.0
    %1460 = vmatpush1.msra.mxu0 0.0
    %1461 = vmatprep.subr.mxu0 0.0
    %1462 = vmatpush1.msra.mxu0 0.0
    %1463 = vmatprep.subr.mxu0 0.0
    %1464 = vmatpush1.msra.mxu0 0.0
    %1465 = vmatprep.subr.mxu0 0.0
    %1466 = vmatpush1.msra.mxu0 0.0
    %1467 = vmatprep.subr.mxu0 0.0
    %1468 = vmatpush1.msra.mxu0 0.0
    %1469 = vmatprep.subr.mxu0 0.0
    %1470 = vmatpush1.msra.mxu0 0.0
    %1471 = vmatprep.subr.mxu0 0.0
    %1472 = vmatpush1.msra.mxu0 0.0
    %1473 = vmatprep.subr.mxu0 0.0
    %1474 = vmatpush1.msra.mxu0 0.0
    %1475 = vmatprep.subr.mxu0 0.0
    %1476 = vmatpush1.msra.mxu0 0.0
    %1477 = vmatprep.subr.mxu0 0.0
    %1478 = vmatpush1.msra.mxu0 0.0
    %1479 = vmatprep.subr.mxu0 0.0
    %1480 = vmatpush1.msra.mxu0 0.0
    %1481 = vmatprep.subr.mxu0 0.0
    %1482 = vmatpush1.msra.mxu0 0.0
    %1483 = vmatprep.subr.mxu0 0.0
    %1484 = vmatpush1.msra.mxu0 0.0
    %1485 = vmatprep.subr.mxu0 0.0
    %1486 = vmatpush1.msra.mxu0 0.0
    %1487 = vmatprep.subr.mxu0 0.0
    %1488 = vmatpush1.msra.mxu0 0.0
    %1489 = vmatprep.subr.mxu0 0.0
    %1490 = vmatpush1.msra.mxu0 0.0
    %1491 = vmatprep.subr.mxu0 0.0
    %1492 = vmatpush1.msra.mxu0 0.0
    %1493 = vmatprep.mubr.f32.mxu0 0.0
    %1494 = vmatmul.mubr.f32.gmra.mrb[0].mxu0 %v1427
    %v1495 = vpop.f32.mrb[0].mxu0
    %v1496 = vadd.f32 0.0, %v1495
    %v1497 = vpop.f32.mrb[0].mxu0
    %1498 = vdwg.mxu0
    %v1499 = vadd.f32 %v1423, %v1496
    %v1500 = vxor.u32 %v1499, 2147483648
    %v1501 = vmul.f32 %v1500, 1.442695
    %v1502 = vpow.pop %v1501
    %v1503 = vadd.f32 %v1502, 1.0
    %v1504 = vrcp.pop %v1503
    %v1505 = vmul.f32 1.0, %v1504
    %v1506 = vmul.f32 %v1505, 2.0
    %v1507 = vsub.f32 %v1506, 1.0
    %v1508 = vmul.f32 %v1505, %v1245
    %1510 = vrot.lane.b32.xlu0 %v1507, 64
    %v1511 = vpop.permute.xlu0 %1510
    %v1513 = vmul.f32 %v1505, %v1511
    %1515 = vrot.lane.b32.xlu0 %v1513, 32
    %v1516 = vpop.permute.xlu0 %1515
    %v1518 = vadd.f32 %v1508, %v1516
    %v1519 = vtanh.pop %v1518
    %1521 = vrot.lane.b32.xlu0 %v1519, 64
    %v1522 = vpop.permute.xlu0 %1521
    %v1524 = vmul.f32 %v1505, %v1522
    %1525 = vmatprep.subr.mxu0 0.0
    %1526 = vmatpush1.msra.mxu0 %v423
    %1527 = vmatprep.subr.mxu0 0.0
    %1528 = vmatpush1.msra.mxu0 %v424
    %1529 = vmatprep.subr.mxu0 0.0
    %1530 = vmatpush1.msra.mxu0 %v425
    %1531 = vmatprep.subr.mxu0 0.0
    %1532 = vmatpush1.msra.mxu0 %v426
    %1533 = vmatprep.subr.mxu0 0.0
    %1534 = vmatpush1.msra.mxu0 0.0
    %1535 = vmatprep.subr.mxu0 0.0
    %1536 = vmatpush1.msra.mxu0 0.0
    %1537 = vmatprep.subr.mxu0 0.0
    %1538 = vmatpush1.msra.mxu0 0.0
    %1539 = vmatprep.subr.mxu0 0.0
    %1540 = vmatpush1.msra.mxu0 0.0
    %1541 = vmatprep.subr.mxu0 0.0
    %1542 = vmatpush1.msra.mxu0 0.0
    %1543 = vmatprep.subr.mxu0 0.0
    %1544 = vmatpush1.msra.mxu0 0.0
    %1545 = vmatprep.subr.mxu0 0.0
    %1546 = vmatpush1.msra.mxu0 0.0
    %1547 = vmatprep.subr.mxu0 0.0
    %1548 = vmatpush1.msra.mxu0 0.0
    %1549 = vmatprep.subr.mxu0 0.0
    %1550 = vmatpush1.msra.mxu0 0.0
    %1551 = vmatprep.subr.mxu0 0.0
    %1552 = vmatpush1.msra.mxu0 0.0
    %1553 = vmatprep.subr.mxu0 0.0
    %1554 = vmatpush1.msra.mxu0 0.0
    %1555 = vmatprep.subr.mxu0 0.0
    %1556 = vmatpush1.msra.mxu0 0.0
    %1557 = vmatprep.subr.mxu0 0.0
    %1558 = vmatpush1.msra.mxu0 0.0
    %1559 = vmatprep.subr.mxu0 0.0
    %1560 = vmatpush1.msra.mxu0 0.0
    %1561 = vmatprep.subr.mxu0 0.0
    %1562 = vmatpush1.msra.mxu0 0.0
    %1563 = vmatprep.subr.mxu0 0.0
    %1564 = vmatpush1.msra.mxu0 0.0
    %1565 = vmatprep.subr.mxu0 0.0
    %1566 = vmatpush1.msra.mxu0 0.0
    %1567 = vmatprep.subr.mxu0 0.0
    %1568 = vmatpush1.msra.mxu0 0.0
    %1569 = vmatprep.subr.mxu0 0.0
    %1570 = vmatpush1.msra.mxu0 0.0
    %1571 = vmatprep.subr.mxu0 0.0
    %1572 = vmatpush1.msra.mxu0 0.0
    %1573 = vmatprep.subr.mxu0 0.0
    %1574 = vmatpush1.msra.mxu0 0.0
    %1575 = vmatprep.subr.mxu0 0.0
    %1576 = vmatpush1.msra.mxu0 0.0
    %1577 = vmatprep.subr.mxu0 0.0
    %1578 = vmatpush1.msra.mxu0 0.0
    %1579 = vmatprep.subr.mxu0 0.0
    %1580 = vmatpush1.msra.mxu0 0.0
    %1581 = vmatprep.subr.mxu0 0.0
    %1582 = vmatpush1.msra.mxu0 0.0
    %1583 = vmatprep.subr.mxu0 0.0
    %1584 = vmatpush1.msra.mxu0 0.0
    %1585 = vmatprep.subr.mxu0 0.0
    %1586 = vmatpush1.msra.mxu0 0.0
    %1587 = vmatprep.subr.mxu0 0.0
    %1588 = vmatpush1.msra.mxu0 0.0
    %1589 = vmatprep.mubr.f32.mxu0 0.0
    %1590 = vmatmul.mubr.f32.gmra.mrb[0].mxu0 %v1427
    %v1591 = vpop.f32.mrb[0].mxu0
    %v1592 = vadd.f32 %v432, %v1591
    %v1593 = vpop.f32.mrb[0].mxu0
    %1594 = vdwg.mxu0
    %1596 = vrot.lane.b32.xlu0 %v1422, 32
    %v1597 = vpop.permute.xlu0 %1596
    %v1598 = vsel %vm221, %v1597, 0
    %1600 = vmatprep.subr.mxu0 0.0
    %1601 = vmatpush1.msra.mxu0 %v504
    %1602 = vmatprep.subr.mxu0 0.0
    %1603 = vmatpush1.msra.mxu0 %v505
    %1604 = vmatprep.subr.mxu0 0.0
    %1605 = vmatpush1.msra.mxu0 %v506
    %1606 = vmatprep.subr.mxu0 0.0
    %1607 = vmatpush1.msra.mxu0 %v507
    %1608 = vmatprep.subr.mxu0 0.0
    %1609 = vmatpush1.msra.mxu0 0.0
    %1610 = vmatprep.subr.mxu0 0.0
    %1611 = vmatpush1.msra.mxu0 0.0
    %1612 = vmatprep.subr.mxu0 0.0
    %1613 = vmatpush1.msra.mxu0 0.0
    %1614 = vmatprep.subr.mxu0 0.0
    %1615 = vmatpush1.msra.mxu0 0.0
    %1616 = vmatprep.subr.mxu0 0.0
    %1617 = vmatpush1.msra.mxu0 0.0
    %1618 = vmatprep.subr.mxu0 0.0
    %1619 = vmatpush1.msra.mxu0 0.0
    %1620 = vmatprep.subr.mxu0 0.0
    %1621 = vmatpush1.msra.mxu0 0.0
    %1622 = vmatprep.subr.mxu0 0.0
    %1623 = vmatpush1.msra.mxu0 0.0
    %1624 = vmatprep.subr.mxu0 0.0
    %1625 = vmatpush1.msra.mxu0 0.0
    %1626 = vmatprep.subr.mxu0 0.0
    %1627 = vmatpush1.msra.mxu0 0.0
    %1628 = vmatprep.subr.mxu0 0.0
    %1629 = vmatpush1.msra.mxu0 0.0
    %1630 = vmatprep.subr.mxu0 0.0
    %1631 = vmatpush1.msra.mxu0 0.0
    %1632 = vmatprep.subr.mxu0 0.0
    %1633 = vmatpush1.msra.mxu0 0.0
    %1634 = vmatprep.subr.mxu0 0.0
    %1635 = vmatpush1.msra.mxu0 0.0
    %1636 = vmatprep.subr.mxu0 0.0
    %1637 = vmatpush1.msra.mxu0 0.0
    %1638 = vmatprep.subr.mxu0 0.0
    %1639 = vmatpush1.msra.mxu0 0.0
    %1640 = vmatprep.subr.mxu0 0.0
    %1641 = vmatpush1.msra.mxu0 0.0
    %1642 = vmatprep.subr.mxu0 0.0
    %1643 = vmatpush1.msra.mxu0 0.0
    %1644 = vmatprep.subr.mxu0 0.0
    %1645 = vmatpush1.msra.mxu0 0.0
    %1646 = vmatprep.subr.mxu0 0.0
    %1647 = vmatpush1.msra.mxu0 0.0
    %1648 = vmatprep.subr.mxu0 0.0
    %1649 = vmatpush1.msra.mxu0 0.0
    %1650 = vmatprep.subr.mxu0 0.0
    %1651 = vmatpush1.msra.mxu0 0.0
    %1652 = vmatprep.subr.mxu0 0.0
    %1653 = vmatpush1.msra.mxu0 0.0
    %1654 = vmatprep.subr.mxu0 0.0
    %1655 = vmatpush1.msra.mxu0 0.0
    %1656 = vmatprep.subr.mxu0 0.0
    %1657 = vmatpush1.msra.mxu0 0.0
    %1658 = vmatprep.subr.mxu0 0.0
    %1659 = vmatpush1.msra.mxu0 0.0
    %1660 = vmatprep.subr.mxu0 0.0
    %1661 = vmatpush1.msra.mxu0 0.0
    %1662 = vmatprep.subr.mxu0 0.0
    %1663 = vmatpush1.msra.mxu0 0.0
    %1664 = vmatprep.mubr.f32.mxu0 0.0
    %1665 = vmatmul.mubr.f32.gmra.mrb[0].mxu0 %v1598
    %v1666 = vpop.f32.mrb[0].mxu0
    %v1667 = vadd.f32 0.0, %v1666
    %v1668 = vpop.f32.mrb[0].mxu0
    %1669 = vdwg.mxu0
    %v1670 = vadd.f32 %v1592, %v1667
    %v1671 = vxor.u32 %v1670, 2147483648
    %v1672 = vmul.f32 %v1671, 1.442695
    %v1673 = vpow.pop %v1672
    %v1674 = vadd.f32 %v1673, 1.0
    %v1675 = vrcp.pop %v1674
    %v1676 = vmul.f32 1.0, %v1675
    %v1677 = vmul.f32 %v1676, 2.0
    %v1678 = vsub.f32 %v1677, 1.0
    %v1679 = vmul.f32 %v1676, %v1416
    %1681 = vrot.lane.b32.xlu0 %v1678, 64
    %v1682 = vpop.permute.xlu0 %1681
    %v1684 = vmul.f32 %v1676, %v1682
    %1686 = vrot.lane.b32.xlu0 %v1684, 32
    %v1687 = vpop.permute.xlu0 %1686
    %v1689 = vadd.f32 %v1679, %v1687
    %v1690 = vtanh.pop %v1689
    %1692 = vrot.lane.b32.xlu0 %v1690, 64
    %v1693 = vpop.permute.xlu0 %1692
    %v1695 = vmul.f32 %v1676, %v1693
    %v1696 = vld [vmem:[#allocation2 + $0x30] sm:$0xff]
    %1698 = vrot.lane.b32.xlu0 %v1524, 32
    %v1699 = vpop.permute.xlu0 %1698
    %v1700 = vsel %vm221, %v1699, 0
    %1702 = vmatprep.subr.mxu0 0.0
    %1703 = vmatpush1.msra.mxu0 %v217
    %1704 = vmatprep.subr.mxu0 0.0
    %1705 = vmatpush1.msra.mxu0 %v218
    %1706 = vmatprep.subr.mxu0 0.0
    %1707 = vmatpush1.msra.mxu0 %v219
    %1708 = vmatprep.subr.mxu0 0.0
    %1709 = vmatpush1.msra.mxu0 %v220
    %1710 = vmatprep.subr.mxu0 0.0
    %1711 = vmatpush1.msra.mxu0 0.0
    %1712 = vmatprep.subr.mxu0 0.0
    %1713 = vmatpush1.msra.mxu0 0.0
    %1714 = vmatprep.subr.mxu0 0.0
    %1715 = vmatpush1.msra.mxu0 0.0
    %1716 = vmatprep.subr.mxu0 0.0
    %1717 = vmatpush1.msra.mxu0 0.0
    %1718 = vmatprep.subr.mxu0 0.0
    %1719 = vmatpush1.msra.mxu0 0.0
    %1720 = vmatprep.subr.mxu0 0.0
    %1721 = vmatpush1.msra.mxu0 0.0
    %1722 = vmatprep.subr.mxu0 0.0
    %1723 = vmatpush1.msra.mxu0 0.0
    %1724 = vmatprep.subr.mxu0 0.0
    %1725 = vmatpush1.msra.mxu0 0.0
    %1726 = vmatprep.subr.mxu0 0.0
    %1727 = vmatpush1.msra.mxu0 0.0
    %1728 = vmatprep.subr.mxu0 0.0
    %1729 = vmatpush1.msra.mxu0 0.0
    %1730 = vmatprep.subr.mxu0 0.0
    %1731 = vmatpush1.msra.mxu0 0.0
    %1732 = vmatprep.subr.mxu0 0.0
    %1733 = vmatpush1.msra.mxu0 0.0
    %1734 = vmatprep.subr.mxu0 0.0
    %1735 = vmatpush1.msra.mxu0 0.0
    %1736 = vmatprep.subr.mxu0 0.0
    %1737 = vmatpush1.msra.mxu0 0.0
    %1738 = vmatprep.subr.mxu0 0.0
    %1739 = vmatpush1.msra.mxu0 0.0
    %1740 = vmatprep.subr.mxu0 0.0
    %1741 = vmatpush1.msra.mxu0 0.0
    %1742 = vmatprep.subr.mxu0 0.0
    %1743 = vmatpush1.msra.mxu0 0.0
    %1744 = vmatprep.subr.mxu0 0.0
    %1745 = vmatpush1.msra.mxu0 0.0
    %1746 = vmatprep.subr.mxu0 0.0
    %1747 = vmatpush1.msra.mxu0 0.0
    %1748 = vmatprep.subr.mxu0 0.0
    %1749 = vmatpush1.msra.mxu0 0.0
    %1750 = vmatprep.subr.mxu0 0.0
    %1751 = vmatpush1.msra.mxu0 0.0
    %1752 = vmatprep.subr.mxu0 0.0
    %1753 = vmatpush1.msra.mxu0 0.0
    %1754 = vmatprep.subr.mxu0 0.0
    %1755 = vmatpush1.msra.mxu0 0.0
    %1756 = vmatprep.subr.mxu0 0.0
    %1757 = vmatpush1.msra.mxu0 0.0
    %1758 = vmatprep.subr.mxu0 0.0
    %1759 = vmatpush1.msra.mxu0 0.0
    %1760 = vmatprep.subr.mxu0 0.0
    %1761 = vmatpush1.msra.mxu0 0.0
    %1762 = vmatprep.subr.mxu0 0.0
    %1763 = vmatpush1.msra.mxu0 0.0
    %1764 = vmatprep.subr.mxu0 0.0
    %1765 = vmatpush1.msra.mxu0 0.0
    %1766 = vmatprep.mubr.f32.mxu0 0.0
    %1767 = vmatmul.mubr.f32.gmra.mrb[0].mxu0 %v1700
    %v1768 = vpop.f32.mrb[0].mxu0
    %v1769 = vadd.f32 0.0, %v1768
    %v1770 = vpop.f32.mrb[0].mxu0
    %1771 = vdwg.mxu0
    %v1772 = vadd.f32 %v1696, %v1769
    %v1773 = vxor.u32 %v1772, 2147483648
    %v1774 = vmul.f32 %v1773, 1.442695
    %v1775 = vpow.pop %v1774
    %v1776 = vadd.f32 %v1775, 1.0
    %v1777 = vrcp.pop %v1776
    %v1778 = vmul.f32 1.0, %v1777
    %v1779 = vmul.f32 %v1778, 2.0
    %v1780 = vsub.f32 %v1779, 1.0
    %v1781 = vmul.f32 %v1778, %v1518
    %1783 = vrot.lane.b32.xlu0 %v1780, 64
    %v1784 = vpop.permute.xlu0 %1783
    %v1786 = vmul.f32 %v1778, %v1784
    %1788 = vrot.lane.b32.xlu0 %v1786, 32
    %v1789 = vpop.permute.xlu0 %1788
    %v1791 = vadd.f32 %v1781, %v1789
    %v1792 = vtanh.pop %v1791
    %1794 = vrot.lane.b32.xlu0 %v1792, 64
    %v1795 = vpop.permute.xlu0 %1794
    %v1797 = vmul.f32 %v1778, %v1795
    %1798 = vmatprep.subr.mxu0 0.0
    %1799 = vmatpush1.msra.mxu0 %v423
    %1800 = vmatprep.subr.mxu0 0.0
    %1801 = vmatpush1.msra.mxu0 %v424
    %1802 = vmatprep.subr.mxu0 0.0
    %1803 = vmatpush1.msra.mxu0 %v425
    %1804 = vmatprep.subr.mxu0 0.0
    %1805 = vmatpush1.msra.mxu0 %v426
    %1806 = vmatprep.subr.mxu0 0.0
    %1807 = vmatpush1.msra.mxu0 0.0
    %1808 = vmatprep.subr.mxu0 0.0
    %1809 = vmatpush1.msra.mxu0 0.0
    %1810 = vmatprep.subr.mxu0 0.0
    %1811 = vmatpush1.msra.mxu0 0.0
    %1812 = vmatprep.subr.mxu0 0.0
    %1813 = vmatpush1.msra.mxu0 0.0
    %1814 = vmatprep.subr.mxu0 0.0
    %1815 = vmatpush1.msra.mxu0 0.0
    %1816 = vmatprep.subr.mxu0 0.0
    %1817 = vmatpush1.msra.mxu0 0.0
    %1818 = vmatprep.subr.mxu0 0.0
    %1819 = vmatpush1.msra.mxu0 0.0
    %1820 = vmatprep.subr.mxu0 0.0
    %1821 = vmatpush1.msra.mxu0 0.0
    %1822 = vmatprep.subr.mxu0 0.0
    %1823 = vmatpush1.msra.mxu0 0.0
    %1824 = vmatprep.subr.mxu0 0.0
    %1825 = vmatpush1.msra.mxu0 0.0
    %1826 = vmatprep.subr.mxu0 0.0
    %1827 = vmatpush1.msra.mxu0 0.0
    %1828 = vmatprep.subr.mxu0 0.0
    %1829 = vmatpush1.msra.mxu0 0.0
    %1830 = vmatprep.subr.mxu0 0.0
    %1831 = vmatpush1.msra.mxu0 0.0
    %1832 = vmatprep.subr.mxu0 0.0
    %1833 = vmatpush1.msra.mxu0 0.0
    %1834 = vmatprep.subr.mxu0 0.0
    %1835 = vmatpush1.msra.mxu0 0.0
    %1836 = vmatprep.subr.mxu0 0.0
    %1837 = vmatpush1.msra.mxu0 0.0
    %1838 = vmatprep.subr.mxu0 0.0
    %1839 = vmatpush1.msra.mxu0 0.0
    %1840 = vmatprep.subr.mxu0 0.0
    %1841 = vmatpush1.msra.mxu0 0.0
    %1842 = vmatprep.subr.mxu0 0.0
    %1843 = vmatpush1.msra.mxu0 0.0
    %1844 = vmatprep.subr.mxu0 0.0
    %1845 = vmatpush1.msra.mxu0 0.0
    %1846 = vmatprep.subr.mxu0 0.0
    %1847 = vmatpush1.msra.mxu0 0.0
    %1848 = vmatprep.subr.mxu0 0.0
    %1849 = vmatpush1.msra.mxu0 0.0
    %1850 = vmatprep.subr.mxu0 0.0
    %1851 = vmatpush1.msra.mxu0 0.0
    %1852 = vmatprep.subr.mxu0 0.0
    %1853 = vmatpush1.msra.mxu0 0.0
    %1854 = vmatprep.subr.mxu0 0.0
    %1855 = vmatpush1.msra.mxu0 0.0
    %1856 = vmatprep.subr.mxu0 0.0
    %1857 = vmatpush1.msra.mxu0 0.0
    %1858 = vmatprep.subr.mxu0 0.0
    %1859 = vmatpush1.msra.mxu0 0.0
    %1860 = vmatprep.subr.mxu0 0.0
    %1861 = vmatpush1.msra.mxu0 0.0
    %1862 = vmatprep.mubr.f32.mxu0 0.0
    %1863 = vmatmul.mubr.f32.gmra.mrb[0].mxu0 %v1700
    %v1864 = vpop.f32.mrb[0].mxu0
    %v1865 = vadd.f32 %v432, %v1864
    %v1866 = vpop.f32.mrb[0].mxu0
    %1867 = vdwg.mxu0
    %1869 = vrot.lane.b32.xlu0 %v1695, 32
    %v1870 = vpop.permute.xlu0 %1869
    %v1871 = vsel %vm221, %v1870, 0
    %1873 = vmatprep.subr.mxu0 0.0
    %1874 = vmatpush1.msra.mxu0 %v504
    %1875 = vmatprep.subr.mxu0 0.0
    %1876 = vmatpush1.msra.mxu0 %v505
    %1877 = vmatprep.subr.mxu0 0.0
    %1878 = vmatpush1.msra.mxu0 %v506
    %1879 = vmatprep.subr.mxu0 0.0
    %1880 = vmatpush1.msra.mxu0 %v507
    %1881 = vmatprep.subr.mxu0 0.0
    %1882 = vmatpush1.msra.mxu0 0.0
    %1883 = vmatprep.subr.mxu0 0.0
    %1884 = vmatpush1.msra.mxu0 0.0
    %1885 = vmatprep.subr.mxu0 0.0
    %1886 = vmatpush1.msra.mxu0 0.0
    %1887 = vmatprep.subr.mxu0 0.0
    %1888 = vmatpush1.msra.mxu0 0.0
    %1889 = vmatprep.subr.mxu0 0.0
    %1890 = vmatpush1.msra.mxu0 0.0
    %1891 = vmatprep.subr.mxu0 0.0
    %1892 = vmatpush1.msra.mxu0 0.0
    %1893 = vmatprep.subr.mxu0 0.0
    %1894 = vmatpush1.msra.mxu0 0.0
    %1895 = vmatprep.subr.mxu0 0.0
    %1896 = vmatpush1.msra.mxu0 0.0
    %1897 = vmatprep.subr.mxu0 0.0
    %1898 = vmatpush1.msra.mxu0 0.0
    %1899 = vmatprep.subr.mxu0 0.0
    %1900 = vmatpush1.msra.mxu0 0.0
    %1901 = vmatprep.subr.mxu0 0.0
    %1902 = vmatpush1.msra.mxu0 0.0
    %1903 = vmatprep.subr.mxu0 0.0
    %1904 = vmatpush1.msra.mxu0 0.0
    %1905 = vmatprep.subr.mxu0 0.0
    %1906 = vmatpush1.msra.mxu0 0.0
    %1907 = vmatprep.subr.mxu0 0.0
    %1908 = vmatpush1.msra.mxu0 0.0
    %1909 = vmatprep.subr.mxu0 0.0
    %1910 = vmatpush1.msra.mxu0 0.0
    %1911 = vmatprep.subr.mxu0 0.0
    %1912 = vmatpush1.msra.mxu0 0.0
    %1913 = vmatprep.subr.mxu0 0.0
    %1914 = vmatpush1.msra.mxu0 0.0
    %1915 = vmatprep.subr.mxu0 0.0
    %1916 = vmatpush1.msra.mxu0 0.0
    %1917 = vmatprep.subr.mxu0 0.0
    %1918 = vmatpush1.msra.mxu0 0.0
    %1919 = vmatprep.subr.mxu0 0.0
    %1920 = vmatpush1.msra.mxu0 0.0
    %1921 = vmatprep.subr.mxu0 0.0
    %1922 = vmatpush1.msra.mxu0 0.0
    %1923 = vmatprep.subr.mxu0 0.0
    %1924 = vmatpush1.msra.mxu0 0.0
    %1925 = vmatprep.subr.mxu0 0.0
    %1926 = vmatpush1.msra.mxu0 0.0
    %1927 = vmatprep.subr.mxu0 0.0
    %1928 = vmatpush1.msra.mxu0 0.0
    %1929 = vmatprep.subr.mxu0 0.0
    %1930 = vmatpush1.msra.mxu0 0.0
    %1931 = vmatprep.subr.mxu0 0.0
    %1932 = vmatpush1.msra.mxu0 0.0
    %1933 = vmatprep.subr.mxu0 0.0
    %1934 = vmatpush1.msra.mxu0 0.0
    %1935 = vmatprep.subr.mxu0 0.0
    %1936 = vmatpush1.msra.mxu0 0.0
    %1937 = vmatprep.mubr.f32.mxu0 0.0
    %1938 = vmatmul.mubr.f32.gmra.mrb[0].mxu0 %v1871
    %v1939 = vpop.f32.mrb[0].mxu0
    %v1940 = vadd.f32 0.0, %v1939
    %v1941 = vpop.f32.mrb[0].mxu0
    %1942 = vdwg.mxu0
    %v1943 = vadd.f32 %v1865, %v1940
    %v1944 = vxor.u32 %v1943, 2147483648
    %v1945 = vmul.f32 %v1944, 1.442695
    %v1946 = vpow.pop %v1945
    %v1947 = vadd.f32 %v1946, 1.0
    %v1948 = vrcp.pop %v1947
    %v1949 = vmul.f32 1.0, %v1948
    %v1950 = vmul.f32 %v1949, 2.0
    %v1951 = vsub.f32 %v1950, 1.0
    %v1952 = vmul.f32 %v1949, %v1689
    %1954 = vrot.lane.b32.xlu0 %v1951, 64
    %v1955 = vpop.permute.xlu0 %1954
    %v1957 = vmul.f32 %v1949, %v1955
    %1959 = vrot.lane.b32.xlu0 %v1957, 32
    %v1960 = vpop.permute.xlu0 %1959
    %v1962 = vadd.f32 %v1952, %v1960
    %v1963 = vtanh.pop %v1962
    %1965 = vrot.lane.b32.xlu0 %v1963, 64
    %v1966 = vpop.permute.xlu0 %1965
    %v1968 = vmul.f32 %v1949, %v1966
    %v1969 = vld [vmem:[#allocation2 + $0x38] sm:$0xff]
    %1971 = vrot.lane.b32.xlu0 %v1797, 32
    %v1972 = vpop.permute.xlu0 %1971
    %v1973 = vsel %vm221, %v1972, 0
    %1975 = vmatprep.subr.mxu0 0.0
    %1976 = vmatpush1.msra.mxu0 %v217
    %1977 = vmatprep.subr.mxu0 0.0
    %1978 = vmatpush1.msra.mxu0 %v218
    %1979 = vmatprep.subr.mxu0 0.0
    %1980 = vmatpush1.msra.mxu0 %v219
    %1981 = vmatprep.subr.mxu0 0.0
    %1982 = vmatpush1.msra.mxu0 %v220
    %1983 = vmatprep.subr.mxu0 0.0
    %1984 = vmatpush1.msra.mxu0 0.0
    %1985 = vmatprep.subr.mxu0 0.0
    %1986 = vmatpush1.msra.mxu0 0.0
    %1987 = vmatprep.subr.mxu0 0.0
    %1988 = vmatpush1.msra.mxu0 0.0
    %1989 = vmatprep.subr.mxu0 0.0
    %1990 = vmatpush1.msra.mxu0 0.0
    %1991 = vmatprep.subr.mxu0 0.0
    %1992 = vmatpush1.msra.mxu0 0.0
    %1993 = vmatprep.subr.mxu0 0.0
    %1994 = vmatpush1.msra.mxu0 0.0
    %1995 = vmatprep.subr.mxu0 0.0
    %1996 = vmatpush1.msra.mxu0 0.0
    %1997 = vmatprep.subr.mxu0 0.0
    %1998 = vmatpush1.msra.mxu0 0.0
    %1999 = vmatprep.subr.mxu0 0.0
    %2000 = vmatpush1.msra.mxu0 0.0
    %2001 = vmatprep.subr.mxu0 0.0
    %2002 = vmatpush1.msra.mxu0 0.0
    %2003 = vmatprep.subr.mxu0 0.0
    %2004 = vmatpush1.msra.mxu0 0.0
    %2005 = vmatprep.subr.mxu0 0.0
    %2006 = vmatpush1.msra.mxu0 0.0
    %2007 = vmatprep.subr.mxu0 0.0
    %2008 = vmatpush1.msra.mxu0 0.0
    %2009 = vmatprep.subr.mxu0 0.0
    %2010 = vmatpush1.msra.mxu0 0.0
    %2011 = vmatprep.subr.mxu0 0.0
    %2012 = vmatpush1.msra.mxu0 0.0
    %2013 = vmatprep.subr.mxu0 0.0
    %2014 = vmatpush1.msra.mxu0 0.0
    %2015 = vmatprep.subr.mxu0 0.0
    %2016 = vmatpush1.msra.mxu0 0.0
    %2017 = vmatprep.subr.mxu0 0.0
    %2018 = vmatpush1.msra.mxu0 0.0
    %2019 = vmatprep.subr.mxu0 0.0
    %2020 = vmatpush1.msra.mxu0 0.0
    %2021 = vmatprep.subr.mxu0 0.0
    %2022 = vmatpush1.msra.mxu0 0.0
    %2023 = vmatprep.subr.mxu0 0.0
    %2024 = vmatpush1.msra.mxu0 0.0
    %2025 = vmatprep.subr.mxu0 0.0
    %2026 = vmatpush1.msra.mxu0 0.0
    %2027 = vmatprep.subr.mxu0 0.0
    %2028 = vmatpush1.msra.mxu0 0.0
    %2029 = vmatprep.subr.mxu0 0.0
    %2030 = vmatpush1.msra.mxu0 0.0
    %2031 = vmatprep.subr.mxu0 0.0
    %2032 = vmatpush1.msra.mxu0 0.0
    %2033 = vmatprep.subr.mxu0 0.0
    %2034 = vmatpush1.msra.mxu0 0.0
    %2035 = vmatprep.subr.mxu0 0.0
    %2036 = vmatpush1.msra.mxu0 0.0
    %2037 = vmatprep.subr.mxu0 0.0
    %2038 = vmatpush1.msra.mxu0 0.0
    %2039 = vmatprep.mubr.f32.mxu0 0.0
    %2040 = vmatmul.mubr.f32.gmra.mrb[0].mxu0 %v1973
    %v2041 = vpop.f32.mrb[0].mxu0
    %v2042 = vadd.f32 0.0, %v2041
    %v2043 = vpop.f32.mrb[0].mxu0
    %2044 = vdwg.mxu0
    %v2045 = vadd.f32 %v1969, %v2042
    %v2046 = vxor.u32 %v2045, 2147483648
    %v2047 = vmul.f32 %v2046, 1.442695
    %v2048 = vpow.pop %v2047
    %v2049 = vadd.f32 %v2048, 1.0
    %v2050 = vrcp.pop %v2049
    %v2051 = vmul.f32 1.0, %v2050
    %v2052 = vmul.f32 %v2051, 2.0
    %v2053 = vsub.f32 %v2052, 1.0
    %v2054 = vmul.f32 %v2051, %v1791
    %2056 = vrot.lane.b32.xlu0 %v2053, 64
    %v2057 = vpop.permute.xlu0 %2056
    %v2059 = vmul.f32 %v2051, %v2057
    %2061 = vrot.lane.b32.xlu0 %v2059, 32
    %v2062 = vpop.permute.xlu0 %2061
    %v2064 = vadd.f32 %v2054, %v2062
    %v2065 = vtanh.pop %v2064
    %2067 = vrot.lane.b32.xlu0 %v2065, 64
    %v2068 = vpop.permute.xlu0 %2067
    %v2070 = vmul.f32 %v2051, %v2068
    %2071 = vmatprep.subr.mxu0 0.0
    %2072 = vmatpush1.msra.mxu0 %v423
    %2073 = vmatprep.subr.mxu0 0.0
    %2074 = vmatpush1.msra.mxu0 %v424
    %2075 = vmatprep.subr.mxu0 0.0
    %2076 = vmatpush1.msra.mxu0 %v425
    %2077 = vmatprep.subr.mxu0 0.0
    %2078 = vmatpush1.msra.mxu0 %v426
    %2079 = vmatprep.subr.mxu0 0.0
    %2080 = vmatpush1.msra.mxu0 0.0
    %2081 = vmatprep.subr.mxu0 0.0
    %2082 = vmatpush1.msra.mxu0 0.0
    %2083 = vmatprep.subr.mxu0 0.0
    %2084 = vmatpush1.msra.mxu0 0.0
    %2085 = vmatprep.subr.mxu0 0.0
    %2086 = vmatpush1.msra.mxu0 0.0
    %2087 = vmatprep.subr.mxu0 0.0
    %2088 = vmatpush1.msra.mxu0 0.0
    %2089 = vmatprep.subr.mxu0 0.0
    %2090 = vmatpush1.msra.mxu0 0.0
    %2091 = vmatprep.subr.mxu0 0.0
    %2092 = vmatpush1.msra.mxu0 0.0
    %2093 = vmatprep.subr.mxu0 0.0
    %2094 = vmatpush1.msra.mxu0 0.0
    %2095 = vmatprep.subr.mxu0 0.0
    %2096 = vmatpush1.msra.mxu0 0.0
    %2097 = vmatprep.subr.mxu0 0.0
    %2098 = vmatpush1.msra.mxu0 0.0
    %2099 = vmatprep.subr.mxu0 0.0
    %2100 = vmatpush1.msra.mxu0 0.0
    %2101 = vmatprep.subr.mxu0 0.0
    %2102 = vmatpush1.msra.mxu0 0.0
    %2103 = vmatprep.subr.mxu0 0.0
    %2104 = vmatpush1.msra.mxu0 0.0
    %2105 = vmatprep.subr.mxu0 0.0
    %2106 = vmatpush1.msra.mxu0 0.0
    %2107 = vmatprep.subr.mxu0 0.0
    %2108 = vmatpush1.msra.mxu0 0.0
    %2109 = vmatprep.subr.mxu0 0.0
    %2110 = vmatpush1.msra.mxu0 0.0
    %2111 = vmatprep.subr.mxu0 0.0
    %2112 = vmatpush1.msra.mxu0 0.0
    %2113 = vmatprep.subr.mxu0 0.0
    %2114 = vmatpush1.msra.mxu0 0.0
    %2115 = vmatprep.subr.mxu0 0.0
    %2116 = vmatpush1.msra.mxu0 0.0
    %2117 = vmatprep.subr.mxu0 0.0
    %2118 = vmatpush1.msra.mxu0 0.0
    %2119 = vmatprep.subr.mxu0 0.0
    %2120 = vmatpush1.msra.mxu0 0.0
    %2121 = vmatprep.subr.mxu0 0.0
    %2122 = vmatpush1.msra.mxu0 0.0
    %2123 = vmatprep.subr.mxu0 0.0
    %2124 = vmatpush1.msra.mxu0 0.0
    %2125 = vmatprep.subr.mxu0 0.0
    %2126 = vmatpush1.msra.mxu0 0.0
    %2127 = vmatprep.subr.mxu0 0.0
    %2128 = vmatpush1.msra.mxu0 0.0
    %2129 = vmatprep.subr.mxu0 0.0
    %2130 = vmatpush1.msra.mxu0 0.0
    %2131 = vmatprep.subr.mxu0 0.0
    %2132 = vmatpush1.msra.mxu0 0.0
    %2133 = vmatprep.subr.mxu0 0.0
    %2134 = vmatpush1.msra.mxu0 0.0
    %2135 = vmatprep.mubr.f32.mxu0 0.0
    %2136 = vmatmul.mubr.f32.gmra.mrb[0].mxu0 %v1973
    %v2137 = vpop.f32.mrb[0].mxu0
    %v2138 = vadd.f32 %v432, %v2137
    %v2139 = vpop.f32.mrb[0].mxu0
    %2140 = vdwg.mxu0
    %2142 = vrot.lane.b32.xlu0 %v1968, 32
    %v2143 = vpop.permute.xlu0 %2142
    %v2144 = vsel %vm221, %v2143, 0
    %2146 = vmatprep.subr.mxu0 0.0
    %2147 = vmatpush1.msra.mxu0 %v504
    %2148 = vmatprep.subr.mxu0 0.0
    %2149 = vmatpush1.msra.mxu0 %v505
    %2150 = vmatprep.subr.mxu0 0.0
    %2151 = vmatpush1.msra.mxu0 %v506
    %2152 = vmatprep.subr.mxu0 0.0
    %2153 = vmatpush1.msra.mxu0 %v507
    %2154 = vmatprep.subr.mxu0 0.0
    %2155 = vmatpush1.msra.mxu0 0.0
    %2156 = vmatprep.subr.mxu0 0.0
    %2157 = vmatpush1.msra.mxu0 0.0
    %2158 = vmatprep.subr.mxu0 0.0
    %2159 = vmatpush1.msra.mxu0 0.0
    %2160 = vmatprep.subr.mxu0 0.0
    %2161 = vmatpush1.msra.mxu0 0.0
    %2162 = vmatprep.subr.mxu0 0.0
    %2163 = vmatpush1.msra.mxu0 0.0
    %2164 = vmatprep.subr.mxu0 0.0
    %2165 = vmatpush1.msra.mxu0 0.0
    %2166 = vmatprep.subr.mxu0 0.0
    %2167 = vmatpush1.msra.mxu0 0.0
    %2168 = vmatprep.subr.mxu0 0.0
    %2169 = vmatpush1.msra.mxu0 0.0
    %2170 = vmatprep.subr.mxu0 0.0
    %2171 = vmatpush1.msra.mxu0 0.0
    %2172 = vmatprep.subr.mxu0 0.0
    %2173 = vmatpush1.msra.mxu0 0.0
    %2174 = vmatprep.subr.mxu0 0.0
    %2175 = vmatpush1.msra.mxu0 0.0
    %2176 = vmatprep.subr.mxu0 0.0
    %2177 = vmatpush1.msra.mxu0 0.0
    %2178 = vmatprep.subr.mxu0 0.0
    %2179 = vmatpush1.msra.mxu0 0.0
    %2180 = vmatprep.subr.mxu0 0.0
    %2181 = vmatpush1.msra.mxu0 0.0
    %2182 = vmatprep.subr.mxu0 0.0
    %2183 = vmatpush1.msra.mxu0 0.0
    %2184 = vmatprep.subr.mxu0 0.0
    %2185 = vmatpush1.msra.mxu0 0.0
    %2186 = vmatprep.subr.mxu0 0.0
    %2187 = vmatpush1.msra.mxu0 0.0
    %2188 = vmatprep.subr.mxu0 0.0
    %2189 = vmatpush1.msra.mxu0 0.0
    %2190 = vmatprep.subr.mxu0 0.0
    %2191 = vmatpush1.msra.mxu0 0.0
    %2192 = vmatprep.subr.mxu0 0.0
    %2193 = vmatpush1.msra.mxu0 0.0
    %2194 = vmatprep.subr.mxu0 0.0
    %2195 = vmatpush1.msra.mxu0 0.0
    %2196 = vmatprep.subr.mxu0 0.0
    %2197 = vmatpush1.msra.mxu0 0.0
    %2198 = vmatprep.subr.mxu0 0.0
    %2199 = vmatpush1.msra.mxu0 0.0
    %2200 = vmatprep.subr.mxu0 0.0
    %2201 = vmatpush1.msra.mxu0 0.0
    %2202 = vmatprep.subr.mxu0 0.0
    %2203 = vmatpush1.msra.mxu0 0.0
    %2204 = vmatprep.subr.mxu0 0.0
    %2205 = vmatpush1.msra.mxu0 0.0
    %2206 = vmatprep.subr.mxu0 0.0
    %2207 = vmatpush1.msra.mxu0 0.0
    %2208 = vmatprep.subr.mxu0 0.0
    %2209 = vmatpush1.msra.mxu0 0.0
    %2210 = vmatprep.mubr.f32.mxu0 0.0
    %2211 = vmatmul.mubr.f32.gmra.mrb[0].mxu0 %v2144
    %v2212 = vpop.f32.mrb[0].mxu0
    %v2213 = vadd.f32 0.0, %v2212
    %v2214 = vpop.f32.mrb[0].mxu0
    %2215 = vdwg.mxu0
    %v2216 = vadd.f32 %v2138, %v2213
    %v2217 = vxor.u32 %v2216, 2147483648
    %v2218 = vmul.f32 %v2217, 1.442695
    %v2219 = vpow.pop %v2218
    %v2220 = vadd.f32 %v2219, 1.0
    %v2221 = vrcp.pop %v2220
    %v2222 = vmul.f32 1.0, %v2221
    %v2223 = vmul.f32 %v2222, 2.0
    %v2224 = vsub.f32 %v2223, 1.0
    %v2225 = vmul.f32 %v2222, %v1962
    %2227 = vrot.lane.b32.xlu0 %v2224, 64
    %v2228 = vpop.permute.xlu0 %2227
    %v2230 = vmul.f32 %v2222, %v2228
    %2232 = vrot.lane.b32.xlu0 %v2230, 32
    %v2233 = vpop.permute.xlu0 %2232
    %v2235 = vadd.f32 %v2225, %v2233
    %v2236 = vtanh.pop %v2235
    %2238 = vrot.lane.b32.xlu0 %v2236, 64
    %v2239 = vpop.permute.xlu0 %2238
    %v2241 = vmul.f32 %v2222, %v2239
    %2243 = vrot.lane.b32.xlu0 %v2070, 32
    %v2244 = vpop.permute.xlu0 %2243
    %v2245 = vsel %vm221, %v2244, 0
    %2247 = vmatprep.subr.mxu0 0.0
    %2248 = vmatpush1.msra.mxu0 %v423
    %2249 = vmatprep.subr.mxu0 0.0
    %2250 = vmatpush1.msra.mxu0 %v424
    %2251 = vmatprep.subr.mxu0 0.0
    %2252 = vmatpush1.msra.mxu0 %v425
    %2253 = vmatprep.subr.mxu0 0.0
    %2254 = vmatpush1.msra.mxu0 %v426
    %2255 = vmatprep.subr.mxu0 0.0
    %2256 = vmatpush1.msra.mxu0 0.0
    %2257 = vmatprep.subr.mxu0 0.0
    %2258 = vmatpush1.msra.mxu0 0.0
    %2259 = vmatprep.subr.mxu0 0.0
    %2260 = vmatpush1.msra.mxu0 0.0
    %2261 = vmatprep.subr.mxu0 0.0
    %2262 = vmatpush1.msra.mxu0 0.0
    %2263 = vmatprep.subr.mxu0 0.0
    %2264 = vmatpush1.msra.mxu0 0.0
    %2265 = vmatprep.subr.mxu0 0.0
    %2266 = vmatpush1.msra.mxu0 0.0
    %2267 = vmatprep.subr.mxu0 0.0
    %2268 = vmatpush1.msra.mxu0 0.0
    %2269 = vmatprep.subr.mxu0 0.0
    %2270 = vmatpush1.msra.mxu0 0.0
    %2271 = vmatprep.subr.mxu0 0.0
    %2272 = vmatpush1.msra.mxu0 0.0
    %2273 = vmatprep.subr.mxu0 0.0
    %2274 = vmatpush1.msra.mxu0 0.0
    %2275 = vmatprep.subr.mxu0 0.0
    %2276 = vmatpush1.msra.mxu0 0.0
    %2277 = vmatprep.subr.mxu0 0.0
    %2278 = vmatpush1.msra.mxu0 0.0
    %2279 = vmatprep.subr.mxu0 0.0
    %2280 = vmatpush1.msra.mxu0 0.0
    %2281 = vmatprep.subr.mxu0 0.0
    %2282 = vmatpush1.msra.mxu0 0.0
    %2283 = vmatprep.subr.mxu0 0.0
    %2284 = vmatpush1.msra.mxu0 0.0
    %2285 = vmatprep.subr.mxu0 0.0
    %2286 = vmatpush1.msra.mxu0 0.0
    %2287 = vmatprep.subr.mxu0 0.0
    %2288 = vmatpush1.msra.mxu0 0.0
    %2289 = vmatprep.subr.mxu0 0.0
    %2290 = vmatpush1.msra.mxu0 0.0
    %2291 = vmatprep.subr.mxu0 0.0
    %2292 = vmatpush1.msra.mxu0 0.0
    %2293 = vmatprep.subr.mxu0 0.0
    %2294 = vmatpush1.msra.mxu0 0.0
    %2295 = vmatprep.subr.mxu0 0.0
    %2296 = vmatpush1.msra.mxu0 0.0
    %2297 = vmatprep.subr.mxu0 0.0
    %2298 = vmatpush1.msra.mxu0 0.0
    %2299 = vmatprep.subr.mxu0 0.0
    %2300 = vmatpush1.msra.mxu0 0.0
    %2301 = vmatprep.subr.mxu0 0.0
    %2302 = vmatpush1.msra.mxu0 0.0
    %2303 = vmatprep.subr.mxu0 0.0
    %2304 = vmatpush1.msra.mxu0 0.0
    %2305 = vmatprep.subr.mxu0 0.0
    %2306 = vmatpush1.msra.mxu0 0.0
    %2307 = vmatprep.subr.mxu0 0.0
    %2308 = vmatpush1.msra.mxu0 0.0
    %2309 = vmatprep.subr.mxu0 0.0
    %2310 = vmatpush1.msra.mxu0 0.0
    %2311 = vmatprep.mubr.f32.mxu0 0.0
    %2312 = vmatmul.mubr.f32.gmra.mrb[0].mxu0 %v2245
    %v2313 = vpop.f32.mrb[0].mxu0
    %v2314 = vadd.f32 %v432, %v2313
    %v2315 = vpop.f32.mrb[0].mxu0
    %2316 = vdwg.mxu0
    %2318 = vrot.lane.b32.xlu0 %v2241, 32
    %v2319 = vpop.permute.xlu0 %2318
    %v2320 = vsel %vm221, %v2319, 0
    %2322 = vmatprep.subr.mxu0 0.0
    %2323 = vmatpush1.msra.mxu0 %v504
    %2324 = vmatprep.subr.mxu0 0.0
    %2325 = vmatpush1.msra.mxu0 %v505
    %2326 = vmatprep.subr.mxu0 0.0
    %2327 = vmatpush1.msra.mxu0 %v506
    %2328 = vmatprep.subr.mxu0 0.0
    %2329 = vmatpush1.msra.mxu0 %v507
    %2330 = vmatprep.subr.mxu0 0.0
    %2331 = vmatpush1.msra.mxu0 0.0
    %2332 = vmatprep.subr.mxu0 0.0
    %2333 = vmatpush1.msra.mxu0 0.0
    %2334 = vmatprep.subr.mxu0 0.0
    %2335 = vmatpush1.msra.mxu0 0.0
    %2336 = vmatprep.subr.mxu0 0.0
    %2337 = vmatpush1.msra.mxu0 0.0
    %2338 = vmatprep.subr.mxu0 0.0
    %2339 = vmatpush1.msra.mxu0 0.0
    %2340 = vmatprep.subr.mxu0 0.0
    %2341 = vmatpush1.msra.mxu0 0.0
    %2342 = vmatprep.subr.mxu0 0.0
    %2343 = vmatpush1.msra.mxu0 0.0
    %2344 = vmatprep.subr.mxu0 0.0
    %2345 = vmatpush1.msra.mxu0 0.0
    %2346 = vmatprep.subr.mxu0 0.0
    %2347 = vmatpush1.msra.mxu0 0.0
    %2348 = vmatprep.subr.mxu0 0.0
    %2349 = vmatpush1.msra.mxu0 0.0
    %2350 = vmatprep.subr.mxu0 0.0
    %2351 = vmatpush1.msra.mxu0 0.0
    %2352 = vmatprep.subr.mxu0 0.0
    %2353 = vmatpush1.msra.mxu0 0.0
    %2354 = vmatprep.subr.mxu0 0.0
    %2355 = vmatpush1.msra.mxu0 0.0
    %2356 = vmatprep.subr.mxu0 0.0
    %2357 = vmatpush1.msra.mxu0 0.0
    %2358 = vmatprep.subr.mxu0 0.0
    %2359 = vmatpush1.msra.mxu0 0.0
    %2360 = vmatprep.subr.mxu0 0.0
    %2361 = vmatpush1.msra.mxu0 0.0
    %2362 = vmatprep.subr.mxu0 0.0
    %2363 = vmatpush1.msra.mxu0 0.0
    %2364 = vmatprep.subr.mxu0 0.0
    %2365 = vmatpush1.msra.mxu0 0.0
    %2366 = vmatprep.subr.mxu0 0.0
    %2367 = vmatpush1.msra.mxu0 0.0
    %2368 = vmatprep.subr.mxu0 0.0
    %2369 = vmatpush1.msra.mxu0 0.0
    %2370 = vmatprep.subr.mxu0 0.0
    %2371 = vmatpush1.msra.mxu0 0.0
    %2372 = vmatprep.subr.mxu0 0.0
    %2373 = vmatpush1.msra.mxu0 0.0
    %2374 = vmatprep.subr.mxu0 0.0
    %2375 = vmatpush1.msra.mxu0 0.0
    %2376 = vmatprep.subr.mxu0 0.0
    %2377 = vmatpush1.msra.mxu0 0.0
    %2378 = vmatprep.subr.mxu0 0.0
    %2379 = vmatpush1.msra.mxu0 0.0
    %2380 = vmatprep.subr.mxu0 0.0
    %2381 = vmatpush1.msra.mxu0 0.0
    %2382 = vmatprep.subr.mxu0 0.0
    %2383 = vmatpush1.msra.mxu0 0.0
    %2384 = vmatprep.subr.mxu0 0.0
    %2385 = vmatpush1.msra.mxu0 0.0
    %2386 = vmatprep.mubr.f32.mxu0 0.0
    %2387 = vmatmul.mubr.f32.gmra.mrb[0].mxu0 %v2320
    %v2388 = vpop.f32.mrb[0].mxu0
    %v2389 = vadd.f32 0.0, %v2388
    %v2390 = vpop.f32.mrb[0].mxu0
    %2391 = vdwg.mxu0
    %v2392 = vadd.f32 %v2314, %v2389
    %v2393 = vxor.u32 %v2392, 2147483648
    %v2394 = vmul.f32 %v2393, 1.442695
    %v2395 = vpow.pop %v2394
    %v2396 = vadd.f32 %v2395, 1.0
    %v2397 = vrcp.pop %v2396
    %v2398 = vmul.f32 1.0, %v2397
    %v2399 = vmul.f32 %v2398, 2.0
    %v2400 = vsub.f32 %v2399, 1.0
    %v2401 = vmul.f32 %v2398, %v2235
    %2403 = vrot.lane.b32.xlu0 %v2400, 64
    %v2404 = vpop.permute.xlu0 %2403
    %v2406 = vmul.f32 %v2398, %v2404
    %2408 = vrot.lane.b32.xlu0 %v2406, 32
    %v2409 = vpop.permute.xlu0 %2408
    %v2411 = vadd.f32 %v2401, %v2409
    %v2412 = vtanh.pop %v2411
    %2414 = vrot.lane.b32.xlu0 %v2412, 64
    %v2415 = vpop.permute.xlu0 %2414
    %v2417 = vmul.f32 %v2398, %v2415
    %v2418 = vld [vmem:[#allocation6] sm:$0xff]
    %v2419 = vld [vmem:[#allocation6 + $0x8] sm:$0xff]
    %v2420 = vld [vmem:[#allocation6 + $0x10] sm:$0xff]
    %v2421 = vld [vmem:[#allocation6 + $0x18] sm:$0xff]
    %v2422 = vld [vmem:[%s8] sm:$0x1]
    %v2424 = vlaneseq
    %v2425 = vshrl.u32 %v2424, 7
    %v2426 = vsub.s32 0, %v2425
    %v2427 = vrot.slane %v2422, %v2426
    %2430 = vrot.lane.b32.xlu0 %v2417, 32
    %v2431 = vpop.permute.xlu0 %2430
    %v2432 = vsel %vm221, %v2431, 0
    %2434 = vmatprep.subr.mxu0 0.0
    %2435 = vmatpush1.msra.mxu0 %v2418
    %2436 = vmatprep.subr.mxu0 0.0
    %2437 = vmatpush1.msra.mxu0 %v2419
    %2438 = vmatprep.subr.mxu0 0.0
    %2439 = vmatpush1.msra.mxu0 %v2420
    %2440 = vmatprep.subr.mxu0 0.0
    %2441 = vmatpush1.msra.mxu0 %v2421
    %2442 = vmatprep.subr.mxu0 0.0
    %2443 = vmatpush1.msra.mxu0 0.0
    %2444 = vmatprep.subr.mxu0 0.0
    %2445 = vmatpush1.msra.mxu0 0.0
    %2446 = vmatprep.subr.mxu0 0.0
    %2447 = vmatpush1.msra.mxu0 0.0
    %2448 = vmatprep.subr.mxu0 0.0
    %2449 = vmatpush1.msra.mxu0 0.0
    %2450 = vmatprep.subr.mxu0 0.0
    %2451 = vmatpush1.msra.mxu0 0.0
    %2452 = vmatprep.subr.mxu0 0.0
    %2453 = vmatpush1.msra.mxu0 0.0
    %2454 = vmatprep.subr.mxu0 0.0
    %2455 = vmatpush1.msra.mxu0 0.0
    %2456 = vmatprep.subr.mxu0 0.0
    %2457 = vmatpush1.msra.mxu0 0.0
    %2458 = vmatprep.subr.mxu0 0.0
    %2459 = vmatpush1.msra.mxu0 0.0
    %2460 = vmatprep.subr.mxu0 0.0
    %2461 = vmatpush1.msra.mxu0 0.0
    %2462 = vmatprep.subr.mxu0 0.0
    %2463 = vmatpush1.msra.mxu0 0.0
    %2464 = vmatprep.subr.mxu0 0.0
    %2465 = vmatpush1.msra.mxu0 0.0
    %2466 = vmatprep.subr.mxu0 0.0
    %2467 = vmatpush1.msra.mxu0 0.0
    %2468 = vmatprep.subr.mxu0 0.0
    %2469 = vmatpush1.msra.mxu0 0.0
    %2470 = vmatprep.subr.mxu0 0.0
    %2471 = vmatpush1.msra.mxu0 0.0
    %2472 = vmatprep.subr.mxu0 0.0
    %2473 = vmatpush1.msra.mxu0 0.0
    %2474 = vmatprep.subr.mxu0 0.0
    %2475 = vmatpush1.msra.mxu0 0.0
    %2476 = vmatprep.subr.mxu0 0.0
    %2477 = vmatpush1.msra.mxu0 0.0
    %2478 = vmatprep.subr.mxu0 0.0
    %2479 = vmatpush1.msra.mxu0 0.0
    %2480 = vmatprep.subr.mxu0 0.0
    %2481 = vmatpush1.msra.mxu0 0.0
    %2482 = vmatprep.subr.mxu0 0.0
    %2483 = vmatpush1.msra.mxu0 0.0
    %2484 = vmatprep.subr.mxu0 0.0
    %2485 = vmatpush1.msra.mxu0 0.0
    %2486 = vmatprep.subr.mxu0 0.0
    %2487 = vmatpush1.msra.mxu0 0.0
    %2488 = vmatprep.subr.mxu0 0.0
    %2489 = vmatpush1.msra.mxu0 0.0
    %2490 = vmatprep.subr.mxu0 0.0
    %2491 = vmatpush1.msra.mxu0 0.0
    %2492 = vmatprep.subr.mxu0 0.0
    %2493 = vmatpush1.msra.mxu0 0.0
    %2494 = vmatprep.subr.mxu0 0.0
    %2495 = vmatpush1.msra.mxu0 0.0
    %2496 = vmatprep.subr.mxu0 0.0
    %2497 = vmatpush1.msra.mxu0 0.0
    %2498 = vmatprep.mubr.f32.mxu0 0.0
    %2499 = vmatmul.mubr.f32.gmra.mrb[0].mxu0 %v2432
    %v2500 = vpop.f32.mrb[0].mxu0
    %v2501 = vadd.f32 %v2427, %v2500
    %v2502 = vpop.f32.mrb[0].mxu0
    %2503 = vdwg.mxu0
    %2504 = vst [vmem:[#allocation8] sm:$0xff] %v2501
    // Predicated region
    $region46: #{tpu_custom_call.1} parent=1 // pred_check
      _
    $region47: #{tpu_custom_call.1} parent=1 // pred_check_branch
      %2506 = sbr.rel (0) target = $region49
    $region48: #{tpu_custom_call.1} parent=1 // pred_region
      %s2508 = ssub.s32 128, 128
      %2509 = vsyncadd [#allocation5], %s2508
      %s2511 = sshll.u32 [#allocation8], 4
      %s2512 = int_to_ptr.vmem [resolvable:$true] %s2511
      %2514 = dma.vmem_to_hbm [thread:$0]  %s2512, 128, %s9, [#allocation5]
    $region49: #{tpu_custom_call.1} parent=1 // pred_fallthru
      _
    // Predicated region
    $region50: #{tpu_custom_call.1} parent=1 // pred_check
      _
    $region51: #{tpu_custom_call.1} parent=1 // pred_check_branch
      %2516 = sbr.rel (0) target = $region53
    $region52: #{tpu_custom_call.1} parent=1 // pred_region
      %2517 = dma.done [#allocation5], 128
    $region53: #{tpu_custom_call.1} parent=1 // pred_fallthru
      _
    %2518 = vsyncpa [#allocation4], 1
    %2519 = vsyncpa [#allocation7], 1
    %2520 = vsyncpa [#allocation5], 1

</llo_original>
